<compile_context>
chip_gen: v7x
topology: tpu7x:2x2x1
jax: 0.10.0
libtpu: 0.0.40
codegen_flags: <defaults>
</compile_context>

<pallas_src>
import functools
import math

import numpy as np
import jax
import jax.numpy as jnp
from jax import lax
from jax.experimental import pallas as pl
from jax.experimental.pallas import tpu as pltpu


# ----------------------------- in-kernel helpers -----------------------------

def _layernorm(h, gamma, beta, eps):
    mu = jnp.mean(h, axis=-1, keepdims=True)
    c = h - mu
    var = jnp.mean(c * c, axis=-1, keepdims=True)
    return c * lax.rsqrt(var + eps) * gamma + beta


def _gelu_tanh(x):
    # matches torch.nn.functional.gelu(x, approximate='tanh')
    c = math.sqrt(2.0 / math.pi)
    return 0.5 * x * (1.0 + jnp.tanh(c * (x + 0.044715 * x * x * x)))


# --------------------------------- kernel ------------------------------------

def encoder_layer_kernel(
    x_ref,
    ln1g_ref, ln1b_ref,
    wq_ref, bq_ref, wk_ref, bk_ref, wv_ref, bv_ref,
    wo_ref, bo_ref,
    ln2g_ref, ln2b_ref,
    w1_ref, b1_ref, w2_ref, b2_ref,
    o_ref,
    h1_s, h2_s, acc_s,
    *, num_heads, eps, compute_dtype,
):
    i = pl.program_id(1)
    n_i = pl.num_programs(1)
    Bt, S, D = x_ref.shape
    cdt = compute_dtype
    exact_recip = np.dtype(cdt) == np.dtype(jnp.float32)

    # ---- first MLP tile: LN1 + per-head attention + out-proj + residual + LN2
    @pl.when(i == 0)
    def _attention():
        def attn_b(b, carry):
            xb = x_ref[b].astype(jnp.float32)                    # (S, D)
            hln = _layernorm(xb, ln1g_ref[...], ln1b_ref[...], eps).astype(cdt)

            def head_body(h, acc):
                # Lane-dense, 128-padded per-head slabs; leading-axis indexing.
                q = jnp.dot(hln, wq_ref[h],
                            preferred_element_type=jnp.float32) + bq_ref[h]
                k = jnp.dot(hln, wk_ref[h],
                            preferred_element_type=jnp.float32) + bk_ref[h]
                v = jnp.dot(hln, wv_ref[h],
                            preferred_element_type=jnp.float32) + bv_ref[h]
                # Scale already folded into wq / bq at pack time.
                s = lax.dot_general(q.astype(cdt), k.astype(cdt),
                                    (((1,), (1,)), ((), ())),
                                    preferred_element_type=jnp.float32)
                s = s - jnp.max(s, axis=-1, keepdims=True)
                p = jnp.exp(s)
                den = jnp.sum(p, axis=-1, keepdims=True)
                if exact_recip:
                    p = p / den
                else:
                    p = p * pl.reciprocal(den, approx=True)
                ctx = jnp.dot(p.astype(cdt), v.astype(cdt),
                              preferred_element_type=jnp.float32)
                # Fold the output projection into the head loop: no ctx scratch.
                return acc + jnp.dot(ctx.astype(cdt), wo_ref[h],
                                     preferred_element_type=jnp.float32)

            attn = lax.fori_loop(0, num_heads, head_body,
                                 jnp.zeros((S, D), jnp.float32))
            h1 = xb + attn + bo_ref[...]                          # residual 1
            h1_s[b] = h1
            h2_s[b] = _layernorm(h1, ln2g_ref[...], ln2b_ref[...],
                                 eps).astype(cdt)
            return carry

        lax.fori_loop(0, Bt, attn_b, 0)

    # ---- every tile: partial MLP for every batch row of this chunk
    #      (the streamed w1/w2 tile is reused across all Bt items).
    def mlp_b(b, carry):
        t = jnp.dot(h2_s[b], w1_ref[...],
                    preferred_element_type=jnp.float32) + b1_ref[...]
        t = _gelu_tanh(t)
        part = jnp.dot(t.astype(cdt), w2_ref[...],
                       preferred_element_type=jnp.float32)

        @pl.when(i == 0)
        def _():
            acc_s[b] = part            # first tile: write (no zero-init pass)

        @pl.when(i > 0)
        def _():
            acc_s[b] = acc_s[b] + part

        return carry

    lax.fori_loop(0, Bt, mlp_b, 0)

    # ---- last tile: fc2 bias + residual 2, write output
    @pl.when(i == n_i - 1)
    def _finish():
        def fin_b(b, carry):
            o_ref[b] = (h1_s[b] + acc_s[b] + b2_ref[...]).astype(o_ref.dtype)
            return carry
        lax.fori_loop(0, Bt, fin_b, 0)


# -------------------------------- wrapper -------------------------------------

def _nbytes(shape, dtype):
    n = 1
    for d in shape:
        n *= int(d)
    return n * np.dtype(dtype).itemsize


def _chip_vmem_bytes():
    try:
        return int(pltpu.get_tpu_info().vmem_capacity_bytes)
    except Exception:
        return 64 * 2**20            # conservative (v7x per-TensorCore VMEM)


def _const_spec(arr, single_buffer):
    idx = (lambda c, i, nd=arr.ndim: (0,) * nd)
    if single_buffer:
        return pl.BlockSpec(arr.shape, idx, pipeline_mode=pl.Buffered(1))
    return pl.BlockSpec(arr.shape, idx)


def siglip_encoder_layer(x, p, *, num_heads, eps, tile_i, batch_block,
                         compute_dtype, single_buffer_consts=True):
    """x: (B, S, D) float32; p: packed layer params (see prepare_layer_params)."""
    B, S, D = x.shape
    I = p["w1"].shape[1]
    P = p["wq"].shape[-1]                       # padded head dim (multiple of 128)
    assert B % batch_block == 0, (B, batch_block)
    assert I % tile_i == 0, (I, tile_i)
    assert tile_i % 128 == 0 or tile_i == I, "tile_i must be lane aligned or full"
    Bt = batch_block
    n_c = B // Bt
    n_i = I // tile_i

    kernel = functools.partial(
        encoder_layer_kernel,
        num_heads=num_heads, eps=eps, compute_dtype=compute_dtype)

    cs = lambda a: _const_spec(a, single_buffer_consts)
    in_specs = [
        pl.BlockSpec((Bt, S, D), lambda c, i: (c, 0, 0)),       # x (chunk-resident)
        cs(p["ln1_g"]), cs(p["ln1_b"]),
        cs(p["wq"]), cs(p["bq"]), cs(p["wk"]), cs(p["bk"]),
        cs(p["wv"]), cs(p["bv"]),
        cs(p["wo"]), cs(p["bo"]),
        cs(p["ln2_g"]), cs(p["ln2_b"]),
        pl.BlockSpec((D, tile_i), lambda c, i: (0, i)),         # streamed w1 tile
        pl.BlockSpec((1, tile_i), lambda c, i: (0, i)),         # streamed b1 tile
        pl.BlockSpec((tile_i, D), lambda c, i: (i, 0)),         # streamed w2 tile
        cs(p["b2"]),
    ]
    out_specs = pl.BlockSpec((Bt, S, D), lambda c, i: (c, 0, 0))

    scratch_shapes = [
        pltpu.VMEM((Bt, S, D), jnp.float32),      # residual-1 hidden state
        pltpu.VMEM((Bt, S, D), compute_dtype),    # LayerNorm-2 output (MLP input)
        pltpu.VMEM((Bt, S, D), jnp.float32),      # MLP f32 accumulator
    ]

    # VMEM budget: resident weights + double-buffered streamed tiles + I/O
    # blocks + scratch + largest in-kernel temporaries; clamped to chip VMEM.
    const_bytes = sum(int(a.size) * a.dtype.itemsize for a in (
        p["ln1_g"], p["ln1_b"], p["wq"], p["bq"], p["wk"], p["bk"], p["wv"],
        p["bv"], p["wo"], p["bo"], p["ln2_g"], p["ln2_b"], p["b2"]))
    if not single_buffer_consts:
        const_bytes *= 2
    streamed = 2 * (_nbytes((D, tile_i), compute_dtype)
                    + _nbytes((1, tile_i), jnp.float32)
                    + _nbytes((tile_i, D), compute_dtype))
    io = 2 * 2 * _nbytes((Bt, S, D), x.dtype)
    scratch = (2 * _nbytes((Bt, S, D), jnp.float32)
               + _nbytes((Bt, S, D), compute_dtype))
    temps = (2 * _nbytes((S, S), jnp.float32)          # scores / probs
             + 4 * _nbytes((S, P), jnp.float32)        # q, k, v, ctx
             + 3 * _nbytes((S, D), jnp.float32)        # hln, attn acc, residual
             + 2 * _nbytes((S, tile_i), jnp.float32))  # MLP intermediate
    est = const_bytes + streamed + io + scratch + temps
    cap = _chip_vmem_bytes()
    vmem_limit = int(min(cap - 4 * 2**20, max(32 * 2**20, est + 8 * 2**20)))

    args = (x,
            p["ln1_g"], p["ln1_b"],
            p["wq"], p["bq"], p["wk"], p["bk"], p["wv"], p["bv"],
            p["wo"], p["bo"], p["ln2_g"], p["ln2_b"],
            p["w1"], p["b1"], p["w2"], p["b2"])

    return pl.pallas_call(
        kernel,
        out_shape=jax.ShapeDtypeStruct((B, S, D), x.dtype),
        grid_spec=pltpu.PrefetchScalarGridSpec(
            num_scalar_prefetch=0,
            grid=(n_c, n_i),
            in_specs=in_specs,
            out_specs=out_specs,
            scratch_shapes=scratch_shapes,
        ),
        compiler_params=pltpu.CompilerParams(
            dimension_semantics=("parallel", "arbitrary"),
            vmem_limit_bytes=vmem_limit,
        ),
    )(*args)


def prepare_layer_params(raw, *, num_heads, compute_dtype):
    """Pack raw (PyTorch-style, pre-transposed (in,out)) params for the kernel:
    per-head lane-dense (128-padded) Q/K/V/out-proj slabs, attention scale
    folded into Q, matmul weights in compute_dtype (bf16 in HBM), biases and
    LayerNorm params in f32."""
    f32 = jnp.float32
    D = raw["wq"].shape[0]
    hd = D // num_heads
    P = ((hd + 127) // 128) * 128
    pad = P - hd
    scale = hd ** (-0.5)

    def heads_in(w):                      # (D, D) -> (H, D, P)
        w = jnp.transpose(w.reshape(D, num_heads, hd), (1, 0, 2))
        if pad:
            w = jnp.pad(w, ((0, 0), (0, 0), (0, pad)))
        return w

    def heads_bias(b):                    # (1, D) -> (H, 1, P)
        b = b.reshape(num_heads, 1, hd)
        if pad:
            b = jnp.pad(b, ((0, 0), (0, 0), (0, pad)))
        return b

    def heads_out(w):                     # (D, D) -> (H, P, D)
        w = w.reshape(num_heads, hd, D)
        if pad:
            w = jnp.pad(w, ((0, 0), (0, pad), (0, 0)))
        return w

    return {
        "ln1_g": raw["ln1_g"].astype(f32), "ln1_b": raw["ln1_b"].astype(f32),
        # attention scale folded into the Q projection (weights and bias)
        "wq": (heads_in(raw["wq"]) * scale).astype(compute_dtype),
        "bq": (heads_bias(raw["bq"]) * scale).astype(f32),
        "wk": heads_in(raw["wk"]).astype(compute_dtype),
        "bk": heads_bias(raw["bk"]).astype(f32),
        "wv": heads_in(raw["wv"]).astype(compute_dtype),
        "bv": heads_bias(raw["bv"]).astype(f32),
        "wo": heads_out(raw["wo"]).astype(compute_dtype),
        "bo": raw["bo"].astype(f32),
        "ln2_g": raw["ln2_g"].astype(f32), "ln2_b": raw["ln2_b"].astype(f32),
        "w1": raw["w1"].astype(compute_dtype), "b1": raw["b1"].astype(f32),
        "w2": raw["w2"].astype(compute_dtype), "b2": raw["b2"].astype(f32),
    }


def _pick_tile_i(I, max_tile=None):
    if max_tile is None:
        # bigger tiles on 128 MiB chips (v5e/v6e), smaller on 64 MiB (v7x)
        max_tile = 2048 if _chip_vmem_bytes() >= 100 * 2**20 else 1024
    t = min(max_tile, I)
    t -= t % 128
    while t >= 128:
        if I % t == 0:
            return t
        t -= 128
    return I


def _pick_batch_block(B, max_bt=4):
    # Amortize the streamed MLP weight tiles over several batch items, while
    # keeping >=2 parallel grid chunks when possible (both v7x TensorCores).
    best = 1
    for bt in range(1, min(max_bt, B) + 1):
        if B % bt == 0 and (B // bt >= 2 or B == 1):
            best = bt
    return best


def siglip_encoder(x, layer_params, *, num_heads, eps, tile_i=None,
                   batch_block=None, compute_dtype=jnp.bfloat16):
    B = x.shape[0]
    I = layer_params[0]["w1"].shape[1]
    if tile_i is None:
        tile_i = _pick_tile_i(I)
    if batch_block is None:
        batch_block = _pick_batch_block(B)
    prepared = [prepare_layer_params(p, num_heads=num_heads,
                                     compute_dtype=compute_dtype)
                for p in layer_params]

    # TODO(synk): overlap layer l+1 weight DMA with layer l compute via a
    # cross-pallas_call DMA future (P10); layers currently run back-to-back.
    # TODO(synk): optionally carry inter-layer activations in bf16 to halve the
    # (B,S,D) activation traffic; kept f32 here for reference-level accuracy.
    def run(single_buffer_consts):
        h = x
        for p in prepared:
            h = siglip_encoder_layer(
                h, p, num_heads=num_heads, eps=eps, tile_i=tile_i,
                batch_block=batch_block, compute_dtype=compute_dtype,
                single_buffer_consts=single_buffer_consts)
        return h

    try:
        return jax.block_until_ready(run(True))      # single-buffered weights
    except Exception:
        return jax.block_until_ready(run(False))     # fallback: default buffering


# ---------------------------- pure-JAX reference ------------------------------

def _ref_layer(x, p, num_heads, eps):
    B, S, D = x.shape
    hd = D // num_heads

    def ln(h, g, b):
        mu = jnp.mean(h, -1, keepdims=True)
        var = jnp.mean((h - mu) ** 2, -1, keepdims=True)
        return (h - mu) / jnp.sqrt(var + eps) * g + b

    h = ln(x, p["ln1_g"][0], p["ln1_b"][0])
    q = h @ p["wq"] + p["bq"][0]
    k = h @ p["wk"] + p["bk"][0]
    v = h @ p["wv"] + p["bv"][0]
    q = q.reshape(B, S, num_heads, hd).transpose(0, 2, 1, 3)
    k = k.reshape(B, S, num_heads, hd).transpose(0, 2, 1, 3)
    v = v.reshape(B, S, num_heads, hd).transpose(0, 2, 1, 3)
    s = jnp.einsum("bhqd,bhkd->bhqk", q, k) * hd ** (-0.5)
    a = jax.nn.softmax(s, axis=-1)
    o = jnp.einsum("bhqk,bhkd->bhqd", a, v).transpose(0, 2, 1, 3).reshape(B, S, D)
    o = o @ p["wo"] + p["bo"][0]
    h1 = x + o
    h2 = ln(h1, p["ln2_g"][0], p["ln2_b"][0])
    m = h2 @ p["w1"] + p["b1"][0]
    c = math.sqrt(2.0 / math.pi)
    m = 0.5 * m * (1.0 + jnp.tanh(c * (m + 0.044715 * m ** 3)))
    m = m @ p["w2"] + p["b2"][0]
    return h1 + m


def _ref_encoder(x, layer_params, num_heads, eps):
    h = x
    for p in layer_params:
        h = _ref_layer(h, p, num_heads, eps)
    return h


# ---------------------------------- main --------------------------------------

if __name__ == "__main__":
    # Small synthetic SiglipVisionConfig (lane/sublane-aligned so both the
    # MLP-tile streaming and the batch-chunk paths are exercised).
    hidden_size = 128
    intermediate_size = 256
    num_hidden_layers = 2
    num_attention_heads = 4          # head_dim = 32 -> padded to 128 lanes
    layer_norm_eps = 1e-6
    batch, seq_len = 2, 16

    key = jax.random.PRNGKey(0)

    def init_layer(k):
        ks = jax.random.split(k, 16)
        D, I = hidden_size, intermediate_size

        def lin(kk, din, dout):
            return jax.random.normal(kk, (din, dout), jnp.float32) * 0.02

        def vec(kk, d, scale=0.02):
            return jax.random.normal(kk, (1, d), jnp.float32) * scale

        return {
            "ln1_g": 1.0 + vec(ks[0], D, 0.05), "ln1_b": vec(ks[1], D, 0.05),
            "wq": lin(ks[2], D, D), "bq": vec(ks[3], D),
            "wk": lin(ks[4], D, D), "bk": vec(ks[5], D),
            "wv": lin(ks[6], D, D), "bv": vec(ks[7], D),
            "wo": lin(ks[8], D, D), "bo": vec(ks[9], D),
            "ln2_g": 1.0 + vec(ks[10], D, 0.05), "ln2_b": vec(ks[11], D, 0.05),
            "w1": lin(ks[12], D, I), "b1": vec(ks[13], I),
            "w2": lin(ks[14], I, D), "b2": vec(ks[15], D),
        }

    keys = jax.random.split(key, num_hidden_layers + 1)
    layer_params = [init_layer(keys[i]) for i in range(num_hidden_layers)]

    # inputs_embeds: (B, S, D)
    x = jax.random.normal(keys[-1], (batch, seq_len, hidden_size), jnp.float32)

    ref = _ref_encoder(x, layer_params, num_attention_heads, layer_norm_eps)

    # 1) Structure check: f32 matmul inputs, tile_i=128 (2-tile MLP
    #    accumulation) and batch_block=1 (2 batch chunks on the parallel axis).
    out_f32 = siglip_encoder(
        x, layer_params, num_heads=num_attention_heads, eps=layer_norm_eps,
        tile_i=128, batch_block=1, compute_dtype=jnp.float32)
    out_f32 = jax.block_until_ready(out_f32)
    assert out_f32.shape == (batch, seq_len, hidden_size)
    assert jnp.allclose(out_f32, ref, atol=2e-3, rtol=2e-3), \
        float(jnp.max(jnp.abs(out_f32 - ref)))

    # 2) Performance configuration: bf16 matmul inputs / f32 accumulation,
    #    batch_block=2 (weight tiles amortized across the whole batch chunk).
    out_bf16 = siglip_encoder(
        x, layer_params, num_heads=num_attention_heads, eps=layer_norm_eps,
        tile_i=128, batch_block=2, compute_dtype=jnp.bfloat16)
    out_bf16 = jax.block_until_ready(out_bf16)
    assert out_bf16.shape == (batch, seq_len, hidden_size)
    assert jnp.allclose(out_bf16, ref, atol=3e-2, rtol=3e-2), \
        float(jnp.max(jnp.abs(out_bf16 - ref)))

    print("KERNEL_OK")
</pallas_src>

<mosaic_0001>
module attributes {stable_mosaic.version = 11 : i64} {
  func.func @encoder_layer_kernel(%arg0: i32, %arg1: i32, %arg2: memref<1x16x128xf32, #tpu.memory_space<vmem>>, %arg3: memref<1x128xf32, #tpu.memory_space<vmem>>, %arg4: memref<1x128xf32, #tpu.memory_space<vmem>>, %arg5: memref<4x128x128xf32, #tpu.memory_space<vmem>>, %arg6: memref<4x1x128xf32, #tpu.memory_space<vmem>>, %arg7: memref<4x128x128xf32, #tpu.memory_space<vmem>>, %arg8: memref<4x1x128xf32, #tpu.memory_space<vmem>>, %arg9: memref<4x128x128xf32, #tpu.memory_space<vmem>>, %arg10: memref<4x1x128xf32, #tpu.memory_space<vmem>>, %arg11: memref<4x128x128xf32, #tpu.memory_space<vmem>>, %arg12: memref<1x128xf32, #tpu.memory_space<vmem>>, %arg13: memref<1x128xf32, #tpu.memory_space<vmem>>, %arg14: memref<1x128xf32, #tpu.memory_space<vmem>>, %arg15: memref<128x128xf32, #tpu.memory_space<vmem>>, %arg16: memref<1x128xf32, #tpu.memory_space<vmem>>, %arg17: memref<128x128xf32, #tpu.memory_space<vmem>>, %arg18: memref<1x128xf32, #tpu.memory_space<vmem>>, %arg19: memref<1x16x128xf32, #tpu.memory_space<vmem>>, %arg20: memref<1x16x128xf32, #tpu.memory_space<vmem>>, %arg21: memref<1x16x128xf32, #tpu.memory_space<vmem>>, %arg22: memref<1x16x128xf32, #tpu.memory_space<vmem>>) attributes {dimension_semantics = [#tpu.dimension_semantics<parallel>, #tpu.dimension_semantics<arbitrary>], iteration_bounds = array<i64: 2, 2>, scalar_prefetch = 0 : i64, scratch_operands = 3 : i64, tpu.core_type = #tpu.core_type<tc>, window_params = [{transform_indices = @transform_0, window_bounds = array<i64: 1, 16, 128>}, {pipeline_mode = #tpu.pipeline_mode<synchronous>, transform_indices = @transform_1, window_bounds = array<i64: 1, 128>}, {pipeline_mode = #tpu.pipeline_mode<synchronous>, transform_indices = @transform_2, window_bounds = array<i64: 1, 128>}, {pipeline_mode = #tpu.pipeline_mode<synchronous>, transform_indices = @transform_3, window_bounds = array<i64: 4, 128, 128>}, {pipeline_mode = #tpu.pipeline_mode<synchronous>, transform_indices = @transform_4, window_bounds = array<i64: 4, 1, 128>}, {pipeline_mode = #tpu.pipeline_mode<synchronous>, transform_indices = @transform_5, window_bounds = array<i64: 4, 128, 128>}, {pipeline_mode = #tpu.pipeline_mode<synchronous>, transform_indices = @transform_6, window_bounds = array<i64: 4, 1, 128>}, {pipeline_mode = #tpu.pipeline_mode<synchronous>, transform_indices = @transform_7, window_bounds = array<i64: 4, 128, 128>}, {pipeline_mode = #tpu.pipeline_mode<synchronous>, transform_indices = @transform_8, window_bounds = array<i64: 4, 1, 128>}, {pipeline_mode = #tpu.pipeline_mode<synchronous>, transform_indices = @transform_9, window_bounds = array<i64: 4, 128, 128>}, {pipeline_mode = #tpu.pipeline_mode<synchronous>, transform_indices = @transform_10, window_bounds = array<i64: 1, 128>}, {pipeline_mode = #tpu.pipeline_mode<synchronous>, transform_indices = @transform_11, window_bounds = array<i64: 1, 128>}, {pipeline_mode = #tpu.pipeline_mode<synchronous>, transform_indices = @transform_12, window_bounds = array<i64: 1, 128>}, {transform_indices = @transform_13, window_bounds = array<i64: 128, 128>}, {transform_indices = @transform_14, window_bounds = array<i64: 1, 128>}, {transform_indices = @transform_15, window_bounds = array<i64: 128, 128>}, {pipeline_mode = #tpu.pipeline_mode<synchronous>, transform_indices = @transform_16, window_bounds = array<i64: 1, 128>}, {transform_indices = @transform_17, window_bounds = array<i64: 1, 16, 128>}]} {
    %c0_i32 = arith.constant 0 : i32
    %0 = arith.cmpi eq, %arg1, %c0_i32 : i32
    %1 = arith.extui %0 : i1 to i32
    %c0_i32_0 = arith.constant 0 : i32
    %2 = arith.cmpi ne, %1, %c0_i32_0 : i32
    scf.if %2 {
      %c0_i32_20 = arith.constant 0 : i32
      %35 = arith.index_cast %c0_i32_20 : i32 to index
      %c0_21 = arith.constant 0 : index
      %c0_22 = arith.constant 0 : index
      %36 = vector.load %arg2[%35, %c0_21, %c0_22] : memref<1x16x128xf32, #tpu.memory_space<vmem>>, vector<1x16x128xf32>
      %37 = vector.shape_cast %36 : vector<1x16x128xf32> to vector<16x128xf32>
      %c0_23 = arith.constant 0 : index
      %c0_24 = arith.constant 0 : index
      %38 = vector.load %arg3[%c0_23, %c0_24] : memref<1x128xf32, #tpu.memory_space<vmem>>, vector<1x128xf32>
      %c0_25 = arith.constant 0 : index
      %c0_26 = arith.constant 0 : index
      %39 = vector.load %arg4[%c0_25, %c0_26] : memref<1x128xf32, #tpu.memory_space<vmem>>, vector<1x128xf32>
      %cst_27 = arith.constant dense<0.000000e+00> : vector<16xf32>
      %40 = vector.multi_reduction <add>, %37, %cst_27 [1] : vector<16x128xf32> to vector<16xf32>
      %41 = vector.shape_cast %40 : vector<16xf32> to vector<16x1xf32>
      %cst_28 = arith.constant 1.280000e+02 : f32
      %42 = vector.broadcast %cst_28 : f32 to vector<16x1xf32>
      %43 = arith.divf %41, %42 : vector<16x1xf32>
      %44 = vector.broadcast %43 : vector<16x1xf32> to vector<16x128xf32>
      %45 = arith.subf %37, %44 : vector<16x128xf32>
      %46 = arith.mulf %45, %45 : vector<16x128xf32>
      %cst_29 = arith.constant dense<0.000000e+00> : vector<16xf32>
      %47 = vector.multi_reduction <add>, %46, %cst_29 [1] : vector<16x128xf32> to vector<16xf32>
      %48 = vector.shape_cast %47 : vector<16xf32> to vector<16x1xf32>
      %cst_30 = arith.constant 1.280000e+02 : f32
      %49 = vector.broadcast %cst_30 : f32 to vector<16x1xf32>
      %50 = arith.divf %48, %49 : vector<16x1xf32>
      %cst_31 = arith.constant 9.99999997E-7 : f32
      %51 = vector.broadcast %cst_31 : f32 to vector<16x1xf32>
      %52 = arith.addf %50, %51 : vector<16x1xf32>
      %53 = math.rsqrt %52 : vector<16x1xf32>
      %54 = vector.broadcast %53 : vector<16x1xf32> to vector<16x128xf32>
      %55 = arith.mulf %45, %54 : vector<16x128xf32>
      %56 = vector.broadcast %38 : vector<1x128xf32> to vector<16x128xf32>
      %57 = arith.mulf %55, %56 : vector<16x128xf32>
      %58 = vector.broadcast %39 : vector<1x128xf32> to vector<16x128xf32>
      %59 = arith.addf %57, %58 : vector<16x128xf32>
      %cst_32 = arith.constant 0.000000e+00 : f32
      %60 = vector.broadcast %cst_32 : f32 to vector<16x128xf32>
      %c0_i32_33 = arith.constant 0 : i32
      %c4_i32 = arith.constant 4 : i32
      %61 = arith.addi %c0_i32_33, %c4_i32 : i32
      %c1_i32_34 = arith.constant 1 : i32
      %62 = scf.for %arg23 = %c0_i32_33 to %61 step %c1_i32_34 iter_args(%arg24 = %60) -> (vector<16x128xf32>)  : i32 {
        %97 = arith.index_cast %arg23 : i32 to index
        %c0_52 = arith.constant 0 : index
        %c0_53 = arith.constant 0 : index
        %98 = vector.load %arg5[%97, %c0_52, %c0_53] : memref<4x128x128xf32, #tpu.memory_space<vmem>>, vector<1x128x128xf32>
        %99 = vector.shape_cast %98 : vector<1x128x128xf32> to vector<128x128xf32>
        %cst_54 = arith.constant dense<0.000000e+00> : vector<16x128xf32>
        %100 = tpu.matmul %59, %99, %cst_54 {dimension_numbers = #tpu.dot_dimension_numbers<[1], [0], [0], [1], [0, 0, 1, 1], [], []>} : vector<16x128xf32>, vector<128x128xf32>, vector<16x128xf32> -> vector<16x128xf32>
        %101 = arith.index_cast %arg23 : i32 to index
        %c0_55 = arith.constant 0 : index
        %c0_56 = arith.constant 0 : index
        %102 = vector.load %arg6[%101, %c0_55, %c0_56] : memref<4x1x128xf32, #tpu.memory_space<vmem>>, vector<1x1x128xf32>
        %103 = vector.shape_cast %102 : vector<1x1x128xf32> to vector<1x128xf32>
        %104 = vector.broadcast %103 : vector<1x128xf32> to vector<16x128xf32>
        %105 = arith.addf %100, %104 : vector<16x128xf32>
        %106 = arith.index_cast %arg23 : i32 to index
        %c0_57 = arith.constant 0 : index
        %c0_58 = arith.constant 0 : index
        %107 = vector.load %arg7[%106, %c0_57, %c0_58] : memref<4x128x128xf32, #tpu.memory_space<vmem>>, vector<1x128x128xf32>
        %108 = vector.shape_cast %107 : vector<1x128x128xf32> to vector<128x128xf32>
        %cst_59 = arith.constant dense<0.000000e+00> : vector<16x128xf32>
        %109 = tpu.matmul %59, %108, %cst_59 {dimension_numbers = #tpu.dot_dimension_numbers<[1], [0], [0], [1], [0, 0, 1, 1], [], []>} : vector<16x128xf32>, vector<128x128xf32>, vector<16x128xf32> -> vector<16x128xf32>
        %110 = arith.index_cast %arg23 : i32 to index
        %c0_60 = arith.constant 0 : index
        %c0_61 = arith.constant 0 : index
        %111 = vector.load %arg8[%110, %c0_60, %c0_61] : memref<4x1x128xf32, #tpu.memory_space<vmem>>, vector<1x1x128xf32>
        %112 = vector.shape_cast %111 : vector<1x1x128xf32> to vector<1x128xf32>
        %113 = vector.broadcast %112 : vector<1x128xf32> to vector<16x128xf32>
        %114 = arith.addf %109, %113 : vector<16x128xf32>
        %115 = arith.index_cast %arg23 : i32 to index
        %c0_62 = arith.constant 0 : index
        %c0_63 = arith.constant 0 : index
        %116 = vector.load %arg9[%115, %c0_62, %c0_63] : memref<4x128x128xf32, #tpu.memory_space<vmem>>, vector<1x128x128xf32>
        %117 = vector.shape_cast %116 : vector<1x128x128xf32> to vector<128x128xf32>
        %cst_64 = arith.constant dense<0.000000e+00> : vector<16x128xf32>
        %118 = tpu.matmul %59, %117, %cst_64 {dimension_numbers = #tpu.dot_dimension_numbers<[1], [0], [0], [1], [0, 0, 1, 1], [], []>} : vector<16x128xf32>, vector<128x128xf32>, vector<16x128xf32> -> vector<16x128xf32>
        %119 = arith.index_cast %arg23 : i32 to index
        %c0_65 = arith.constant 0 : index
        %c0_66 = arith.constant 0 : index
        %120 = vector.load %arg10[%119, %c0_65, %c0_66] : memref<4x1x128xf32, #tpu.memory_space<vmem>>, vector<1x1x128xf32>
        %121 = vector.shape_cast %120 : vector<1x1x128xf32> to vector<1x128xf32>
        %122 = vector.broadcast %121 : vector<1x128xf32> to vector<16x128xf32>
        %123 = arith.addf %118, %122 : vector<16x128xf32>
        %cst_67 = arith.constant dense<0.000000e+00> : vector<16x16xf32>
        %124 = tpu.matmul %105, %114, %cst_67 {dimension_numbers = #tpu.dot_dimension_numbers<[1], [1], [0], [0], [0, 0, 1, 0], [], []>} : vector<16x128xf32>, vector<16x128xf32>, vector<16x16xf32> -> vector<16x16xf32>
        %cst_68 = arith.constant dense<0xFF800000> : vector<16xf32>
        %125 = vector.multi_reduction <maximumf>, %124, %cst_68 [1] : vector<16x16xf32> to vector<16xf32>
        %126 = vector.shape_cast %125 : vector<16xf32> to vector<16x1xf32>
        %127 = vector.broadcast %126 : vector<16x1xf32> to vector<16x16xf32>
        %128 = arith.subf %124, %127 : vector<16x16xf32>
        %129 = math.exp %128 : vector<16x16xf32>
        %cst_69 = arith.constant dense<0.000000e+00> : vector<16xf32>
        %130 = vector.multi_reduction <add>, %129, %cst_69 [1] : vector<16x16xf32> to vector<16xf32>
        %131 = vector.shape_cast %130 : vector<16xf32> to vector<16x1xf32>
        %132 = vector.broadcast %131 : vector<16x1xf32> to vector<16x16xf32>
        %133 = arith.divf %129, %132 : vector<16x16xf32>
        %cst_70 = arith.constant dense<0.000000e+00> : vector<16x128xf32>
        %134 = tpu.matmul %133, %123, %cst_70 {dimension_numbers = #tpu.dot_dimension_numbers<[1], [0], [0], [1], [0, 0, 1, 1], [], []>} : vector<16x16xf32>, vector<16x128xf32>, vector<16x128xf32> -> vector<16x128xf32>
        %135 = arith.index_cast %arg23 : i32 to index
        %c0_71 = arith.constant 0 : index
        %c0_72 = arith.constant 0 : index
        %136 = vector.load %arg11[%135, %c0_71, %c0_72] : memref<4x128x128xf32, #tpu.memory_space<vmem>>, vector<1x128x128xf32>
        %137 = vector.shape_cast %136 : vector<1x128x128xf32> to vector<128x128xf32>
        %cst_73 = arith.constant dense<0.000000e+00> : vector<16x128xf32>
        %138 = tpu.matmul %134, %137, %cst_73 {dimension_numbers = #tpu.dot_dimension_numbers<[1], [0], [0], [1], [0, 0, 1, 1], [], []>} : vector<16x128xf32>, vector<128x128xf32>, vector<16x128xf32> -> vector<16x128xf32>
        %139 = arith.addf %arg24, %138 : vector<16x128xf32>
        scf.yield %139 : vector<16x128xf32>
      }
      %c4_i32_35 = arith.constant 4 : i32
      %63 = arith.addf %37, %62 : vector<16x128xf32>
      %c0_36 = arith.constant 0 : index
      %c0_37 = arith.constant 0 : index
      %64 = vector.load %arg12[%c0_36, %c0_37] : memref<1x128xf32, #tpu.memory_space<vmem>>, vector<1x128xf32>
      %65 = vector.broadcast %64 : vector<1x128xf32> to vector<16x128xf32>
      %66 = arith.addf %63, %65 : vector<16x128xf32>
      %67 = arith.index_cast %c0_i32_20 : i32 to index
      %c0_38 = arith.constant 0 : index
      %c0_39 = arith.constant 0 : index
      %68 = vector.load %arg20[%67, %c0_38, %c0_39] : memref<1x16x128xf32, #tpu.memory_space<vmem>>, vector<1x16x128xf32>
      %69 = vector.shape_cast %68 : vector<1x16x128xf32> to vector<16x128xf32>
      %70 = vector.shape_cast %66 : vector<16x128xf32> to vector<1x16x128xf32>
      tpu.vector_store %arg20[%67, %c0_38, %c0_39], %70 {strides = array<i32>} : memref<1x16x128xf32, #tpu.memory_space<vmem>>, vector<1x16x128xf32>,
      %c0_40 = arith.constant 0 : index
      %c0_41 = arith.constant 0 : index
      %71 = vector.load %arg13[%c0_40, %c0_41] : memref<1x128xf32, #tpu.memory_space<vmem>>, vector<1x128xf32>
      %c0_42 = arith.constant 0 : index
      %c0_43 = arith.constant 0 : index
      %72 = vector.load %arg14[%c0_42, %c0_43] : memref<1x128xf32, #tpu.memory_space<vmem>>, vector<1x128xf32>
      %cst_44 = arith.constant dense<0.000000e+00> : vector<16xf32>
      %73 = vector.multi_reduction <add>, %66, %cst_44 [1] : vector<16x128xf32> to vector<16xf32>
      %74 = vector.shape_cast %73 : vector<16xf32> to vector<16x1xf32>
      %cst_45 = arith.constant 1.280000e+02 : f32
      %75 = vector.broadcast %cst_45 : f32 to vector<16x1xf32>
      %76 = arith.divf %74, %75 : vector<16x1xf32>
      %77 = vector.broadcast %76 : vector<16x1xf32> to vector<16x128xf32>
      %78 = arith.subf %66, %77 : vector<16x128xf32>
      %79 = arith.mulf %78, %78 : vector<16x128xf32>
      %cst_46 = arith.constant dense<0.000000e+00> : vector<16xf32>
      %80 = vector.multi_reduction <add>, %79, %cst_46 [1] : vector<16x128xf32> to vector<16xf32>
      %81 = vector.shape_cast %80 : vector<16xf32> to vector<16x1xf32>
      %cst_47 = arith.constant 1.280000e+02 : f32
      %82 = vector.broadcast %cst_47 : f32 to vector<16x1xf32>
      %83 = arith.divf %81, %82 : vector<16x1xf32>
      %cst_48 = arith.constant 9.99999997E-7 : f32
      %84 = vector.broadcast %cst_48 : f32 to vector<16x1xf32>
      %85 = arith.addf %83, %84 : vector<16x1xf32>
      %86 = math.rsqrt %85 : vector<16x1xf32>
      %87 = vector.broadcast %86 : vector<16x1xf32> to vector<16x128xf32>
      %88 = arith.mulf %78, %87 : vector<16x128xf32>
      %89 = vector.broadcast %71 : vector<1x128xf32> to vector<16x128xf32>
      %90 = arith.mulf %88, %89 : vector<16x128xf32>
      %91 = vector.broadcast %72 : vector<1x128xf32> to vector<16x128xf32>
      %92 = arith.addf %90, %91 : vector<16x128xf32>
      %93 = arith.index_cast %c0_i32_20 : i32 to index
      %c0_49 = arith.constant 0 : index
      %c0_50 = arith.constant 0 : index
      %94 = vector.load %arg21[%93, %c0_49, %c0_50] : memref<1x16x128xf32, #tpu.memory_space<vmem>>, vector<1x16x128xf32>
      %95 = vector.shape_cast %94 : vector<1x16x128xf32> to vector<16x128xf32>
      %96 = vector.shape_cast %92 : vector<16x128xf32> to vector<1x16x128xf32>
      tpu.vector_store %arg21[%93, %c0_49, %c0_50], %96 {strides = array<i32>} : memref<1x16x128xf32, #tpu.memory_space<vmem>>, vector<1x16x128xf32>,
      %c1_i32_51 = arith.constant 1 : i32
    } else {
    }
    %c0_i32_1 = arith.constant 0 : i32
    %3 = arith.index_cast %c0_i32_1 : i32 to index
    %c0 = arith.constant 0 : index
    %c0_2 = arith.constant 0 : index
    %4 = vector.load %arg21[%3, %c0, %c0_2] : memref<1x16x128xf32, #tpu.memory_space<vmem>>, vector<1x16x128xf32>
    %5 = vector.shape_cast %4 : vector<1x16x128xf32> to vector<16x128xf32>
    %c0_3 = arith.constant 0 : index
    %c0_4 = arith.constant 0 : index
    %6 = vector.load %arg15[%c0_3, %c0_4] : memref<128x128xf32, #tpu.memory_space<vmem>>, vector<128x128xf32>
    %cst = arith.constant dense<0.000000e+00> : vector<16x128xf32>
    %7 = tpu.matmul %5, %6, %cst {dimension_numbers = #tpu.dot_dimension_numbers<[1], [0], [0], [1], [0, 0, 1, 1], [], []>} : vector<16x128xf32>, vector<128x128xf32>, vector<16x128xf32> -> vector<16x128xf32>
    %c0_5 = arith.constant 0 : index
    %c0_6 = arith.constant 0 : index
    %8 = vector.load %arg16[%c0_5, %c0_6] : memref<1x128xf32, #tpu.memory_space<vmem>>, vector<1x128xf32>
    %9 = vector.broadcast %8 : vector<1x128xf32> to vector<16x128xf32>
    %10 = arith.addf %7, %9 : vector<16x128xf32>
    %cst_7 = arith.constant 5.000000e-01 : f32
    %11 = vector.broadcast %cst_7 : f32 to vector<16x128xf32>
    %12 = arith.mulf %11, %10 : vector<16x128xf32>
    %cst_8 = arith.constant 4.471500e-02 : f32
    %13 = vector.broadcast %cst_8 : f32 to vector<16x128xf32>
    %14 = arith.mulf %13, %10 : vector<16x128xf32>
    %15 = arith.mulf %14, %10 : vector<16x128xf32>
    %16 = arith.mulf %15, %10 : vector<16x128xf32>
    %17 = arith.addf %10, %16 : vector<16x128xf32>
    %cst_9 = arith.constant 0.797884583 : f32
    %18 = vector.broadcast %cst_9 : f32 to vector<16x128xf32>
    %19 = arith.mulf %18, %17 : vector<16x128xf32>
    %20 = math.tanh %19 : vector<16x128xf32>
    %cst_10 = arith.constant 1.000000e+00 : f32
    %21 = vector.broadcast %cst_10 : f32 to vector<16x128xf32>
    %22 = arith.addf %21, %20 : vector<16x128xf32>
    %23 = arith.mulf %12, %22 : vector<16x128xf32>
    %c0_11 = arith.constant 0 : index
    %c0_12 = arith.constant 0 : index
    %24 = vector.load %arg17[%c0_11, %c0_12] : memref<128x128xf32, #tpu.memory_space<vmem>>, vector<128x128xf32>
    %cst_13 = arith.constant dense<0.000000e+00> : vector<16x128xf32>
    %25 = tpu.matmul %23, %24, %cst_13 {dimension_numbers = #tpu.dot_dimension_numbers<[1], [0], [0], [1], [0, 0, 1, 1], [], []>} : vector<16x128xf32>, vector<128x128xf32>, vector<16x128xf32> -> vector<16x128xf32>
    %c0_i32_14 = arith.constant 0 : i32
    %26 = arith.cmpi eq, %arg1, %c0_i32_14 : i32
    %27 = arith.extui %26 : i1 to i32
    %c0_i32_15 = arith.constant 0 : i32
    %28 = arith.cmpi ne, %27, %c0_i32_15 : i32
    scf.if %28 {
      %35 = arith.index_cast %c0_i32_1 : i32 to index
      %c0_20 = arith.constant 0 : index
      %c0_21 = arith.constant 0 : index
      %36 = vector.load %arg22[%35, %c0_20, %c0_21] : memref<1x16x128xf32, #tpu.memory_space<vmem>>, vector<1x16x128xf32>
      %37 = vector.shape_cast %36 : vector<1x16x128xf32> to vector<16x128xf32>
      %38 = vector.shape_cast %25 : vector<16x128xf32> to vector<1x16x128xf32>
      tpu.vector_store %arg22[%35, %c0_20, %c0_21], %38 {strides = array<i32>} : memref<1x16x128xf32, #tpu.memory_space<vmem>>, vector<1x16x128xf32>,
    } else {
    }
    %c0_i32_16 = arith.constant 0 : i32
    %29 = arith.cmpi sgt, %arg1, %c0_i32_16 : i32
    %30 = arith.extui %29 : i1 to i32
    %c0_i32_17 = arith.constant 0 : i32
    %31 = arith.cmpi ne, %30, %c0_i32_17 : i32
    scf.if %31 {
      %35 = arith.index_cast %c0_i32_1 : i32 to index
      %c0_20 = arith.constant 0 : index
      %c0_21 = arith.constant 0 : index
      %36 = vector.load %arg22[%35, %c0_20, %c0_21] : memref<1x16x128xf32, #tpu.memory_space<vmem>>, vector<1x16x128xf32>
      %37 = vector.shape_cast %36 : vector<1x16x128xf32> to vector<16x128xf32>
      %38 = arith.addf %37, %25 : vector<16x128xf32>
      %39 = arith.index_cast %c0_i32_1 : i32 to index
      %c0_22 = arith.constant 0 : index
      %c0_23 = arith.constant 0 : index
      %40 = vector.load %arg22[%39, %c0_22, %c0_23] : memref<1x16x128xf32, #tpu.memory_space<vmem>>, vector<1x16x128xf32>
      %41 = vector.shape_cast %40 : vector<1x16x128xf32> to vector<16x128xf32>
      %42 = vector.shape_cast %38 : vector<16x128xf32> to vector<1x16x128xf32>
      tpu.vector_store %arg22[%39, %c0_22, %c0_23], %42 {strides = array<i32>} : memref<1x16x128xf32, #tpu.memory_space<vmem>>, vector<1x16x128xf32>,
    } else {
    }
    %c1_i32 = arith.constant 1 : i32
    %c1_i32_18 = arith.constant 1 : i32
    %32 = arith.cmpi eq, %arg1, %c1_i32_18 : i32
    %33 = arith.extui %32 : i1 to i32
    %c0_i32_19 = arith.constant 0 : i32
    %34 = arith.cmpi ne, %33, %c0_i32_19 : i32
    scf.if %34 {
      %c0_i32_20 = arith.constant 0 : i32
      %35 = arith.index_cast %c0_i32_20 : i32 to index
      %c0_21 = arith.constant 0 : index
      %c0_22 = arith.constant 0 : index
      %36 = vector.load %arg20[%35, %c0_21, %c0_22] : memref<1x16x128xf32, #tpu.memory_space<vmem>>, vector<1x16x128xf32>
      %37 = vector.shape_cast %36 : vector<1x16x128xf32> to vector<16x128xf32>
      %38 = arith.index_cast %c0_i32_20 : i32 to index
      %c0_23 = arith.constant 0 : index
      %c0_24 = arith.constant 0 : index
      %39 = vector.load %arg22[%38, %c0_23, %c0_24] : memref<1x16x128xf32, #tpu.memory_space<vmem>>, vector<1x16x128xf32>
      %40 = vector.shape_cast %39 : vector<1x16x128xf32> to vector<16x128xf32>
      %41 = arith.addf %37, %40 : vector<16x128xf32>
      %c0_25 = arith.constant 0 : index
      %c0_26 = arith.constant 0 : index
      %42 = vector.load %arg18[%c0_25, %c0_26] : memref<1x128xf32, #tpu.memory_space<vmem>>, vector<1x128xf32>
      %43 = vector.broadcast %42 : vector<1x128xf32> to vector<16x128xf32>
      %44 = arith.addf %41, %43 : vector<16x128xf32>
      %45 = arith.index_cast %c0_i32_20 : i32 to index
      %c0_27 = arith.constant 0 : index
      %c0_28 = arith.constant 0 : index
      %46 = vector.load %arg19[%45, %c0_27, %c0_28] : memref<1x16x128xf32, #tpu.memory_space<vmem>>, vector<1x16x128xf32>
      %47 = vector.shape_cast %46 : vector<1x16x128xf32> to vector<16x128xf32>
      %48 = vector.shape_cast %44 : vector<16x128xf32> to vector<1x16x128xf32>
      tpu.vector_store %arg19[%45, %c0_27, %c0_28], %48 {strides = array<i32>} : memref<1x16x128xf32, #tpu.memory_space<vmem>>, vector<1x16x128xf32>,
      %c1_i32_29 = arith.constant 1 : i32
    } else {
    }
    return
  }
  func.func @transform_0(%arg0: i32, %arg1: i32) -> (i32, i32, i32) {
    %c0_i32 = arith.constant 0 : i32
    %c0_i32_0 = arith.constant 0 : i32
    %c0_i32_1 = arith.constant 0 : i32
    return %arg0, %c0_i32, %c0_i32_0 : i32, i32, i32
  }
  func.func @transform_1(%arg0: i32, %arg1: i32) -> (i32, i32) {
    %c0_i32 = arith.constant 0 : i32
    %c0_i32_0 = arith.constant 0 : i32
    %c0_i32_1 = arith.constant 0 : i32
    return %c0_i32, %c0_i32_0 : i32, i32
  }
  func.func @transform_2(%arg0: i32, %arg1: i32) -> (i32, i32) {
    %c0_i32 = arith.constant 0 : i32
    %c0_i32_0 = arith.constant 0 : i32
    %c0_i32_1 = arith.constant 0 : i32
    return %c0_i32, %c0_i32_0 : i32, i32
  }
  func.func @transform_3(%arg0: i32, %arg1: i32) -> (i32, i32, i32) {
    %c0_i32 = arith.constant 0 : i32
    %c0_i32_0 = arith.constant 0 : i32
    %c0_i32_1 = arith.constant 0 : i32
    %c0_i32_2 = arith.constant 0 : i32
    return %c0_i32, %c0_i32_0, %c0_i32_1 : i32, i32, i32
  }
  func.func @transform_4(%arg0: i32, %arg1: i32) -> (i32, i32, i32) {
    %c0_i32 = arith.constant 0 : i32
    %c0_i32_0 = arith.constant 0 : i32
    %c0_i32_1 = arith.constant 0 : i32
    %c0_i32_2 = arith.constant 0 : i32
    return %c0_i32, %c0_i32_0, %c0_i32_1 : i32, i32, i32
  }
  func.func @transform_5(%arg0: i32, %arg1: i32) -> (i32, i32, i32) {
    %c0_i32 = arith.constant 0 : i32
    %c0_i32_0 = arith.constant 0 : i32
    %c0_i32_1 = arith.constant 0 : i32
    %c0_i32_2 = arith.constant 0 : i32
    return %c0_i32, %c0_i32_0, %c0_i32_1 : i32, i32, i32
  }
  func.func @transform_6(%arg0: i32, %arg1: i32) -> (i32, i32, i32) {
    %c0_i32 = arith.constant 0 : i32
    %c0_i32_0 = arith.constant 0 : i32
    %c0_i32_1 = arith.constant 0 : i32
    %c0_i32_2 = arith.constant 0 : i32
    return %c0_i32, %c0_i32_0, %c0_i32_1 : i32, i32, i32
  }
  func.func @transform_7(%arg0: i32, %arg1: i32) -> (i32, i32, i32) {
    %c0_i32 = arith.constant 0 : i32
    %c0_i32_0 = arith.constant 0 : i32
    %c0_i32_1 = arith.constant 0 : i32
    %c0_i32_2 = arith.constant 0 : i32
    return %c0_i32, %c0_i32_0, %c0_i32_1 : i32, i32, i32
  }
  func.func @transform_8(%arg0: i32, %arg1: i32) -> (i32, i32, i32) {
    %c0_i32 = arith.constant 0 : i32
    %c0_i32_0 = arith.constant 0 : i32
    %c0_i32_1 = arith.constant 0 : i32
    %c0_i32_2 = arith.constant 0 : i32
    return %c0_i32, %c0_i32_0, %c0_i32_1 : i32, i32, i32
  }
  func.func @transform_9(%arg0: i32, %arg1: i32) -> (i32, i32, i32) {
    %c0_i32 = arith.constant 0 : i32
    %c0_i32_0 = arith.constant 0 : i32
    %c0_i32_1 = arith.constant 0 : i32
    %c0_i32_2 = arith.constant 0 : i32
    return %c0_i32, %c0_i32_0, %c0_i32_1 : i32, i32, i32
  }
  func.func @transform_10(%arg0: i32, %arg1: i32) -> (i32, i32) {
    %c0_i32 = arith.constant 0 : i32
    %c0_i32_0 = arith.constant 0 : i32
    %c0_i32_1 = arith.constant 0 : i32
    return %c0_i32, %c0_i32_0 : i32, i32
  }
  func.func @transform_11(%arg0: i32, %arg1: i32) -> (i32, i32) {
    %c0_i32 = arith.constant 0 : i32
    %c0_i32_0 = arith.constant 0 : i32
    %c0_i32_1 = arith.constant 0 : i32
    return %c0_i32, %c0_i32_0 : i32, i32
  }
  func.func @transform_12(%arg0: i32, %arg1: i32) -> (i32, i32) {
    %c0_i32 = arith.constant 0 : i32
    %c0_i32_0 = arith.constant 0 : i32
    %c0_i32_1 = arith.constant 0 : i32
    return %c0_i32, %c0_i32_0 : i32, i32
  }
  func.func @transform_13(%arg0: i32, %arg1: i32) -> (i32, i32) {
    %c0_i32 = arith.constant 0 : i32
    %c0_i32_0 = arith.constant 0 : i32
    return %c0_i32, %arg1 : i32, i32
  }
  func.func @transform_14(%arg0: i32, %arg1: i32) -> (i32, i32) {
    %c0_i32 = arith.constant 0 : i32
    %c0_i32_0 = arith.constant 0 : i32
    return %c0_i32, %arg1 : i32, i32
  }
  func.func @transform_15(%arg0: i32, %arg1: i32) -> (i32, i32) {
    %c0_i32 = arith.constant 0 : i32
    %c0_i32_0 = arith.constant 0 : i32
    return %arg1, %c0_i32 : i32, i32
  }
  func.func @transform_16(%arg0: i32, %arg1: i32) -> (i32, i32) {
    %c0_i32 = arith.constant 0 : i32
    %c0_i32_0 = arith.constant 0 : i32
    %c0_i32_1 = arith.constant 0 : i32
    return %c0_i32, %c0_i32_0 : i32, i32
  }
  func.func @transform_17(%arg0: i32, %arg1: i32) -> (i32, i32, i32) {
    %c0_i32 = arith.constant 0 : i32
    %c0_i32_0 = arith.constant 0 : i32
    %c0_i32_1 = arith.constant 0 : i32
    return %arg0, %c0_i32, %c0_i32_0 : i32, i32, i32
  }
}

module attributes {stable_mosaic.version = 11 : i64} {
  func.func @encoder_layer_kernel(%arg0: i32, %arg1: i32, %arg2: memref<1x16x128xf32, #tpu.memory_space<vmem>>, %arg3: memref<1x128xf32, #tpu.memory_space<vmem>>, %arg4: memref<1x128xf32, #tpu.memory_space<vmem>>, %arg5: memref<4x128x128xf32, #tpu.memory_space<vmem>>, %arg6: memref<4x1x128xf32, #tpu.memory_space<vmem>>, %arg7: memref<4x128x128xf32, #tpu.memory_space<vmem>>, %arg8: memref<4x1x128xf32, #tpu.memory_space<vmem>>, %arg9: memref<4x128x128xf32, #tpu.memory_space<vmem>>, %arg10: memref<4x1x128xf32, #tpu.memory_space<vmem>>, %arg11: memref<4x128x128xf32, #tpu.memory_space<vmem>>, %arg12: memref<1x128xf32, #tpu.memory_space<vmem>>, %arg13: memref<1x128xf32, #tpu.memory_space<vmem>>, %arg14: memref<1x128xf32, #tpu.memory_space<vmem>>, %arg15: memref<128x128xf32, #tpu.memory_space<vmem>>, %arg16: memref<1x128xf32, #tpu.memory_space<vmem>>, %arg17: memref<128x128xf32, #tpu.memory_space<vmem>>, %arg18: memref<1x128xf32, #tpu.memory_space<vmem>>, %arg19: memref<1x16x128xf32, #tpu.memory_space<vmem>>, %arg20: memref<1x16x128xf32, #tpu.memory_space<vmem>>, %arg21: memref<1x16x128xf32, #tpu.memory_space<vmem>>, %arg22: memref<1x16x128xf32, #tpu.memory_space<vmem>>) attributes {dimension_semantics = [#tpu.dimension_semantics<parallel>, #tpu.dimension_semantics<arbitrary>], iteration_bounds = array<i64: 2, 2>, scalar_prefetch = 0 : i64, scratch_operands = 3 : i64, tpu.core_type = #tpu.core_type<tc>, window_params = [{transform_indices = @transform_0, window_bounds = array<i64: 1, 16, 128>}, {pipeline_mode = #tpu.pipeline_mode<synchronous>, transform_indices = @transform_1, window_bounds = array<i64: 1, 128>}, {pipeline_mode = #tpu.pipeline_mode<synchronous>, transform_indices = @transform_2, window_bounds = array<i64: 1, 128>}, {pipeline_mode = #tpu.pipeline_mode<synchronous>, transform_indices = @transform_3, window_bounds = array<i64: 4, 128, 128>}, {pipeline_mode = #tpu.pipeline_mode<synchronous>, transform_indices = @transform_4, window_bounds = array<i64: 4, 1, 128>}, {pipeline_mode = #tpu.pipeline_mode<synchronous>, transform_indices = @transform_5, window_bounds = array<i64: 4, 128, 128>}, {pipeline_mode = #tpu.pipeline_mode<synchronous>, transform_indices = @transform_6, window_bounds = array<i64: 4, 1, 128>}, {pipeline_mode = #tpu.pipeline_mode<synchronous>, transform_indices = @transform_7, window_bounds = array<i64: 4, 128, 128>}, {pipeline_mode = #tpu.pipeline_mode<synchronous>, transform_indices = @transform_8, window_bounds = array<i64: 4, 1, 128>}, {pipeline_mode = #tpu.pipeline_mode<synchronous>, transform_indices = @transform_9, window_bounds = array<i64: 4, 128, 128>}, {pipeline_mode = #tpu.pipeline_mode<synchronous>, transform_indices = @transform_10, window_bounds = array<i64: 1, 128>}, {pipeline_mode = #tpu.pipeline_mode<synchronous>, transform_indices = @transform_11, window_bounds = array<i64: 1, 128>}, {pipeline_mode = #tpu.pipeline_mode<synchronous>, transform_indices = @transform_12, window_bounds = array<i64: 1, 128>}, {transform_indices = @transform_13, window_bounds = array<i64: 128, 128>}, {transform_indices = @transform_14, window_bounds = array<i64: 1, 128>}, {transform_indices = @transform_15, window_bounds = array<i64: 128, 128>}, {pipeline_mode = #tpu.pipeline_mode<synchronous>, transform_indices = @transform_16, window_bounds = array<i64: 1, 128>}, {transform_indices = @transform_17, window_bounds = array<i64: 1, 16, 128>}]} {
    %c0_i32 = arith.constant 0 : i32
    %0 = arith.cmpi eq, %arg1, %c0_i32 : i32
    %1 = arith.extui %0 : i1 to i32
    %c0_i32_0 = arith.constant 0 : i32
    %2 = arith.cmpi ne, %1, %c0_i32_0 : i32
    scf.if %2 {
      %c0_i32_20 = arith.constant 0 : i32
      %35 = arith.index_cast %c0_i32_20 : i32 to index
      %c0_21 = arith.constant 0 : index
      %c0_22 = arith.constant 0 : index
      %36 = vector.load %arg2[%35, %c0_21, %c0_22] : memref<1x16x128xf32, #tpu.memory_space<vmem>>, vector<1x16x128xf32>
      %37 = vector.shape_cast %36 : vector<1x16x128xf32> to vector<16x128xf32>
      %c0_23 = arith.constant 0 : index
      %c0_24 = arith.constant 0 : index
      %38 = vector.load %arg3[%c0_23, %c0_24] : memref<1x128xf32, #tpu.memory_space<vmem>>, vector<1x128xf32>
      %c0_25 = arith.constant 0 : index
      %c0_26 = arith.constant 0 : index
      %39 = vector.load %arg4[%c0_25, %c0_26] : memref<1x128xf32, #tpu.memory_space<vmem>>, vector<1x128xf32>
      %cst_27 = arith.constant dense<0.000000e+00> : vector<16xf32>
      %40 = vector.multi_reduction <add>, %37, %cst_27 [1] : vector<16x128xf32> to vector<16xf32>
      %41 = vector.shape_cast %40 : vector<16xf32> to vector<16x1xf32>
      %cst_28 = arith.constant 1.280000e+02 : f32
      %42 = vector.broadcast %cst_28 : f32 to vector<16x1xf32>
      %43 = arith.divf %41, %42 : vector<16x1xf32>
      %44 = vector.broadcast %43 : vector<16x1xf32> to vector<16x128xf32>
      %45 = arith.subf %37, %44 : vector<16x128xf32>
      %46 = arith.mulf %45, %45 : vector<16x128xf32>
      %cst_29 = arith.constant dense<0.000000e+00> : vector<16xf32>
      %47 = vector.multi_reduction <add>, %46, %cst_29 [1] : vector<16x128xf32> to vector<16xf32>
      %48 = vector.shape_cast %47 : vector<16xf32> to vector<16x1xf32>
      %cst_30 = arith.constant 1.280000e+02 : f32
      %49 = vector.broadcast %cst_30 : f32 to vector<16x1xf32>
      %50 = arith.divf %48, %49 : vector<16x1xf32>
      %cst_31 = arith.constant 9.99999997E-7 : f32
      %51 = vector.broadcast %cst_31 : f32 to vector<16x1xf32>
      %52 = arith.addf %50, %51 : vector<16x1xf32>
      %53 = math.rsqrt %52 : vector<16x1xf32>
      %54 = vector.broadcast %53 : vector<16x1xf32> to vector<16x128xf32>
      %55 = arith.mulf %45, %54 : vector<16x128xf32>
      %56 = vector.broadcast %38 : vector<1x128xf32> to vector<16x128xf32>
      %57 = arith.mulf %55, %56 : vector<16x128xf32>
      %58 = vector.broadcast %39 : vector<1x128xf32> to vector<16x128xf32>
      %59 = arith.addf %57, %58 : vector<16x128xf32>
      %cst_32 = arith.constant 0.000000e+00 : f32
      %60 = vector.broadcast %cst_32 : f32 to vector<16x128xf32>
      %c0_i32_33 = arith.constant 0 : i32
      %c4_i32 = arith.constant 4 : i32
      %61 = arith.addi %c0_i32_33, %c4_i32 : i32
      %c1_i32_34 = arith.constant 1 : i32
      %62 = scf.for %arg23 = %c0_i32_33 to %61 step %c1_i32_34 iter_args(%arg24 = %60) -> (vector<16x128xf32>)  : i32 {
        %97 = arith.index_cast %arg23 : i32 to index
        %c0_52 = arith.constant 0 : index
        %c0_53 = arith.constant 0 : index
        %98 = vector.load %arg5[%97, %c0_52, %c0_53] : memref<4x128x128xf32, #tpu.memory_space<vmem>>, vector<1x128x128xf32>
        %99 = vector.shape_cast %98 : vector<1x128x128xf32> to vector<128x128xf32>
        %cst_54 = arith.constant dense<0.000000e+00> : vector<16x128xf32>
        %100 = tpu.matmul %59, %99, %cst_54 {dimension_numbers = #tpu.dot_dimension_numbers<[1], [0], [0], [1], [0, 0, 1, 1], [], []>} : vector<16x128xf32>, vector<128x128xf32>, vector<16x128xf32> -> vector<16x128xf32>
        %101 = arith.index_cast %arg23 : i32 to index
        %c0_55 = arith.constant 0 : index
        %c0_56 = arith.constant 0 : index
        %102 = vector.load %arg6[%101, %c0_55, %c0_56] : memref<4x1x128xf32, #tpu.memory_space<vmem>>, vector<1x1x128xf32>
        %103 = vector.shape_cast %102 : vector<1x1x128xf32> to vector<1x128xf32>
        %104 = vector.broadcast %103 : vector<1x128xf32> to vector<16x128xf32>
        %105 = arith.addf %100, %104 : vector<16x128xf32>
        %106 = arith.index_cast %arg23 : i32 to index
        %c0_57 = arith.constant 0 : index
        %c0_58 = arith.constant 0 : index
        %107 = vector.load %arg7[%106, %c0_57, %c0_58] : memref<4x128x128xf32, #tpu.memory_space<vmem>>, vector<1x128x128xf32>
        %108 = vector.shape_cast %107 : vector<1x128x128xf32> to vector<128x128xf32>
        %cst_59 = arith.constant dense<0.000000e+00> : vector<16x128xf32>
        %109 = tpu.matmul %59, %108, %cst_59 {dimension_numbers = #tpu.dot_dimension_numbers<[1], [0], [0], [1], [0, 0, 1, 1], [], []>} : vector<16x128xf32>, vector<128x128xf32>, vector<16x128xf32> -> vector<16x128xf32>
        %110 = arith.index_cast %arg23 : i32 to index
        %c0_60 = arith.constant 0 : index
        %c0_61 = arith.constant 0 : index
        %111 = vector.load %arg8[%110, %c0_60, %c0_61] : memref<4x1x128xf32, #tpu.memory_space<vmem>>, vector<1x1x128xf32>
        %112 = vector.shape_cast %111 : vector<1x1x128xf32> to vector<1x128xf32>
        %113 = vector.broadcast %112 : vector<1x128xf32> to vector<16x128xf32>
        %114 = arith.addf %109, %113 : vector<16x128xf32>
        %115 = arith.index_cast %arg23 : i32 to index
        %c0_62 = arith.constant 0 : index
        %c0_63 = arith.constant 0 : index
        %116 = vector.load %arg9[%115, %c0_62, %c0_63] : memref<4x128x128xf32, #tpu.memory_space<vmem>>, vector<1x128x128xf32>
        %117 = vector.shape_cast %116 : vector<1x128x128xf32> to vector<128x128xf32>
        %cst_64 = arith.constant dense<0.000000e+00> : vector<16x128xf32>
        %118 = tpu.matmul %59, %117, %cst_64 {dimension_numbers = #tpu.dot_dimension_numbers<[1], [0], [0], [1], [0, 0, 1, 1], [], []>} : vector<16x128xf32>, vector<128x128xf32>, vector<16x128xf32> -> vector<16x128xf32>
        %119 = arith.index_cast %arg23 : i32 to index
        %c0_65 = arith.constant 0 : index
        %c0_66 = arith.constant 0 : index
        %120 = vector.load %arg10[%119, %c0_65, %c0_66] : memref<4x1x128xf32, #tpu.memory_space<vmem>>, vector<1x1x128xf32>
        %121 = vector.shape_cast %120 : vector<1x1x128xf32> to vector<1x128xf32>
        %122 = vector.broadcast %121 : vector<1x128xf32> to vector<16x128xf32>
        %123 = arith.addf %118, %122 : vector<16x128xf32>
        %cst_67 = arith.constant dense<0.000000e+00> : vector<16x16xf32>
        %124 = tpu.matmul %105, %114, %cst_67 {dimension_numbers = #tpu.dot_dimension_numbers<[1], [1], [0], [0], [0, 0, 1, 0], [], []>} : vector<16x128xf32>, vector<16x128xf32>, vector<16x16xf32> -> vector<16x16xf32>
        %cst_68 = arith.constant dense<0xFF800000> : vector<16xf32>
        %125 = vector.multi_reduction <maximumf>, %124, %cst_68 [1] : vector<16x16xf32> to vector<16xf32>
        %126 = vector.shape_cast %125 : vector<16xf32> to vector<16x1xf32>
        %127 = vector.broadcast %126 : vector<16x1xf32> to vector<16x16xf32>
        %128 = arith.subf %124, %127 : vector<16x16xf32>
        %129 = math.exp %128 : vector<16x16xf32>
        %cst_69 = arith.constant dense<0.000000e+00> : vector<16xf32>
        %130 = vector.multi_reduction <add>, %129, %cst_69 [1] : vector<16x16xf32> to vector<16xf32>
        %131 = vector.shape_cast %130 : vector<16xf32> to vector<16x1xf32>
        %132 = vector.broadcast %131 : vector<16x1xf32> to vector<16x16xf32>
        %133 = arith.divf %129, %132 : vector<16x16xf32>
        %cst_70 = arith.constant dense<0.000000e+00> : vector<16x128xf32>
        %134 = tpu.matmul %133, %123, %cst_70 {dimension_numbers = #tpu.dot_dimension_numbers<[1], [0], [0], [1], [0, 0, 1, 1], [], []>} : vector<16x16xf32>, vector<16x128xf32>, vector<16x128xf32> -> vector<16x128xf32>
        %135 = arith.index_cast %arg23 : i32 to index
        %c0_71 = arith.constant 0 : index
        %c0_72 = arith.constant 0 : index
        %136 = vector.load %arg11[%135, %c0_71, %c0_72] : memref<4x128x128xf32, #tpu.memory_space<vmem>>, vector<1x128x128xf32>
        %137 = vector.shape_cast %136 : vector<1x128x128xf32> to vector<128x128xf32>
        %cst_73 = arith.constant dense<0.000000e+00> : vector<16x128xf32>
        %138 = tpu.matmul %134, %137, %cst_73 {dimension_numbers = #tpu.dot_dimension_numbers<[1], [0], [0], [1], [0, 0, 1, 1], [], []>} : vector<16x128xf32>, vector<128x128xf32>, vector<16x128xf32> -> vector<16x128xf32>
        %139 = arith.addf %arg24, %138 : vector<16x128xf32>
        scf.yield %139 : vector<16x128xf32>
      }
      %c4_i32_35 = arith.constant 4 : i32
      %63 = arith.addf %37, %62 : vector<16x128xf32>
      %c0_36 = arith.constant 0 : index
      %c0_37 = arith.constant 0 : index
      %64 = vector.load %arg12[%c0_36, %c0_37] : memref<1x128xf32, #tpu.memory_space<vmem>>, vector<1x128xf32>
      %65 = vector.broadcast %64 : vector<1x128xf32> to vector<16x128xf32>
      %66 = arith.addf %63, %65 : vector<16x128xf32>
      %67 = arith.index_cast %c0_i32_20 : i32 to index
      %c0_38 = arith.constant 0 : index
      %c0_39 = arith.constant 0 : index
      %68 = vector.load %arg20[%67, %c0_38, %c0_39] : memref<1x16x128xf32, #tpu.memory_space<vmem>>, vector<1x16x128xf32>
      %69 = vector.shape_cast %68 : vector<1x16x128xf32> to vector<16x128xf32>
      %70 = vector.shape_cast %66 : vector<16x128xf32> to vector<1x16x128xf32>
      tpu.vector_store %arg20[%67, %c0_38, %c0_39], %70 {strides = array<i32>} : memref<1x16x128xf32, #tpu.memory_space<vmem>>, vector<1x16x128xf32>,
      %c0_40 = arith.constant 0 : index
      %c0_41 = arith.constant 0 : index
      %71 = vector.load %arg13[%c0_40, %c0_41] : memref<1x128xf32, #tpu.memory_space<vmem>>, vector<1x128xf32>
      %c0_42 = arith.constant 0 : index
      %c0_43 = arith.constant 0 : index
      %72 = vector.load %arg14[%c0_42, %c0_43] : memref<1x128xf32, #tpu.memory_space<vmem>>, vector<1x128xf32>
      %cst_44 = arith.constant dense<0.000000e+00> : vector<16xf32>
      %73 = vector.multi_reduction <add>, %66, %cst_44 [1] : vector<16x128xf32> to vector<16xf32>
      %74 = vector.shape_cast %73 : vector<16xf32> to vector<16x1xf32>
      %cst_45 = arith.constant 1.280000e+02 : f32
      %75 = vector.broadcast %cst_45 : f32 to vector<16x1xf32>
      %76 = arith.divf %74, %75 : vector<16x1xf32>
      %77 = vector.broadcast %76 : vector<16x1xf32> to vector<16x128xf32>
      %78 = arith.subf %66, %77 : vector<16x128xf32>
      %79 = arith.mulf %78, %78 : vector<16x128xf32>
      %cst_46 = arith.constant dense<0.000000e+00> : vector<16xf32>
      %80 = vector.multi_reduction <add>, %79, %cst_46 [1] : vector<16x128xf32> to vector<16xf32>
      %81 = vector.shape_cast %80 : vector<16xf32> to vector<16x1xf32>
      %cst_47 = arith.constant 1.280000e+02 : f32
      %82 = vector.broadcast %cst_47 : f32 to vector<16x1xf32>
      %83 = arith.divf %81, %82 : vector<16x1xf32>
      %cst_48 = arith.constant 9.99999997E-7 : f32
      %84 = vector.broadcast %cst_48 : f32 to vector<16x1xf32>
      %85 = arith.addf %83, %84 : vector<16x1xf32>
      %86 = math.rsqrt %85 : vector<16x1xf32>
      %87 = vector.broadcast %86 : vector<16x1xf32> to vector<16x128xf32>
      %88 = arith.mulf %78, %87 : vector<16x128xf32>
      %89 = vector.broadcast %71 : vector<1x128xf32> to vector<16x128xf32>
      %90 = arith.mulf %88, %89 : vector<16x128xf32>
      %91 = vector.broadcast %72 : vector<1x128xf32> to vector<16x128xf32>
      %92 = arith.addf %90, %91 : vector<16x128xf32>
      %93 = arith.index_cast %c0_i32_20 : i32 to index
      %c0_49 = arith.constant 0 : index
      %c0_50 = arith.constant 0 : index
      %94 = vector.load %arg21[%93, %c0_49, %c0_50] : memref<1x16x128xf32, #tpu.memory_space<vmem>>, vector<1x16x128xf32>
      %95 = vector.shape_cast %94 : vector<1x16x128xf32> to vector<16x128xf32>
      %96 = vector.shape_cast %92 : vector<16x128xf32> to vector<1x16x128xf32>
      tpu.vector_store %arg21[%93, %c0_49, %c0_50], %96 {strides = array<i32>} : memref<1x16x128xf32, #tpu.memory_space<vmem>>, vector<1x16x128xf32>,
      %c1_i32_51 = arith.constant 1 : i32
    } else {
    }
    %c0_i32_1 = arith.constant 0 : i32
    %3 = arith.index_cast %c0_i32_1 : i32 to index
    %c0 = arith.constant 0 : index
    %c0_2 = arith.constant 0 : index
    %4 = vector.load %arg21[%3, %c0, %c0_2] : memref<1x16x128xf32, #tpu.memory_space<vmem>>, vector<1x16x128xf32>
    %5 = vector.shape_cast %4 : vector<1x16x128xf32> to vector<16x128xf32>
    %c0_3 = arith.constant 0 : index
    %c0_4 = arith.constant 0 : index
    %6 = vector.load %arg15[%c0_3, %c0_4] : memref<128x128xf32, #tpu.memory_space<vmem>>, vector<128x128xf32>
    %cst = arith.constant dense<0.000000e+00> : vector<16x128xf32>
    %7 = tpu.matmul %5, %6, %cst {dimension_numbers = #tpu.dot_dimension_numbers<[1], [0], [0], [1], [0, 0, 1, 1], [], []>} : vector<16x128xf32>, vector<128x128xf32>, vector<16x128xf32> -> vector<16x128xf32>
    %c0_5 = arith.constant 0 : index
    %c0_6 = arith.constant 0 : index
    %8 = vector.load %arg16[%c0_5, %c0_6] : memref<1x128xf32, #tpu.memory_space<vmem>>, vector<1x128xf32>
    %9 = vector.broadcast %8 : vector<1x128xf32> to vector<16x128xf32>
    %10 = arith.addf %7, %9 : vector<16x128xf32>
    %cst_7 = arith.constant 5.000000e-01 : f32
    %11 = vector.broadcast %cst_7 : f32 to vector<16x128xf32>
    %12 = arith.mulf %11, %10 : vector<16x128xf32>
    %cst_8 = arith.constant 4.471500e-02 : f32
    %13 = vector.broadcast %cst_8 : f32 to vector<16x128xf32>
    %14 = arith.mulf %13, %10 : vector<16x128xf32>
    %15 = arith.mulf %14, %10 : vector<16x128xf32>
    %16 = arith.mulf %15, %10 : vector<16x128xf32>
    %17 = arith.addf %10, %16 : vector<16x128xf32>
    %cst_9 = arith.constant 0.797884583 : f32
    %18 = vector.broadcast %cst_9 : f32 to vector<16x128xf32>
    %19 = arith.mulf %18, %17 : vector<16x128xf32>
    %20 = math.tanh %19 : vector<16x128xf32>
    %cst_10 = arith.constant 1.000000e+00 : f32
    %21 = vector.broadcast %cst_10 : f32 to vector<16x128xf32>
    %22 = arith.addf %21, %20 : vector<16x128xf32>
    %23 = arith.mulf %12, %22 : vector<16x128xf32>
    %c0_11 = arith.constant 0 : index
    %c0_12 = arith.constant 0 : index
    %24 = vector.load %arg17[%c0_11, %c0_12] : memref<128x128xf32, #tpu.memory_space<vmem>>, vector<128x128xf32>
    %cst_13 = arith.constant dense<0.000000e+00> : vector<16x128xf32>
    %25 = tpu.matmul %23, %24, %cst_13 {dimension_numbers = #tpu.dot_dimension_numbers<[1], [0], [0], [1], [0, 0, 1, 1], [], []>} : vector<16x128xf32>, vector<128x128xf32>, vector<16x128xf32> -> vector<16x128xf32>
    %c0_i32_14 = arith.constant 0 : i32
    %26 = arith.cmpi eq, %arg1, %c0_i32_14 : i32
    %27 = arith.extui %26 : i1 to i32
    %c0_i32_15 = arith.constant 0 : i32
    %28 = arith.cmpi ne, %27, %c0_i32_15 : i32
    scf.if %28 {
      %35 = arith.index_cast %c0_i32_1 : i32 to index
      %c0_20 = arith.constant 0 : index
      %c0_21 = arith.constant 0 : index
      %36 = vector.load %arg22[%35, %c0_20, %c0_21] : memref<1x16x128xf32, #tpu.memory_space<vmem>>, vector<1x16x128xf32>
      %37 = vector.shape_cast %36 : vector<1x16x128xf32> to vector<16x128xf32>
      %38 = vector.shape_cast %25 : vector<16x128xf32> to vector<1x16x128xf32>
      tpu.vector_store %arg22[%35, %c0_20, %c0_21], %38 {strides = array<i32>} : memref<1x16x128xf32, #tpu.memory_space<vmem>>, vector<1x16x128xf32>,
    } else {
    }
    %c0_i32_16 = arith.constant 0 : i32
    %29 = arith.cmpi sgt, %arg1, %c0_i32_16 : i32
    %30 = arith.extui %29 : i1 to i32
    %c0_i32_17 = arith.constant 0 : i32
    %31 = arith.cmpi ne, %30, %c0_i32_17 : i32
    scf.if %31 {
      %35 = arith.index_cast %c0_i32_1 : i32 to index
      %c0_20 = arith.constant 0 : index
      %c0_21 = arith.constant 0 : index
      %36 = vector.load %arg22[%35, %c0_20, %c0_21] : memref<1x16x128xf32, #tpu.memory_space<vmem>>, vector<1x16x128xf32>
      %37 = vector.shape_cast %36 : vector<1x16x128xf32> to vector<16x128xf32>
      %38 = arith.addf %37, %25 : vector<16x128xf32>
      %39 = arith.index_cast %c0_i32_1 : i32 to index
      %c0_22 = arith.constant 0 : index
      %c0_23 = arith.constant 0 : index
      %40 = vector.load %arg22[%39, %c0_22, %c0_23] : memref<1x16x128xf32, #tpu.memory_space<vmem>>, vector<1x16x128xf32>
      %41 = vector.shape_cast %40 : vector<1x16x128xf32> to vector<16x128xf32>
      %42 = vector.shape_cast %38 : vector<16x128xf32> to vector<1x16x128xf32>
      tpu.vector_store %arg22[%39, %c0_22, %c0_23], %42 {strides = array<i32>} : memref<1x16x128xf32, #tpu.memory_space<vmem>>, vector<1x16x128xf32>,
    } else {
    }
    %c1_i32 = arith.constant 1 : i32
    %c1_i32_18 = arith.constant 1 : i32
    %32 = arith.cmpi eq, %arg1, %c1_i32_18 : i32
    %33 = arith.extui %32 : i1 to i32
    %c0_i32_19 = arith.constant 0 : i32
    %34 = arith.cmpi ne, %33, %c0_i32_19 : i32
    scf.if %34 {
      %c0_i32_20 = arith.constant 0 : i32
      %35 = arith.index_cast %c0_i32_20 : i32 to index
      %c0_21 = arith.constant 0 : index
      %c0_22 = arith.constant 0 : index
      %36 = vector.load %arg20[%35, %c0_21, %c0_22] : memref<1x16x128xf32, #tpu.memory_space<vmem>>, vector<1x16x128xf32>
      %37 = vector.shape_cast %36 : vector<1x16x128xf32> to vector<16x128xf32>
      %38 = arith.index_cast %c0_i32_20 : i32 to index
      %c0_23 = arith.constant 0 : index
      %c0_24 = arith.constant 0 : index
      %39 = vector.load %arg22[%38, %c0_23, %c0_24] : memref<1x16x128xf32, #tpu.memory_space<vmem>>, vector<1x16x128xf32>
      %40 = vector.shape_cast %39 : vector<1x16x128xf32> to vector<16x128xf32>
      %41 = arith.addf %37, %40 : vector<16x128xf32>
      %c0_25 = arith.constant 0 : index
      %c0_26 = arith.constant 0 : index
      %42 = vector.load %arg18[%c0_25, %c0_26] : memref<1x128xf32, #tpu.memory_space<vmem>>, vector<1x128xf32>
      %43 = vector.broadcast %42 : vector<1x128xf32> to vector<16x128xf32>
      %44 = arith.addf %41, %43 : vector<16x128xf32>
      %45 = arith.index_cast %c0_i32_20 : i32 to index
      %c0_27 = arith.constant 0 : index
      %c0_28 = arith.constant 0 : index
      %46 = vector.load %arg19[%45, %c0_27, %c0_28] : memref<1x16x128xf32, #tpu.memory_space<vmem>>, vector<1x16x128xf32>
      %47 = vector.shape_cast %46 : vector<1x16x128xf32> to vector<16x128xf32>
      %48 = vector.shape_cast %44 : vector<16x128xf32> to vector<1x16x128xf32>
      tpu.vector_store %arg19[%45, %c0_27, %c0_28], %48 {strides = array<i32>} : memref<1x16x128xf32, #tpu.memory_space<vmem>>, vector<1x16x128xf32>,
      %c1_i32_29 = arith.constant 1 : i32
    } else {
    }
    return
  }
  func.func @transform_0(%arg0: i32, %arg1: i32) -> (i32, i32, i32) {
    %c0_i32 = arith.constant 0 : i32
    %c0_i32_0 = arith.constant 0 : i32
    %c0_i32_1 = arith.constant 0 : i32
    return %arg0, %c0_i32, %c0_i32_0 : i32, i32, i32
  }
  func.func @transform_1(%arg0: i32, %arg1: i32) -> (i32, i32) {
    %c0_i32 = arith.constant 0 : i32
    %c0_i32_0 = arith.constant 0 : i32
    %c0_i32_1 = arith.constant 0 : i32
    return %c0_i32, %c0_i32_0 : i32, i32
  }
  func.func @transform_2(%arg0: i32, %arg1: i32) -> (i32, i32) {
    %c0_i32 = arith.constant 0 : i32
    %c0_i32_0 = arith.constant 0 : i32
    %c0_i32_1 = arith.constant 0 : i32
    return %c0_i32, %c0_i32_0 : i32, i32
  }
  func.func @transform_3(%arg0: i32, %arg1: i32) -> (i32, i32, i32) {
    %c0_i32 = arith.constant 0 : i32
    %c0_i32_0 = arith.constant 0 : i32
    %c0_i32_1 = arith.constant 0 : i32
    %c0_i32_2 = arith.constant 0 : i32
    return %c0_i32, %c0_i32_0, %c0_i32_1 : i32, i32, i32
  }
  func.func @transform_4(%arg0: i32, %arg1: i32) -> (i32, i32, i32) {
    %c0_i32 = arith.constant 0 : i32
    %c0_i32_0 = arith.constant 0 : i32
    %c0_i32_1 = arith.constant 0 : i32
    %c0_i32_2 = arith.constant 0 : i32
    return %c0_i32, %c0_i32_0, %c0_i32_1 : i32, i32, i32
  }
  func.func @transform_5(%arg0: i32, %arg1: i32) -> (i32, i32, i32) {
    %c0_i32 = arith.constant 0 : i32
    %c0_i32_0 = arith.constant 0 : i32
    %c0_i32_1 = arith.constant 0 : i32
    %c0_i32_2 = arith.constant 0 : i32
    return %c0_i32, %c0_i32_0, %c0_i32_1 : i32, i32, i32
  }
  func.func @transform_6(%arg0: i32, %arg1: i32) -> (i32, i32, i32) {
    %c0_i32 = arith.constant 0 : i32
    %c0_i32_0 = arith.constant 0 : i32
    %c0_i32_1 = arith.constant 0 : i32
    %c0_i32_2 = arith.constant 0 : i32
    return %c0_i32, %c0_i32_0, %c0_i32_1 : i32, i32, i32
  }
  func.func @transform_7(%arg0: i32, %arg1: i32) -> (i32, i32, i32) {
    %c0_i32 = arith.constant 0 : i32
    %c0_i32_0 = arith.constant 0 : i32
    %c0_i32_1 = arith.constant 0 : i32
    %c0_i32_2 = arith.constant 0 : i32
    return %c0_i32, %c0_i32_0, %c0_i32_1 : i32, i32, i32
  }
  func.func @transform_8(%arg0: i32, %arg1: i32) -> (i32, i32, i32) {
    %c0_i32 = arith.constant 0 : i32
    %c0_i32_0 = arith.constant 0 : i32
    %c0_i32_1 = arith.constant 0 : i32
    %c0_i32_2 = arith.constant 0 : i32
    return %c0_i32, %c0_i32_0, %c0_i32_1 : i32, i32, i32
  }
  func.func @transform_9(%arg0: i32, %arg1: i32) -> (i32, i32, i32) {
    %c0_i32 = arith.constant 0 : i32
    %c0_i32_0 = arith.constant 0 : i32
    %c0_i32_1 = arith.constant 0 : i32
    %c0_i32_2 = arith.constant 0 : i32
    return %c0_i32, %c0_i32_0, %c0_i32_1 : i32, i32, i32
  }
  func.func @transform_10(%arg0: i32, %arg1: i32) -> (i32, i32) {
    %c0_i32 = arith.constant 0 : i32
    %c0_i32_0 = arith.constant 0 : i32
    %c0_i32_1 = arith.constant 0 : i32
    return %c0_i32, %c0_i32_0 : i32, i32
  }
  func.func @transform_11(%arg0: i32, %arg1: i32) -> (i32, i32) {
    %c0_i32 = arith.constant 0 : i32
    %c0_i32_0 = arith.constant 0 : i32
    %c0_i32_1 = arith.constant 0 : i32
    return %c0_i32, %c0_i32_0 : i32, i32
  }
  func.func @transform_12(%arg0: i32, %arg1: i32) -> (i32, i32) {
    %c0_i32 = arith.constant 0 : i32
    %c0_i32_0 = arith.constant 0 : i32
    %c0_i32_1 = arith.constant 0 : i32
    return %c0_i32, %c0_i32_0 : i32, i32
  }
  func.func @transform_13(%arg0: i32, %arg1: i32) -> (i32, i32) {
    %c0_i32 = arith.constant 0 : i32
    %c0_i32_0 = arith.constant 0 : i32
    return %c0_i32, %arg1 : i32, i32
  }
  func.func @transform_14(%arg0: i32, %arg1: i32) -> (i32, i32) {
    %c0_i32 = arith.constant 0 : i32
    %c0_i32_0 = arith.constant 0 : i32
    return %c0_i32, %arg1 : i32, i32
  }
  func.func @transform_15(%arg0: i32, %arg1: i32) -> (i32, i32) {
    %c0_i32 = arith.constant 0 : i32
    %c0_i32_0 = arith.constant 0 : i32
    return %arg1, %c0_i32 : i32, i32
  }
  func.func @transform_16(%arg0: i32, %arg1: i32) -> (i32, i32) {
    %c0_i32 = arith.constant 0 : i32
    %c0_i32_0 = arith.constant 0 : i32
    %c0_i32_1 = arith.constant 0 : i32
    return %c0_i32, %c0_i32_0 : i32, i32
  }
  func.func @transform_17(%arg0: i32, %arg1: i32) -> (i32, i32, i32) {
    %c0_i32 = arith.constant 0 : i32
    %c0_i32_0 = arith.constant 0 : i32
    %c0_i32_1 = arith.constant 0 : i32
    return %arg0, %c0_i32, %c0_i32_0 : i32, i32, i32
  }
}

</mosaic_0001>

<llo_original>
// kernel: tpu_custom_call.1
$region0: #{tpu_custom_call.1}
  #allocation0 [shape = 'u32[]', space=smem, size = 0x4, offset = 0x4, fixed_abs, tag = 'smem constant byte address 0x4 - core index']
  #allocation1 [shape = 'u32[144,128]{1,0:T(1,128)}', space=vmem, size = 0x12000, scoped, tag = 'internal scratch']
  #allocation2 [shape = 'f32[1,16,128]{2,1,0:T(8,128)}', space=vmem, size = 0x2000, scoped, tag = 'scratch operand']
  #allocation3 [shape = 'f32[1,16,128]{2,1,0:T(8,128)}', space=vmem, size = 0x2000, scoped, tag = 'scratch operand']
  #allocation4 [shape = 'f32[1,16,128]{2,1,0:T(8,128)}', space=vmem, size = 0x2000, scoped, tag = 'scratch operand']
  %s0 = inlined_call_operand.hbm [shape: f32[2,16,128], index: 0, kind: input, shape index: {}]
  %s1 = inlined_call_operand.vmem [shape: f32[1,128], index: 1, kind: input, shape index: {}]
  %s2 = inlined_call_operand.hbm [shape: f32[1,128], index: 2, kind: input, shape index: {}]
  %s3 = inlined_call_operand.hbm [shape: f32[4,128,128], index: 3, kind: input, shape index: {}]
  %s4 = inlined_call_operand.vmem [shape: f32[4,1,128], index: 4, kind: input, shape index: {}]
  %s5 = inlined_call_operand.hbm [shape: f32[4,128,128], index: 5, kind: input, shape index: {}]
  %s6 = inlined_call_operand.vmem [shape: f32[4,1,128], index: 6, kind: input, shape index: {}]
  %s7 = inlined_call_operand.hbm [shape: f32[4,128,128], index: 7, kind: input, shape index: {}]
  %s8 = inlined_call_operand.vmem [shape: f32[4,1,128], index: 8, kind: input, shape index: {}]
  %s9 = inlined_call_operand.hbm [shape: f32[4,128,128], index: 9, kind: input, shape index: {}]
  %s10 = inlined_call_operand.vmem [shape: f32[1,128], index: 10, kind: input, shape index: {}]
  %s11 = inlined_call_operand.vmem [shape: f32[1,128], index: 11, kind: input, shape index: {}]
  %s12 = inlined_call_operand.vmem [shape: f32[1,128], index: 12, kind: input, shape index: {}]
  %s13 = inlined_call_operand.hbm [shape: f32[128,256], index: 13, kind: input, shape index: {}]
  %s14 = inlined_call_operand.vmem [shape: f32[1,256], index: 14, kind: input, shape index: {}]
  %s15 = inlined_call_operand.hbm [shape: f32[256,128], index: 15, kind: input, shape index: {}]
  %s16 = inlined_call_operand.vmem [shape: f32[1,128], index: 16, kind: input, shape index: {}]
  %s17 = inlined_call_operand.hbm [shape: f32[2,16,128], index: 17, kind: output, shape index: {}]
  %s18 = sld [smem:[#allocation0]]
  $region156: #{tpu_custom_call.1} parent=0
    _
  %s20 = ssub.s32 1, %s18
  %s21 = scalar_select 0, %s20, %s18
  $region1: #{tpu_custom_call.1} parent=0
    #allocation5 [shape = 'u8[16384]{0}', space=vmem, size = 0x4000, scoped, tag = 'input window, operand 0']
    #allocation6 [shape = 's32[2]{0}', space=sflag, size = 0x8, scoped, tag = 'scoped memory for tpu_custom_call.1']
    #allocation7 [shape = 's32[2]{0}', space=sflag, size = 0x8, scoped, tag = 'scoped memory for tpu_custom_call.1']
    #allocation8 [shape = 'u8[512]{0}', space=vmem, size = 0x400, scoped, tag = 'input window, operand 2, single buffered']
    #allocation9 [shape = 's32[1]{0}', space=sflag, size = 0x4, scoped, tag = 'scoped memory for tpu_custom_call.1']
    #allocation10 [shape = 'u8[262144]{0}', space=vmem, size = 0x40000, scoped, tag = 'input window, operand 3, single buffered']
    #allocation11 [shape = 'u8[262144]{0}', space=vmem, size = 0x40000, scoped, tag = 'input window, operand 5, single buffered']
    #allocation12 [shape = 's32[1]{0}', space=sflag, size = 0x4, scoped, tag = 'scoped memory for tpu_custom_call.1']
    #allocation13 [shape = 'u8[262144]{0}', space=vmem, size = 0x40000, scoped, tag = 'input window, operand 7, single buffered']
    #allocation14 [shape = 'u8[262144]{0}', space=vmem, size = 0x40000, scoped, tag = 'input window, operand 9, single buffered']
    #allocation15 [shape = 's32[1]{0}', space=sflag, size = 0x4, scoped, tag = 'scoped memory for tpu_custom_call.1']
    #allocation16 [shape = 'u8[131072]{0}', space=vmem, size = 0x20000, scoped, tag = 'input window, operand 13']
    #allocation17 [shape = 'u8[131072]{0}', space=vmem, size = 0x20000, scoped, tag = 'input window, operand 15']
    #allocation18 [shape = 'u8[16384]{0}', space=vmem, size = 0x4000, scoped, tag = 'output window, operand 0']
    %22 = vsyncpa [#allocation6], 0
    %s23 = scalar_lea.sflag [#allocation6], 1
    %24 = vsyncpa %s23, 0
    %25 = vsyncpa [#allocation9], 0
    %26 = vsyncpa [#allocation12], 0
    %27 = vsyncpa [#allocation15], 0
    %28 = vsyncpa [#allocation7], 0
    %s29 = scalar_lea.sflag [#allocation7], 1
    %30 = vsyncpa %s29, 0
    loop: start=0, step=1, limit=6
    $region2: #{tpu_custom_call.1} parent=1 // loop_pre_header
      _
    $region3: #{tpu_custom_call.1} parent=1 // loop_header
      %s32 = sphi 0, %s36
      %p33 = scmp.ge.s32.totalorder %s32, 6
      %s39 = sphi 0, %s51
      %s40 = sphi 0, %s47
      %s41 = sphi 0, %s39
      %s42 = sphi 0, %s40
      %s43 = sphi 0, %s41
      %s44 = sphi 0, %s42
      %s54 = sphi 0, %s56
      %s57 = sphi 0, %s54
      %s58 = sphi 0, %s57
      %s74 = sphi 0, %s58
      %s78 = sphi 0, %s78
      %s80 = sphi 0, %s78
      %s81 = sphi 0, %s80
      %s95 = sphi 0, %s81
      %s99 = sphi 0, %s99
      %s101 = sphi 0, %s99
      %s102 = sphi 0, %s101
      %s116 = sphi 0, %s102
      %s120 = sphi 0, %s120
      %s122 = sphi 0, %s120
      %s123 = sphi 0, %s122
      %s137 = sphi 0, %s123
      %s141 = sphi 0, %s141
      %s143 = sphi 0, %s141
      %s144 = sphi 0, %s143
      %s158 = sphi 0, %s144
      %s162 = sphi 0, %s162
      %s164 = sphi 0, %s162
      %s165 = sphi 0, %s164
      %s179 = sphi 0, %s165
      %s183 = sphi 0, %s183
      %s185 = sphi 0, %s183
      %s186 = sphi 0, %s185
      %s200 = sphi 0, %s186
      %s204 = sphi 0, %s204
      %s206 = sphi 0, %s204
      %s207 = sphi 0, %s206
      %s221 = sphi 0, %s207
      %s225 = sphi 0, %s225
      %s227 = sphi 0, %s225
      %s228 = sphi 0, %s227
      %s242 = sphi 0, %s228
      %s246 = sphi 0, %s246
      %s248 = sphi 0, %s246
      %s249 = sphi 0, %s248
      %s263 = sphi 0, %s249
      %s267 = sphi 0, %s267
      %s269 = sphi 0, %s267
      %s270 = sphi 0, %s269
      %s284 = sphi 0, %s270
      %s288 = sphi 0, %s288
      %s290 = sphi 0, %s288
      %s291 = sphi 0, %s290
      %s305 = sphi 0, %s291
      %s309 = sphi 0, %s309
      %s311 = sphi 0, %s309
      %s312 = sphi 0, %s311
      %s326 = sphi 0, %s312
      %s332 = sphi 0, %s334
      %s335 = sphi 0, %s332
      %s336 = sphi 0, %s335
      %s352 = sphi 0, %s336
      %s358 = sphi 0, %s360
      %s361 = sphi 0, %s358
      %s362 = sphi 0, %s361
      %s378 = sphi 0, %s362
      %s384 = sphi 0, %s386
      %s387 = sphi 0, %s384
      %s388 = sphi 0, %s387
      %s404 = sphi 0, %s388
      %s408 = sphi 0, %s408
      %s410 = sphi 0, %s408
      %s411 = sphi 0, %s410
      %s425 = sphi 0, %s411
      %s431 = sphi 0, %s433
      %s434 = sphi 0, %s431
      %s435 = sphi 0, %s434
      %s451 = sphi 0, %s435
    $region4: #{tpu_custom_call.1} parent=1 // loop_header_branch
      %35 = sbr.rel (%p33) target = $region8
    $region5: #{tpu_custom_call.1} parent=1 // loop_body
      %s37 = ssub.s32 %s32, 1
      %s38 = ssub.s32 %s32, 2
      %s45 = sadd.s32 1, %s40
      %p46 = scmp.ge.s32.totalorder %s45, 2
      %s47 = scalar_select %p46, 0, %s45
      %s48 = sadd.s32 1, %s39
      %s49 = scalar_select %p46, %s48, %s39
      %p50 = scmp.ge.s32.totalorder %s49, 2
      %s51 = scalar_select %p50, 0, %s49
      %s52 = ssub.s32 %s39, %s51
      %p53 = scmp.eq.s32.totalorder %s52, 0
      %s55 = sadd.s32 %s54, 1
      %s56 = scalar_select %p53, %s54, %s55
      %p59 = pneg %p53
      %p60 = scmp.eq.s32.totalorder %s32, 3
      %p61 = por %p59, %p60
      %p62 = scmp.ne.s32.totalorder %s54, %s57
      %p63 = scmp.eq.s32.totalorder %s32, 0
      %p64 = por %p62, %p63
      %p65 = scmp.ne.s32.totalorder %s54, %s57
      %p66 = scmp.eq.s32.totalorder %s37, 3
      %p67 = por %p65, %p66
      %p68 = scmp.ne.s32.totalorder %s57, %s58
      %p69 = scmp.eq.s32.totalorder %s37, 0
      %p70 = por %p68, %p69
      %p71 = scmp.ne.s32.totalorder %s57, %s58
      %p72 = scmp.eq.s32.totalorder %s38, 3
      %p73 = por %p71, %p72
      %p75 = scmp.ne.s32.totalorder %s58, %s74
      %p76 = scmp.eq.s32.totalorder %s38, 0
      %p77 = por %p75, %p76
      %s79 = sadd.s32 %s78, 1
      %p82 = scmp.eq.s32.totalorder %s32, 3
      %p83 = scmp.ne.s32.totalorder %s78, %s80
      %p84 = scmp.eq.s32.totalorder %s32, 0
      %p85 = por %p83, %p84
      %p86 = scmp.ne.s32.totalorder %s78, %s80
      %p87 = scmp.eq.s32.totalorder %s37, 3
      %p88 = por %p86, %p87
      %p89 = scmp.ne.s32.totalorder %s80, %s81
      %p90 = scmp.eq.s32.totalorder %s37, 0
      %p91 = por %p89, %p90
      %p92 = scmp.ne.s32.totalorder %s80, %s81
      %p93 = scmp.eq.s32.totalorder %s38, 3
      %p94 = por %p92, %p93
      %p96 = scmp.ne.s32.totalorder %s81, %s95
      %p97 = scmp.eq.s32.totalorder %s38, 0
      %p98 = por %p96, %p97
      %s100 = sadd.s32 %s99, 1
      %p103 = scmp.eq.s32.totalorder %s32, 3
      %p104 = scmp.ne.s32.totalorder %s99, %s101
      %p105 = scmp.eq.s32.totalorder %s32, 0
      %p106 = por %p104, %p105
      %p107 = scmp.ne.s32.totalorder %s99, %s101
      %p108 = scmp.eq.s32.totalorder %s37, 3
      %p109 = por %p107, %p108
      %p110 = scmp.ne.s32.totalorder %s101, %s102
      %p111 = scmp.eq.s32.totalorder %s37, 0
      %p112 = por %p110, %p111
      %p113 = scmp.ne.s32.totalorder %s101, %s102
      %p114 = scmp.eq.s32.totalorder %s38, 3
      %p115 = por %p113, %p114
      %p117 = scmp.ne.s32.totalorder %s102, %s116
      %p118 = scmp.eq.s32.totalorder %s38, 0
      %p119 = por %p117, %p118
      %s121 = sadd.s32 %s120, 1
      %p124 = scmp.eq.s32.totalorder %s32, 3
      %p125 = scmp.ne.s32.totalorder %s120, %s122
      %p126 = scmp.eq.s32.totalorder %s32, 0
      %p127 = por %p125, %p126
      %p128 = scmp.ne.s32.totalorder %s120, %s122
      %p129 = scmp.eq.s32.totalorder %s37, 3
      %p130 = por %p128, %p129
      %p131 = scmp.ne.s32.totalorder %s122, %s123
      %p132 = scmp.eq.s32.totalorder %s37, 0
      %p133 = por %p131, %p132
      %p134 = scmp.ne.s32.totalorder %s122, %s123
      %p135 = scmp.eq.s32.totalorder %s38, 3
      %p136 = por %p134, %p135
      %p138 = scmp.ne.s32.totalorder %s123, %s137
      %p139 = scmp.eq.s32.totalorder %s38, 0
      %p140 = por %p138, %p139
      %s142 = sadd.s32 %s141, 1
      %p145 = scmp.eq.s32.totalorder %s32, 3
      %p146 = scmp.ne.s32.totalorder %s141, %s143
      %p147 = scmp.eq.s32.totalorder %s32, 0
      %p148 = por %p146, %p147
      %p149 = scmp.ne.s32.totalorder %s141, %s143
      %p150 = scmp.eq.s32.totalorder %s37, 3
      %p151 = por %p149, %p150
      %p152 = scmp.ne.s32.totalorder %s143, %s144
      %p153 = scmp.eq.s32.totalorder %s37, 0
      %p154 = por %p152, %p153
      %p155 = scmp.ne.s32.totalorder %s143, %s144
      %p156 = scmp.eq.s32.totalorder %s38, 3
      %p157 = por %p155, %p156
      %p159 = scmp.ne.s32.totalorder %s144, %s158
      %p160 = scmp.eq.s32.totalorder %s38, 0
      %p161 = por %p159, %p160
      %s163 = sadd.s32 %s162, 1
      %p166 = scmp.eq.s32.totalorder %s32, 3
      %p167 = scmp.ne.s32.totalorder %s162, %s164
      %p168 = scmp.eq.s32.totalorder %s32, 0
      %p169 = por %p167, %p168
      %p170 = scmp.ne.s32.totalorder %s162, %s164
      %p171 = scmp.eq.s32.totalorder %s37, 3
      %p172 = por %p170, %p171
      %p173 = scmp.ne.s32.totalorder %s164, %s165
      %p174 = scmp.eq.s32.totalorder %s37, 0
      %p175 = por %p173, %p174
      %p176 = scmp.ne.s32.totalorder %s164, %s165
      %p177 = scmp.eq.s32.totalorder %s38, 3
      %p178 = por %p176, %p177
      %p180 = scmp.ne.s32.totalorder %s165, %s179
      %p181 = scmp.eq.s32.totalorder %s38, 0
      %p182 = por %p180, %p181
      %s184 = sadd.s32 %s183, 1
      %p187 = scmp.eq.s32.totalorder %s32, 3
      %p188 = scmp.ne.s32.totalorder %s183, %s185
      %p189 = scmp.eq.s32.totalorder %s32, 0
      %p190 = por %p188, %p189
      %p191 = scmp.ne.s32.totalorder %s183, %s185
      %p192 = scmp.eq.s32.totalorder %s37, 3
      %p193 = por %p191, %p192
      %p194 = scmp.ne.s32.totalorder %s185, %s186
      %p195 = scmp.eq.s32.totalorder %s37, 0
      %p196 = por %p194, %p195
      %p197 = scmp.ne.s32.totalorder %s185, %s186
      %p198 = scmp.eq.s32.totalorder %s38, 3
      %p199 = por %p197, %p198
      %p201 = scmp.ne.s32.totalorder %s186, %s200
      %p202 = scmp.eq.s32.totalorder %s38, 0
      %p203 = por %p201, %p202
      %s205 = sadd.s32 %s204, 1
      %p208 = scmp.eq.s32.totalorder %s32, 3
      %p209 = scmp.ne.s32.totalorder %s204, %s206
      %p210 = scmp.eq.s32.totalorder %s32, 0
      %p211 = por %p209, %p210
      %p212 = scmp.ne.s32.totalorder %s204, %s206
      %p213 = scmp.eq.s32.totalorder %s37, 3
      %p214 = por %p212, %p213
      %p215 = scmp.ne.s32.totalorder %s206, %s207
      %p216 = scmp.eq.s32.totalorder %s37, 0
      %p217 = por %p215, %p216
      %p218 = scmp.ne.s32.totalorder %s206, %s207
      %p219 = scmp.eq.s32.totalorder %s38, 3
      %p220 = por %p218, %p219
      %p222 = scmp.ne.s32.totalorder %s207, %s221
      %p223 = scmp.eq.s32.totalorder %s38, 0
      %p224 = por %p222, %p223
      %s226 = sadd.s32 %s225, 1
      %p229 = scmp.eq.s32.totalorder %s32, 3
      %p230 = scmp.ne.s32.totalorder %s225, %s227
      %p231 = scmp.eq.s32.totalorder %s32, 0
      %p232 = por %p230, %p231
      %p233 = scmp.ne.s32.totalorder %s225, %s227
      %p234 = scmp.eq.s32.totalorder %s37, 3
      %p235 = por %p233, %p234
      %p236 = scmp.ne.s32.totalorder %s227, %s228
      %p237 = scmp.eq.s32.totalorder %s37, 0
      %p238 = por %p236, %p237
      %p239 = scmp.ne.s32.totalorder %s227, %s228
      %p240 = scmp.eq.s32.totalorder %s38, 3
      %p241 = por %p239, %p240
      %p243 = scmp.ne.s32.totalorder %s228, %s242
      %p244 = scmp.eq.s32.totalorder %s38, 0
      %p245 = por %p243, %p244
      %s247 = sadd.s32 %s246, 1
      %p250 = scmp.eq.s32.totalorder %s32, 3
      %p251 = scmp.ne.s32.totalorder %s246, %s248
      %p252 = scmp.eq.s32.totalorder %s32, 0
      %p253 = por %p251, %p252
      %p254 = scmp.ne.s32.totalorder %s246, %s248
      %p255 = scmp.eq.s32.totalorder %s37, 3
      %p256 = por %p254, %p255
      %p257 = scmp.ne.s32.totalorder %s248, %s249
      %p258 = scmp.eq.s32.totalorder %s37, 0
      %p259 = por %p257, %p258
      %p260 = scmp.ne.s32.totalorder %s248, %s249
      %p261 = scmp.eq.s32.totalorder %s38, 3
      %p262 = por %p260, %p261
      %p264 = scmp.ne.s32.totalorder %s249, %s263
      %p265 = scmp.eq.s32.totalorder %s38, 0
      %p266 = por %p264, %p265
      %s268 = sadd.s32 %s267, 1
      %p271 = scmp.eq.s32.totalorder %s32, 3
      %p272 = scmp.ne.s32.totalorder %s267, %s269
      %p273 = scmp.eq.s32.totalorder %s32, 0
      %p274 = por %p272, %p273
      %p275 = scmp.ne.s32.totalorder %s267, %s269
      %p276 = scmp.eq.s32.totalorder %s37, 3
      %p277 = por %p275, %p276
      %p278 = scmp.ne.s32.totalorder %s269, %s270
      %p279 = scmp.eq.s32.totalorder %s37, 0
      %p280 = por %p278, %p279
      %p281 = scmp.ne.s32.totalorder %s269, %s270
      %p282 = scmp.eq.s32.totalorder %s38, 3
      %p283 = por %p281, %p282
      %p285 = scmp.ne.s32.totalorder %s270, %s284
      %p286 = scmp.eq.s32.totalorder %s38, 0
      %p287 = por %p285, %p286
      %s289 = sadd.s32 %s288, 1
      %p292 = scmp.eq.s32.totalorder %s32, 3
      %p293 = scmp.ne.s32.totalorder %s288, %s290
      %p294 = scmp.eq.s32.totalorder %s32, 0
      %p295 = por %p293, %p294
      %p296 = scmp.ne.s32.totalorder %s288, %s290
      %p297 = scmp.eq.s32.totalorder %s37, 3
      %p298 = por %p296, %p297
      %p299 = scmp.ne.s32.totalorder %s290, %s291
      %p300 = scmp.eq.s32.totalorder %s37, 0
      %p301 = por %p299, %p300
      %p302 = scmp.ne.s32.totalorder %s290, %s291
      %p303 = scmp.eq.s32.totalorder %s38, 3
      %p304 = por %p302, %p303
      %p306 = scmp.ne.s32.totalorder %s291, %s305
      %p307 = scmp.eq.s32.totalorder %s38, 0
      %p308 = por %p306, %p307
      %s310 = sadd.s32 %s309, 1
      %p313 = scmp.eq.s32.totalorder %s32, 3
      %p314 = scmp.ne.s32.totalorder %s309, %s311
      %p315 = scmp.eq.s32.totalorder %s32, 0
      %p316 = por %p314, %p315
      %p317 = scmp.ne.s32.totalorder %s309, %s311
      %p318 = scmp.eq.s32.totalorder %s37, 3
      %p319 = por %p317, %p318
      %p320 = scmp.ne.s32.totalorder %s311, %s312
      %p321 = scmp.eq.s32.totalorder %s37, 0
      %p322 = por %p320, %p321
      %p323 = scmp.ne.s32.totalorder %s311, %s312
      %p324 = scmp.eq.s32.totalorder %s38, 3
      %p325 = por %p323, %p324
      %p327 = scmp.ne.s32.totalorder %s312, %s326
      %p328 = scmp.eq.s32.totalorder %s38, 0
      %p329 = por %p327, %p328
      %s330 = ssub.s32 %s40, %s47
      %p331 = scmp.eq.s32.totalorder %s330, 0
      %s333 = sadd.s32 %s332, 1
      %s334 = scalar_select %p331, %s332, %s333
      %p337 = pneg %p331
      %p338 = scmp.eq.s32.totalorder %s32, 3
      %p339 = por %p337, %p338
      %p340 = scmp.ne.s32.totalorder %s332, %s335
      %p341 = scmp.eq.s32.totalorder %s32, 0
      %p342 = por %p340, %p341
      %p343 = scmp.ne.s32.totalorder %s332, %s335
      %p344 = scmp.eq.s32.totalorder %s37, 3
      %p345 = por %p343, %p344
      %p346 = scmp.ne.s32.totalorder %s335, %s336
      %p347 = scmp.eq.s32.totalorder %s37, 0
      %p348 = por %p346, %p347
      %p349 = scmp.ne.s32.totalorder %s335, %s336
      %p350 = scmp.eq.s32.totalorder %s38, 3
      %p351 = por %p349, %p350
      %p353 = scmp.ne.s32.totalorder %s336, %s352
      %p354 = scmp.eq.s32.totalorder %s38, 0
      %p355 = por %p353, %p354
      %s356 = ssub.s32 %s40, %s47
      %p357 = scmp.eq.s32.totalorder %s356, 0
      %s359 = sadd.s32 %s358, 1
      %s360 = scalar_select %p357, %s358, %s359
      %p363 = pneg %p357
      %p364 = scmp.eq.s32.totalorder %s32, 3
      %p365 = por %p363, %p364
      %p366 = scmp.ne.s32.totalorder %s358, %s361
      %p367 = scmp.eq.s32.totalorder %s32, 0
      %p368 = por %p366, %p367
      %p369 = scmp.ne.s32.totalorder %s358, %s361
      %p370 = scmp.eq.s32.totalorder %s37, 3
      %p371 = por %p369, %p370
      %p372 = scmp.ne.s32.totalorder %s361, %s362
      %p373 = scmp.eq.s32.totalorder %s37, 0
      %p374 = por %p372, %p373
      %p375 = scmp.ne.s32.totalorder %s361, %s362
      %p376 = scmp.eq.s32.totalorder %s38, 3
      %p377 = por %p375, %p376
      %p379 = scmp.ne.s32.totalorder %s362, %s378
      %p380 = scmp.eq.s32.totalorder %s38, 0
      %p381 = por %p379, %p380
      %s382 = ssub.s32 %s40, %s47
      %p383 = scmp.eq.s32.totalorder %s382, 0
      %s385 = sadd.s32 %s384, 1
      %s386 = scalar_select %p383, %s384, %s385
      %p389 = pneg %p383
      %p390 = scmp.eq.s32.totalorder %s32, 3
      %p391 = por %p389, %p390
      %p392 = scmp.ne.s32.totalorder %s384, %s387
      %p393 = scmp.eq.s32.totalorder %s32, 0
      %p394 = por %p392, %p393
      %p395 = scmp.ne.s32.totalorder %s384, %s387
      %p396 = scmp.eq.s32.totalorder %s37, 3
      %p397 = por %p395, %p396
      %p398 = scmp.ne.s32.totalorder %s387, %s388
      %p399 = scmp.eq.s32.totalorder %s37, 0
      %p400 = por %p398, %p399
      %p401 = scmp.ne.s32.totalorder %s387, %s388
      %p402 = scmp.eq.s32.totalorder %s38, 3
      %p403 = por %p401, %p402
      %p405 = scmp.ne.s32.totalorder %s388, %s404
      %p406 = scmp.eq.s32.totalorder %s38, 0
      %p407 = por %p405, %p406
      %s409 = sadd.s32 %s408, 1
      %p412 = scmp.eq.s32.totalorder %s32, 3
      %p413 = scmp.ne.s32.totalorder %s408, %s410
      %p414 = scmp.eq.s32.totalorder %s32, 0
      %p415 = por %p413, %p414
      %p416 = scmp.ne.s32.totalorder %s408, %s410
      %p417 = scmp.eq.s32.totalorder %s37, 3
      %p418 = por %p416, %p417
      %p419 = scmp.ne.s32.totalorder %s410, %s411
      %p420 = scmp.eq.s32.totalorder %s37, 0
      %p421 = por %p419, %p420
      %p422 = scmp.ne.s32.totalorder %s410, %s411
      %p423 = scmp.eq.s32.totalorder %s38, 3
      %p424 = por %p422, %p423
      %p426 = scmp.ne.s32.totalorder %s411, %s425
      %p427 = scmp.eq.s32.totalorder %s38, 0
      %p428 = por %p426, %p427
      %s429 = ssub.s32 %s39, %s51
      %p430 = scmp.eq.s32.totalorder %s429, 0
      %s432 = sadd.s32 %s431, 1
      %s433 = scalar_select %p430, %s431, %s432
      %p436 = pneg %p430
      %p437 = scmp.eq.s32.totalorder %s32, 3
      %p438 = por %p436, %p437
      %p439 = scmp.ne.s32.totalorder %s431, %s434
      %p440 = scmp.eq.s32.totalorder %s32, 0
      %p441 = por %p439, %p440
      %p442 = scmp.ne.s32.totalorder %s431, %s434
      %p443 = scmp.eq.s32.totalorder %s37, 3
      %p444 = por %p442, %p443
      %p445 = scmp.ne.s32.totalorder %s434, %s435
      %p446 = scmp.eq.s32.totalorder %s37, 0
      %p447 = por %p445, %p446
      %p448 = scmp.ne.s32.totalorder %s434, %s435
      %p449 = scmp.eq.s32.totalorder %s38, 3
      %p450 = por %p448, %p449
      %p452 = scmp.ne.s32.totalorder %s435, %s451
      %p453 = scmp.eq.s32.totalorder %s38, 0
      %p454 = por %p452, %p453
      %p455 = scmp.le.s32.totalorder 1, %s32
      %p456 = scmp.lt.s32.totalorder %s32, 5
      %p457 = pnand %p455, %p456
      %p458 = pneg %p457
      // Predicated region
      $region9: #{tpu_custom_call.1} parent=5 // pred_check
        _
      $region10: #{tpu_custom_call.1} parent=5 // pred_check_branch
        %460 = sbr.rel (%p457) target = $region12
      $region11: #{tpu_custom_call.1} parent=5 // pred_region
        %s461 = ssub.s32 %s32, 1
        // Predicated region
        $region13: #{tpu_custom_call.1} parent=11 // pred_check
          %p462 = pneg %p91
        $region14: #{tpu_custom_call.1} parent=11 // pred_check_branch
          %464 = sbr.rel (%p462) target = $region16
        $region15: #{tpu_custom_call.1} parent=11 // pred_region
          _
        $region16: #{tpu_custom_call.1} parent=11 // pred_fallthru
          _
        // Predicated region
        $region17: #{tpu_custom_call.1} parent=11 // pred_check
          %p465 = pneg %p112
        $region18: #{tpu_custom_call.1} parent=11 // pred_check_branch
          %467 = sbr.rel (%p465) target = $region20
        $region19: #{tpu_custom_call.1} parent=11 // pred_region
          %s469 = ssub.s32 16, 16
          %470 = vsyncadd [#allocation9], %s469
          %s472 = sshll.u32 [#allocation8], 4
          %s473 = int_to_ptr.vmem [resolvable:$true] %s472
          %475 = dma.hbm_to_vmem [thread:$0]  %s2, 16, %s473, [#allocation9]
        $region20: #{tpu_custom_call.1} parent=11 // pred_fallthru
          _
        // Predicated region
        $region21: #{tpu_custom_call.1} parent=11 // pred_check
          %p476 = pneg %p133
        $region22: #{tpu_custom_call.1} parent=11 // pred_check_branch
          %478 = sbr.rel (%p476) target = $region24
        $region23: #{tpu_custom_call.1} parent=11 // pred_region
          %s480 = ssub.s32 8192, 8192
          %481 = vsyncadd [#allocation9], %s480
          %s482 = sshll.u32 [#allocation10], 4
          %s483 = int_to_ptr.vmem [resolvable:$true] %s482
          %488 = dma.hbm_to_vmem [thread:$0]  %s3, 8192, %s483, [#allocation9], 128, 128, 8
        $region24: #{tpu_custom_call.1} parent=11 // pred_fallthru
          _
        // Predicated region
        $region25: #{tpu_custom_call.1} parent=11 // pred_check
          %p489 = pneg %p154
        $region26: #{tpu_custom_call.1} parent=11 // pred_check_branch
          %491 = sbr.rel (%p489) target = $region28
        $region27: #{tpu_custom_call.1} parent=11 // pred_region
          _
        $region28: #{tpu_custom_call.1} parent=11 // pred_fallthru
          _
        // Predicated region
        $region29: #{tpu_custom_call.1} parent=11 // pred_check
          %p492 = pneg %p175
        $region30: #{tpu_custom_call.1} parent=11 // pred_check_branch
          %494 = sbr.rel (%p492) target = $region32
        $region31: #{tpu_custom_call.1} parent=11 // pred_region
          %s496 = ssub.s32 8192, 8192
          %497 = vsyncadd [#allocation12], %s496
          %s498 = sshll.u32 [#allocation11], 4
          %s499 = int_to_ptr.vmem [resolvable:$true] %s498
          %504 = dma.hbm_to_vmem [thread:$0]  %s5, 8192, %s499, [#allocation12], 128, 128, 8
        $region32: #{tpu_custom_call.1} parent=11 // pred_fallthru
          _
        // Predicated region
        $region33: #{tpu_custom_call.1} parent=11 // pred_check
          %p505 = pneg %p196
        $region34: #{tpu_custom_call.1} parent=11 // pred_check_branch
          %507 = sbr.rel (%p505) target = $region36
        $region35: #{tpu_custom_call.1} parent=11 // pred_region
          _
        $region36: #{tpu_custom_call.1} parent=11 // pred_fallthru
          _
        // Predicated region
        $region37: #{tpu_custom_call.1} parent=11 // pred_check
          %p508 = pneg %p217
        $region38: #{tpu_custom_call.1} parent=11 // pred_check_branch
          %510 = sbr.rel (%p508) target = $region40
        $region39: #{tpu_custom_call.1} parent=11 // pred_region
          %s512 = ssub.s32 8192, 8192
          %513 = vsyncadd [#allocation12], %s512
          %s514 = sshll.u32 [#allocation13], 4
          %s515 = int_to_ptr.vmem [resolvable:$true] %s514
          %520 = dma.hbm_to_vmem [thread:$0]  %s7, 8192, %s515, [#allocation12], 128, 128, 8
        $region40: #{tpu_custom_call.1} parent=11 // pred_fallthru
          _
        // Predicated region
        $region41: #{tpu_custom_call.1} parent=11 // pred_check
          %p521 = pneg %p238
        $region42: #{tpu_custom_call.1} parent=11 // pred_check_branch
          %523 = sbr.rel (%p521) target = $region44
        $region43: #{tpu_custom_call.1} parent=11 // pred_region
          _
        $region44: #{tpu_custom_call.1} parent=11 // pred_fallthru
          _
        // Predicated region
        $region45: #{tpu_custom_call.1} parent=11 // pred_check
          %p524 = pneg %p259
        $region46: #{tpu_custom_call.1} parent=11 // pred_check_branch
          %526 = sbr.rel (%p524) target = $region48
        $region47: #{tpu_custom_call.1} parent=11 // pred_region
          %s528 = ssub.s32 8192, 8192
          %529 = vsyncadd [#allocation15], %s528
          %s530 = sshll.u32 [#allocation14], 4
          %s531 = int_to_ptr.vmem [resolvable:$true] %s530
          %536 = dma.hbm_to_vmem [thread:$0]  %s9, 8192, %s531, [#allocation15], 128, 128, 8
        $region48: #{tpu_custom_call.1} parent=11 // pred_fallthru
          _
        // Predicated region
        $region49: #{tpu_custom_call.1} parent=11 // pred_check
          %p537 = pneg %p280
        $region50: #{tpu_custom_call.1} parent=11 // pred_check_branch
          %539 = sbr.rel (%p537) target = $region52
        $region51: #{tpu_custom_call.1} parent=11 // pred_region
          _
        $region52: #{tpu_custom_call.1} parent=11 // pred_fallthru
          _
        // Predicated region
        $region53: #{tpu_custom_call.1} parent=11 // pred_check
          %p540 = pneg %p301
        $region54: #{tpu_custom_call.1} parent=11 // pred_check_branch
          %542 = sbr.rel (%p540) target = $region56
        $region55: #{tpu_custom_call.1} parent=11 // pred_region
          _
        $region56: #{tpu_custom_call.1} parent=11 // pred_fallthru
          _
        // Predicated region
        $region57: #{tpu_custom_call.1} parent=11 // pred_check
          %p543 = pneg %p322
        $region58: #{tpu_custom_call.1} parent=11 // pred_check_branch
          %545 = sbr.rel (%p543) target = $region60
        $region59: #{tpu_custom_call.1} parent=11 // pred_region
          _
        $region60: #{tpu_custom_call.1} parent=11 // pred_fallthru
          _
        // Predicated region
        $region61: #{tpu_custom_call.1} parent=11 // pred_check
          %p546 = pneg %p421
        $region62: #{tpu_custom_call.1} parent=11 // pred_check_branch
          %548 = sbr.rel (%p546) target = $region64
        $region63: #{tpu_custom_call.1} parent=11 // pred_region
          _
        $region64: #{tpu_custom_call.1} parent=11 // pred_fallthru
          _
      $region12: #{tpu_custom_call.1} parent=5 // pred_fallthru
        _
      %p549 = scmp.lt.s32.totalorder %s32, 4
      // Predicated region
      $region65: #{tpu_custom_call.1} parent=5 // pred_check
        %p550 = pneg %p549
      $region66: #{tpu_custom_call.1} parent=5 // pred_check_branch
        %552 = sbr.rel (%p550) target = $region68
      $region67: #{tpu_custom_call.1} parent=5 // pred_region
        // Predicated region
        $region69: #{tpu_custom_call.1} parent=67 // pred_check
          %p553 = pneg %p64
        $region70: #{tpu_custom_call.1} parent=67 // pred_check_branch
          %555 = sbr.rel (%p553) target = $region72
        $region71: #{tpu_custom_call.1} parent=67 // pred_region
          %s556 = sand.u32 %s32, 1
          %s557 = scalar_lea.sflag [#allocation6], %s556
          %s558 = sand.u32 %s54, 1
          %s559 = smul.addr %s558, 16
          %s560 = scalar_lea.vmem [#allocation5], %s559
          %s562 = ssub.s32 256, 256
          %563 = vsyncadd %s557, %s562
          %s564 = smul.addr %s39, 2
          %s565 = smul.addr %s564, 128
          %s566 = scalar_lea.hbm %s0, %s565
          %s567 = sshll.u32 %s560, 4
          %s568 = int_to_ptr.vmem [resolvable:$true] %s567
          %573 = dma.hbm_to_vmem [thread:$0]  %s566, 256, %s568, %s557, 128, 128, 8
        $region72: #{tpu_custom_call.1} parent=67 // pred_fallthru
          _
        // Predicated region
        $region73: #{tpu_custom_call.1} parent=67 // pred_check
          %p574 = pneg %p342
        $region74: #{tpu_custom_call.1} parent=67 // pred_check_branch
          %576 = sbr.rel (%p574) target = $region76
        $region75: #{tpu_custom_call.1} parent=67 // pred_region
          %s577 = sand.u32 %s32, 1
          %s578 = scalar_lea.sflag [#allocation6], %s577
          %s579 = sand.u32 %s332, 1
          %s580 = smul.addr %s579, 128
          %s581 = scalar_lea.vmem [#allocation16], %s580
          %s583 = ssub.s32 2048, 2048
          %584 = vsyncadd %s578, %s583
          %s585 = smul.addr %s40, 128
          %s586 = scalar_lea.hbm %s13, %s585
          %s587 = sshll.u32 %s581, 4
          %s588 = int_to_ptr.vmem [resolvable:$true] %s587
          %593 = dma.hbm_to_vmem [thread:$0]  %s586, 2048, %s588, %s578, 256, 128, 8
        $region76: #{tpu_custom_call.1} parent=67 // pred_fallthru
          _
        // Predicated region
        $region77: #{tpu_custom_call.1} parent=67 // pred_check
          %p594 = pneg %p368
        $region78: #{tpu_custom_call.1} parent=67 // pred_check_branch
          %596 = sbr.rel (%p594) target = $region80
        $region79: #{tpu_custom_call.1} parent=67 // pred_region
          %p597 = scmp.lt.s32.totalorder %s40, 1
          %s598 = scalar_select %p597, %s40, 1
          %s599 = scalar_lea.vmem %s14, %s598
        $region80: #{tpu_custom_call.1} parent=67 // pred_fallthru
          _
        // Predicated region
        $region81: #{tpu_custom_call.1} parent=67 // pred_check
          %p600 = pneg %p394
        $region82: #{tpu_custom_call.1} parent=67 // pred_check_branch
          %602 = sbr.rel (%p600) target = $region84
        $region83: #{tpu_custom_call.1} parent=67 // pred_region
          %s603 = sand.u32 %s32, 1
          %s604 = scalar_lea.sflag [#allocation6], %s603
          %s605 = sand.u32 %s384, 1
          %s606 = smul.addr %s605, 128
          %s607 = scalar_lea.vmem [#allocation17], %s606
          %s608 = smul.u32 16, %s40
          %s610 = ssub.s32 2048, 2048
          %611 = vsyncadd %s604, %s610
          %s612 = smul.addr %s608, 128
          %s613 = scalar_lea.hbm %s15, %s612
          %s614 = sshll.u32 %s607, 4
          %s615 = int_to_ptr.vmem [resolvable:$true] %s614
          %620 = dma.hbm_to_vmem [thread:$0]  %s613, 2048, %s615, %s604, 128, 128, 8
        $region84: #{tpu_custom_call.1} parent=67 // pred_fallthru
          _
      $region68: #{tpu_custom_call.1} parent=5 // pred_fallthru
        _
      %p621 = scmp.le.s32.totalorder 1, %s32
      %p622 = scmp.lt.s32.totalorder %s32, 5
      %p623 = pnand %p621, %p622
      %p624 = pneg %p623
      // Predicated region
      $region85: #{tpu_custom_call.1} parent=5 // pred_check
        _
      $region86: #{tpu_custom_call.1} parent=5 // pred_check_branch
        %626 = sbr.rel (%p623) target = $region88
      $region87: #{tpu_custom_call.1} parent=5 // pred_region
        %s627 = ssub.s32 %s32, 1
        %s628 = sand.u32 %s37, 1
        %s629 = scalar_lea.sflag [#allocation6], %s628
        %s630 = sand.u32 %s57, 1
        %s631 = smul.addr %s630, 16
        %s632 = scalar_lea.vmem [#allocation5], %s631
        // Predicated region
        $region89: #{tpu_custom_call.1} parent=87 // pred_check
          %p633 = pneg %p70
        $region90: #{tpu_custom_call.1} parent=87 // pred_check_branch
          %635 = sbr.rel (%p633) target = $region92
        $region91: #{tpu_custom_call.1} parent=87 // pred_region
          %636 = dma.done %s629, 256
        $region92: #{tpu_custom_call.1} parent=87 // pred_fallthru
          _
        // Predicated region
        $region93: #{tpu_custom_call.1} parent=87 // pred_check
          %p637 = pneg %p112
        $region94: #{tpu_custom_call.1} parent=87 // pred_check_branch
          %639 = sbr.rel (%p637) target = $region96
        $region95: #{tpu_custom_call.1} parent=87 // pred_region
          %640 = dma.done [#allocation9], 16
        $region96: #{tpu_custom_call.1} parent=87 // pred_fallthru
          _
        // Predicated region
        $region97: #{tpu_custom_call.1} parent=87 // pred_check
          %p641 = pneg %p133
        $region98: #{tpu_custom_call.1} parent=87 // pred_check_branch
          %643 = sbr.rel (%p641) target = $region100
        $region99: #{tpu_custom_call.1} parent=87 // pred_region
          %644 = dma.done [#allocation9], 8192
        $region100: #{tpu_custom_call.1} parent=87 // pred_fallthru
          _
        // Predicated region
        $region101: #{tpu_custom_call.1} parent=87 // pred_check
          %p645 = pneg %p175
        $region102: #{tpu_custom_call.1} parent=87 // pred_check_branch
          %647 = sbr.rel (%p645) target = $region104
        $region103: #{tpu_custom_call.1} parent=87 // pred_region
          %648 = dma.done [#allocation12], 8192
        $region104: #{tpu_custom_call.1} parent=87 // pred_fallthru
          _
        // Predicated region
        $region105: #{tpu_custom_call.1} parent=87 // pred_check
          %p649 = pneg %p217
        $region106: #{tpu_custom_call.1} parent=87 // pred_check_branch
          %651 = sbr.rel (%p649) target = $region108
        $region107: #{tpu_custom_call.1} parent=87 // pred_region
          %652 = dma.done [#allocation12], 8192
        $region108: #{tpu_custom_call.1} parent=87 // pred_fallthru
          _
        // Predicated region
        $region109: #{tpu_custom_call.1} parent=87 // pred_check
          %p653 = pneg %p259
        $region110: #{tpu_custom_call.1} parent=87 // pred_check_branch
          %655 = sbr.rel (%p653) target = $region112
        $region111: #{tpu_custom_call.1} parent=87 // pred_region
          %656 = dma.done [#allocation15], 8192
        $region112: #{tpu_custom_call.1} parent=87 // pred_fallthru
          _
        %s657 = sand.u32 %s37, 1
        %s658 = scalar_lea.sflag [#allocation6], %s657
        %s659 = sand.u32 %s335, 1
        %s660 = smul.addr %s659, 128
        %s661 = scalar_lea.vmem [#allocation16], %s660
        // Predicated region
        $region113: #{tpu_custom_call.1} parent=87 // pred_check
          %p662 = pneg %p348
        $region114: #{tpu_custom_call.1} parent=87 // pred_check_branch
          %664 = sbr.rel (%p662) target = $region116
        $region115: #{tpu_custom_call.1} parent=87 // pred_region
          %665 = dma.done %s658, 2048
        $region116: #{tpu_custom_call.1} parent=87 // pred_fallthru
          _
        %s666 = sand.u32 %s37, 1
        %s667 = scalar_lea.sflag [#allocation6], %s666
        %s668 = sand.u32 %s387, 1
        %s669 = smul.addr %s668, 128
        %s670 = scalar_lea.vmem [#allocation17], %s669
        // Predicated region
        $region117: #{tpu_custom_call.1} parent=87 // pred_check
          %p671 = pneg %p400
        $region118: #{tpu_custom_call.1} parent=87 // pred_check_branch
          %673 = sbr.rel (%p671) target = $region120
        $region119: #{tpu_custom_call.1} parent=87 // pred_region
          %674 = dma.done %s667, 2048
        $region120: #{tpu_custom_call.1} parent=87 // pred_fallthru
          _
        %s675 = sand.u32 %s37, 1
        %s676 = scalar_lea.sflag [#allocation6], %s675
        %s677 = sand.u32 %s57, 1
        %s678 = smul.addr %s677, 16
        %s679 = scalar_lea.vmem [#allocation5], %s678
        %p680 = pneg %p70
        %p681 = pneg %p67
        %p682 = pneg %p91
        %p683 = pneg %p88
        %p684 = pneg %p112
        %p685 = pneg %p109
        %p686 = pneg %p133
        %p687 = pneg %p130
        %p688 = pneg %p154
        %p689 = pneg %p151
        %p690 = pneg %p175
        %p691 = pneg %p172
        %p692 = pneg %p196
        %p693 = pneg %p193
        %p694 = pneg %p217
        %p695 = pneg %p214
        %p696 = pneg %p238
        %p697 = pneg %p235
        %p698 = pneg %p259
        %p699 = pneg %p256
        %p700 = pneg %p280
        %p701 = pneg %p277
        %p702 = pneg %p301
        %p703 = pneg %p298
        %p704 = pneg %p322
        %p705 = pneg %p319
        %s706 = sand.u32 %s37, 1
        %s707 = scalar_lea.sflag [#allocation6], %s706
        %s708 = sand.u32 %s335, 1
        %s709 = smul.addr %s708, 128
        %s710 = scalar_lea.vmem [#allocation16], %s709
        %p711 = pneg %p348
        %p712 = pneg %p345
        %p713 = scmp.lt.s32.totalorder %s42, 1
        %s714 = scalar_select %p713, %s42, 1
        %s715 = scalar_lea.vmem %s14, %s714
        %p716 = pneg %p374
        %p717 = pneg %p371
        %s718 = sand.u32 %s37, 1
        %s719 = scalar_lea.sflag [#allocation6], %s718
        %s720 = sand.u32 %s387, 1
        %s721 = smul.addr %s720, 128
        %s722 = scalar_lea.vmem [#allocation17], %s721
        %p723 = pneg %p400
        %p724 = pneg %p397
        %p725 = pneg %p421
        %p726 = pneg %p418
        %p727 = pneg %p447
        %p728 = pneg %p444
        %s729 = sand.u32 %s434, 1
        %s730 = scalar_lea.sflag [#allocation7], %s729
        %s731 = sand.u32 %s434, 1
        %s732 = smul.addr %s731, 16
        %s733 = scalar_lea.vmem [#allocation18], %s732
        %p734 = scmp.lt.s32.totalorder %s42, 1
        %s735 = scalar_select %p734, %s42, 1
        %s736 = scalar_lea.vmem %s14, %s735
        %s737 = smul.u32 16, %s42
        %p738 = scmp.eq.s32.totalorder %s42, 0
        // Predicated region
        $region121: #{tpu_custom_call.1} parent=87 // pred_check
          %p739 = pneg %p738
        $region122: #{tpu_custom_call.1} parent=87 // pred_check_branch
          %741 = sbr.rel (%p739) target = $region124
        $region123: #{tpu_custom_call.1} parent=87 // pred_region
          %v742 = vld [vmem:[%s632] sm:$0xff]
          %v743 = vld [vmem:[%s632 + $0x8] sm:$0xff]
          %v744 = vld [vmem:[%s1] sm:$0x1]
          %v745 = vld [vmem:[#allocation8] sm:$0x1]
          %746 = vadd.xlane.f32.xlu0 %v742
          %v747 = vpop.xlane.xlu0 %746
          %748 = vadd.xlane.f32.xlu0 %v743
          %v749 = vpop.xlane.xlu0 %748
          %v750 = vrcp.pop 128.0
          %v751 = vmul.f32 %v747, %v750
          %v752 = vmul.f32 %v749, %v750
          %v753 = vsub.f32 %v742, %v751
          %v754 = vsub.f32 %v743, %v752
          %v755 = vmul.f32 %v753, %v753
          %v756 = vmul.f32 %v754, %v754
          %757 = vadd.xlane.f32.xlu0 %v755
          %v758 = vpop.xlane.xlu0 %757
          %759 = vadd.xlane.f32.xlu0 %v756
          %v760 = vpop.xlane.xlu0 %759
          %v761 = vmul.f32 %v758, %v750
          %v762 = vmul.f32 %v760, %v750
          %v763 = vadd.f32 %v761, 1e-06
          %v764 = vadd.f32 %v762, 1e-06
          %v765 = vrsqrt.pop %v763
          %v766 = vrsqrt.pop %v764
          %v767 = vmul.f32 %v753, %v765
          %v768 = vmul.f32 %v754, %v766
          %v770 = vlaneseq
          %v771 = vshrl.u32 %v770, 7
          %v772 = vsub.s32 0, %v771
          %v773 = vrot.slane %v744, %v772
          %v775 = vmul.f32 %v767, %v773
          %v776 = vmul.f32 %v768, %v773
          %v778 = vlaneseq
          %v779 = vshrl.u32 %v778, 7
          %v780 = vsub.s32 0, %v779
          %v781 = vrot.slane %v745, %v780
          %v783 = vadd.f32 %v775, %v781
          %v784 = vadd.f32 %v776, %v781
          loop: start=0, step=1, limit=4
          $region125: #{tpu_custom_call.1} parent=123 // loop_pre_header
            _
          $region126: #{tpu_custom_call.1} parent=123 // loop_header
            %s786 = sphi 0, %s790
            %p787 = scmp.ge.s32.totalorder %s786, 4
            %v791 = vphi 0.0, %v1365
            %v792 = vphi 0.0, %v1366
          $region127: #{tpu_custom_call.1} parent=123 // loop_header_branch
            %789 = sbr.rel (%p787) target = $region131
          $region128: #{tpu_custom_call.1} parent=123 // loop_body
            %s793 = smul.u32 %s786, 128
            %s794 = scalar_lea.vmem [#allocation10], %s793
            %v795 = vld [vmem:[%s794] sm:$0xff]
            %v796 = vld [vmem:[%s794 + $0x8] sm:$0xff]
            %v797 = vld [vmem:[%s794 + $0x10] sm:$0xff]
            %v798 = vld [vmem:[%s794 + $0x18] sm:$0xff]
            %v799 = vld [vmem:[%s794 + $0x20] sm:$0xff]
            %v800 = vld [vmem:[%s794 + $0x28] sm:$0xff]
            %v801 = vld [vmem:[%s794 + $0x30] sm:$0xff]
            %v802 = vld [vmem:[%s794 + $0x38] sm:$0xff]
            %v803 = vld [vmem:[%s794 + $0x40] sm:$0xff]
            %v804 = vld [vmem:[%s794 + $0x48] sm:$0xff]
            %v805 = vld [vmem:[%s794 + $0x50] sm:$0xff]
            %v806 = vld [vmem:[%s794 + $0x58] sm:$0xff]
            %v807 = vld [vmem:[%s794 + $0x60] sm:$0xff]
            %v808 = vld [vmem:[%s794 + $0x68] sm:$0xff]
            %v809 = vld [vmem:[%s794 + $0x70] sm:$0xff]
            %v810 = vld [vmem:[%s794 + $0x78] sm:$0xff]
            %s811 = scalar_lea.vmem %s4, %s786
            %v812 = vld [vmem:[%s811] sm:$0x1]
            %v814 = vlaneseq
            %v815 = vshrl.u32 %v814, 7
            %v816 = vsub.s32 0, %v815
            %v817 = vrot.slane %v812, %v816
            %819 = vmatprep.subr.mxu0 0.0
            %820 = vmatpush1.msra.mxu0 %v795
            %821 = vmatprep.subr.mxu0 0.0
            %822 = vmatpush1.msra.mxu0 %v796
            %823 = vmatprep.subr.mxu0 0.0
            %824 = vmatpush1.msra.mxu0 %v797
            %825 = vmatprep.subr.mxu0 0.0
            %826 = vmatpush1.msra.mxu0 %v798
            %827 = vmatprep.subr.mxu0 0.0
            %828 = vmatpush1.msra.mxu0 %v799
            %829 = vmatprep.subr.mxu0 0.0
            %830 = vmatpush1.msra.mxu0 %v800
            %831 = vmatprep.subr.mxu0 0.0
            %832 = vmatpush1.msra.mxu0 %v801
            %833 = vmatprep.subr.mxu0 0.0
            %834 = vmatpush1.msra.mxu0 %v802
            %835 = vmatprep.subr.mxu0 0.0
            %836 = vmatpush1.msra.mxu0 %v803
            %837 = vmatprep.subr.mxu0 0.0
            %838 = vmatpush1.msra.mxu0 %v804
            %839 = vmatprep.subr.mxu0 0.0
            %840 = vmatpush1.msra.mxu0 %v805
            %841 = vmatprep.subr.mxu0 0.0
            %842 = vmatpush1.msra.mxu0 %v806
            %843 = vmatprep.subr.mxu0 0.0
            %844 = vmatpush1.msra.mxu0 %v807
            %845 = vmatprep.subr.mxu0 0.0
            %846 = vmatpush1.msra.mxu0 %v808
            %847 = vmatprep.subr.mxu0 0.0
            %848 = vmatpush1.msra.mxu0 %v809
            %849 = vmatprep.subr.mxu0 0.0
            %850 = vmatpush1.msra.mxu0 %v810
            %851 = vmatprep.subr.mxu0 0.0
            %852 = vmatpush1.msra.mxu0 0.0
            %853 = vmatprep.subr.mxu0 0.0
            %854 = vmatpush1.msra.mxu0 0.0
            %855 = vmatprep.subr.mxu0 0.0
            %856 = vmatpush1.msra.mxu0 0.0
            %857 = vmatprep.subr.mxu0 0.0
            %858 = vmatpush1.msra.mxu0 0.0
            %859 = vmatprep.subr.mxu0 0.0
            %860 = vmatpush1.msra.mxu0 0.0
            %861 = vmatprep.subr.mxu0 0.0
            %862 = vmatpush1.msra.mxu0 0.0
            %863 = vmatprep.subr.mxu0 0.0
            %864 = vmatpush1.msra.mxu0 0.0
            %865 = vmatprep.subr.mxu0 0.0
            %866 = vmatpush1.msra.mxu0 0.0
            %867 = vmatprep.subr.mxu0 0.0
            %868 = vmatpush1.msra.mxu0 0.0
            %869 = vmatprep.subr.mxu0 0.0
            %870 = vmatpush1.msra.mxu0 0.0
            %871 = vmatprep.subr.mxu0 0.0
            %872 = vmatpush1.msra.mxu0 0.0
            %873 = vmatprep.subr.mxu0 0.0
            %874 = vmatpush1.msra.mxu0 0.0
            %875 = vmatprep.subr.mxu0 0.0
            %876 = vmatpush1.msra.mxu0 0.0
            %877 = vmatprep.subr.mxu0 0.0
            %878 = vmatpush1.msra.mxu0 0.0
            %879 = vmatprep.subr.mxu0 0.0
            %880 = vmatpush1.msra.mxu0 0.0
            %881 = vmatprep.subr.mxu0 0.0
            %882 = vmatpush1.msra.mxu0 0.0
            %883 = vmatprep.mubr.f32.mxu0 0.0
            %884 = vmatmul.mubr.f32.gmra.mrb[0].mxu0 %v783
            %v885 = vpop.f32.mrb[0].mxu0
            %v886 = vadd.f32 %v817, %v885
            %v887 = vpop.f32.mrb[0].mxu0
            %888 = vmatprep.mubr.f32.mxu0 0.0
            %889 = vmatmul.mubr.f32.gmra.mrb[0].mxu0 %v784
            %v890 = vpop.f32.mrb[0].mxu0
            %v891 = vadd.f32 %v817, %v890
            %v892 = vpop.f32.mrb[0].mxu0
            %893 = vdwg.mxu0
            %s894 = scalar_lea.vmem [#allocation11], %s793
            %v895 = vld [vmem:[%s894] sm:$0xff]
            %v896 = vld [vmem:[%s894 + $0x8] sm:$0xff]
            %v897 = vld [vmem:[%s894 + $0x10] sm:$0xff]
            %v898 = vld [vmem:[%s894 + $0x18] sm:$0xff]
            %v899 = vld [vmem:[%s894 + $0x20] sm:$0xff]
            %v900 = vld [vmem:[%s894 + $0x28] sm:$0xff]
            %v901 = vld [vmem:[%s894 + $0x30] sm:$0xff]
            %v902 = vld [vmem:[%s894 + $0x38] sm:$0xff]
            %v903 = vld [vmem:[%s894 + $0x40] sm:$0xff]
            %v904 = vld [vmem:[%s894 + $0x48] sm:$0xff]
            %v905 = vld [vmem:[%s894 + $0x50] sm:$0xff]
            %v906 = vld [vmem:[%s894 + $0x58] sm:$0xff]
            %v907 = vld [vmem:[%s894 + $0x60] sm:$0xff]
            %v908 = vld [vmem:[%s894 + $0x68] sm:$0xff]
            %v909 = vld [vmem:[%s894 + $0x70] sm:$0xff]
            %v910 = vld [vmem:[%s894 + $0x78] sm:$0xff]
            %s911 = scalar_lea.vmem %s6, %s786
            %v912 = vld [vmem:[%s911] sm:$0x1]
            %v914 = vlaneseq
            %v915 = vshrl.u32 %v914, 7
            %v916 = vsub.s32 0, %v915
            %v917 = vrot.slane %v912, %v916
            %919 = vmatprep.subr.mxu0 0.0
            %920 = vmatpush1.msra.mxu0 %v895
            %921 = vmatprep.subr.mxu0 0.0
            %922 = vmatpush1.msra.mxu0 %v896
            %923 = vmatprep.subr.mxu0 0.0
            %924 = vmatpush1.msra.mxu0 %v897
            %925 = vmatprep.subr.mxu0 0.0
            %926 = vmatpush1.msra.mxu0 %v898
            %927 = vmatprep.subr.mxu0 0.0
            %928 = vmatpush1.msra.mxu0 %v899
            %929 = vmatprep.subr.mxu0 0.0
            %930 = vmatpush1.msra.mxu0 %v900
            %931 = vmatprep.subr.mxu0 0.0
            %932 = vmatpush1.msra.mxu0 %v901
            %933 = vmatprep.subr.mxu0 0.0
            %934 = vmatpush1.msra.mxu0 %v902
            %935 = vmatprep.subr.mxu0 0.0
            %936 = vmatpush1.msra.mxu0 %v903
            %937 = vmatprep.subr.mxu0 0.0
            %938 = vmatpush1.msra.mxu0 %v904
            %939 = vmatprep.subr.mxu0 0.0
            %940 = vmatpush1.msra.mxu0 %v905
            %941 = vmatprep.subr.mxu0 0.0
            %942 = vmatpush1.msra.mxu0 %v906
            %943 = vmatprep.subr.mxu0 0.0
            %944 = vmatpush1.msra.mxu0 %v907
            %945 = vmatprep.subr.mxu0 0.0
            %946 = vmatpush1.msra.mxu0 %v908
            %947 = vmatprep.subr.mxu0 0.0
            %948 = vmatpush1.msra.mxu0 %v909
            %949 = vmatprep.subr.mxu0 0.0
            %950 = vmatpush1.msra.mxu0 %v910
            %951 = vmatprep.subr.mxu0 0.0
            %952 = vmatpush1.msra.mxu0 0.0
            %953 = vmatprep.subr.mxu0 0.0
            %954 = vmatpush1.msra.mxu0 0.0
            %955 = vmatprep.subr.mxu0 0.0
            %956 = vmatpush1.msra.mxu0 0.0
            %957 = vmatprep.subr.mxu0 0.0
            %958 = vmatpush1.msra.mxu0 0.0
            %959 = vmatprep.subr.mxu0 0.0
            %960 = vmatpush1.msra.mxu0 0.0
            %961 = vmatprep.subr.mxu0 0.0
            %962 = vmatpush1.msra.mxu0 0.0
            %963 = vmatprep.subr.mxu0 0.0
            %964 = vmatpush1.msra.mxu0 0.0
            %965 = vmatprep.subr.mxu0 0.0
            %966 = vmatpush1.msra.mxu0 0.0
            %967 = vmatprep.subr.mxu0 0.0
            %968 = vmatpush1.msra.mxu0 0.0
            %969 = vmatprep.subr.mxu0 0.0
            %970 = vmatpush1.msra.mxu0 0.0
            %971 = vmatprep.subr.mxu0 0.0
            %972 = vmatpush1.msra.mxu0 0.0
            %973 = vmatprep.subr.mxu0 0.0
            %974 = vmatpush1.msra.mxu0 0.0
            %975 = vmatprep.subr.mxu0 0.0
            %976 = vmatpush1.msra.mxu0 0.0
            %977 = vmatprep.subr.mxu0 0.0
            %978 = vmatpush1.msra.mxu0 0.0
            %979 = vmatprep.subr.mxu0 0.0
            %980 = vmatpush1.msra.mxu0 0.0
            %981 = vmatprep.subr.mxu0 0.0
            %982 = vmatpush1.msra.mxu0 0.0
            %983 = vmatprep.mubr.f32.mxu0 0.0
            %984 = vmatmul.mubr.f32.gmra.mrb[0].mxu0 %v783
            %v985 = vpop.f32.mrb[0].mxu0
            %v986 = vadd.f32 %v917, %v985
            %v987 = vpop.f32.mrb[0].mxu0
            %988 = vmatprep.mubr.f32.mxu0 0.0
            %989 = vmatmul.mubr.f32.gmra.mrb[0].mxu0 %v784
            %v990 = vpop.f32.mrb[0].mxu0
            %v991 = vadd.f32 %v917, %v990
            %v992 = vpop.f32.mrb[0].mxu0
            %993 = vdwg.mxu0
            %s994 = scalar_lea.vmem [#allocation13], %s793
            %v995 = vld [vmem:[%s994] sm:$0xff]
            %v996 = vld [vmem:[%s994 + $0x8] sm:$0xff]
            %v997 = vld [vmem:[%s994 + $0x10] sm:$0xff]
            %v998 = vld [vmem:[%s994 + $0x18] sm:$0xff]
            %v999 = vld [vmem:[%s994 + $0x20] sm:$0xff]
            %v1000 = vld [vmem:[%s994 + $0x28] sm:$0xff]
            %v1001 = vld [vmem:[%s994 + $0x30] sm:$0xff]
            %v1002 = vld [vmem:[%s994 + $0x38] sm:$0xff]
            %v1003 = vld [vmem:[%s994 + $0x40] sm:$0xff]
            %v1004 = vld [vmem:[%s994 + $0x48] sm:$0xff]
            %v1005 = vld [vmem:[%s994 + $0x50] sm:$0xff]
            %v1006 = vld [vmem:[%s994 + $0x58] sm:$0xff]
            %v1007 = vld [vmem:[%s994 + $0x60] sm:$0xff]
            %v1008 = vld [vmem:[%s994 + $0x68] sm:$0xff]
            %v1009 = vld [vmem:[%s994 + $0x70] sm:$0xff]
            %v1010 = vld [vmem:[%s994 + $0x78] sm:$0xff]
            %s1011 = scalar_lea.vmem %s8, %s786
            %v1012 = vld [vmem:[%s1011] sm:$0x1]
            %v1014 = vlaneseq
            %v1015 = vshrl.u32 %v1014, 7
            %v1016 = vsub.s32 0, %v1015
            %v1017 = vrot.slane %v1012, %v1016
            %1019 = vmatprep.subr.mxu0 0.0
            %1020 = vmatpush1.msra.mxu0 %v995
            %1021 = vmatprep.subr.mxu0 0.0
            %1022 = vmatpush1.msra.mxu0 %v996
            %1023 = vmatprep.subr.mxu0 0.0
            %1024 = vmatpush1.msra.mxu0 %v997
            %1025 = vmatprep.subr.mxu0 0.0
            %1026 = vmatpush1.msra.mxu0 %v998
            %1027 = vmatprep.subr.mxu0 0.0
            %1028 = vmatpush1.msra.mxu0 %v999
            %1029 = vmatprep.subr.mxu0 0.0
            %1030 = vmatpush1.msra.mxu0 %v1000
            %1031 = vmatprep.subr.mxu0 0.0
            %1032 = vmatpush1.msra.mxu0 %v1001
            %1033 = vmatprep.subr.mxu0 0.0
            %1034 = vmatpush1.msra.mxu0 %v1002
            %1035 = vmatprep.subr.mxu0 0.0
            %1036 = vmatpush1.msra.mxu0 %v1003
            %1037 = vmatprep.subr.mxu0 0.0
            %1038 = vmatpush1.msra.mxu0 %v1004
            %1039 = vmatprep.subr.mxu0 0.0
            %1040 = vmatpush1.msra.mxu0 %v1005
            %1041 = vmatprep.subr.mxu0 0.0
            %1042 = vmatpush1.msra.mxu0 %v1006
            %1043 = vmatprep.subr.mxu0 0.0
            %1044 = vmatpush1.msra.mxu0 %v1007
            %1045 = vmatprep.subr.mxu0 0.0
            %1046 = vmatpush1.msra.mxu0 %v1008
            %1047 = vmatprep.subr.mxu0 0.0
            %1048 = vmatpush1.msra.mxu0 %v1009
            %1049 = vmatprep.subr.mxu0 0.0
            %1050 = vmatpush1.msra.mxu0 %v1010
            %1051 = vmatprep.subr.mxu0 0.0
            %1052 = vmatpush1.msra.mxu0 0.0
            %1053 = vmatprep.subr.mxu0 0.0
            %1054 = vmatpush1.msra.mxu0 0.0
            %1055 = vmatprep.subr.mxu0 0.0
            %1056 = vmatpush1.msra.mxu0 0.0
            %1057 = vmatprep.subr.mxu0 0.0
            %1058 = vmatpush1.msra.mxu0 0.0
            %1059 = vmatprep.subr.mxu0 0.0
            %1060 = vmatpush1.msra.mxu0 0.0
            %1061 = vmatprep.subr.mxu0 0.0
            %1062 = vmatpush1.msra.mxu0 0.0
            %1063 = vmatprep.subr.mxu0 0.0
            %1064 = vmatpush1.msra.mxu0 0.0
            %1065 = vmatprep.subr.mxu0 0.0
            %1066 = vmatpush1.msra.mxu0 0.0
            %1067 = vmatprep.subr.mxu0 0.0
            %1068 = vmatpush1.msra.mxu0 0.0
            %1069 = vmatprep.subr.mxu0 0.0
            %1070 = vmatpush1.msra.mxu0 0.0
            %1071 = vmatprep.subr.mxu0 0.0
            %1072 = vmatpush1.msra.mxu0 0.0
            %1073 = vmatprep.subr.mxu0 0.0
            %1074 = vmatpush1.msra.mxu0 0.0
            %1075 = vmatprep.subr.mxu0 0.0
            %1076 = vmatpush1.msra.mxu0 0.0
            %1077 = vmatprep.subr.mxu0 0.0
            %1078 = vmatpush1.msra.mxu0 0.0
            %1079 = vmatprep.subr.mxu0 0.0
            %1080 = vmatpush1.msra.mxu0 0.0
            %1081 = vmatprep.subr.mxu0 0.0
            %1082 = vmatpush1.msra.mxu0 0.0
            %1083 = vmatprep.mubr.f32.mxu0 0.0
            %1084 = vmatmul.mubr.f32.gmra.mrb[0].mxu0 %v783
            %v1085 = vpop.f32.mrb[0].mxu0
            %v1086 = vadd.f32 %v1017, %v1085
            %v1087 = vpop.f32.mrb[0].mxu0
            %1088 = vmatprep.mubr.f32.mxu0 0.0
            %1089 = vmatmul.mubr.f32.gmra.mrb[0].mxu0 %v784
            %v1090 = vpop.f32.mrb[0].mxu0
            %v1091 = vadd.f32 %v1017, %v1090
            %v1092 = vpop.f32.mrb[0].mxu0
            %1093 = vdwg.mxu0
            %1094 = vmatprep.subr.mxu0 0.0
            %1095 = vmatpush1.xpose.msra.mxu0 %v986
            %1096 = vmatprep.subr.mxu0 0.0
            %1097 = vmatpush1.xpose.msra.mxu0 %v991
            %1098 = vmatprep.subr.mxu0 0.0
            %1099 = vmatpush1.xpose.msra.mxu0 0.0
            %1100 = vmatprep.subr.mxu0 0.0
            %1101 = vmatpush1.xpose.msra.mxu0 0.0
            %1102 = vmatprep.subr.mxu0 0.0
            %1103 = vmatpush1.xpose.msra.mxu0 0.0
            %1104 = vmatprep.subr.mxu0 0.0
            %1105 = vmatpush1.xpose.msra.mxu0 0.0
            %1106 = vmatprep.subr.mxu0 0.0
            %1107 = vmatpush1.xpose.msra.mxu0 0.0
            %1108 = vmatprep.subr.mxu0 0.0
            %1109 = vmatpush1.xpose.msra.mxu0 0.0
            %1110 = vmatprep.subr.mxu0 0.0
            %1111 = vmatpush1.xpose.msra.mxu0 0.0
            %1112 = vmatprep.subr.mxu0 0.0
            %1113 = vmatpush1.xpose.msra.mxu0 0.0
            %1114 = vmatprep.subr.mxu0 0.0
            %1115 = vmatpush1.xpose.msra.mxu0 0.0
            %1116 = vmatprep.subr.mxu0 0.0
            %1117 = vmatpush1.xpose.msra.mxu0 0.0
            %1118 = vmatprep.subr.mxu0 0.0
            %1119 = vmatpush1.xpose.msra.mxu0 0.0
            %1120 = vmatprep.subr.mxu0 0.0
            %1121 = vmatpush1.xpose.msra.mxu0 0.0
            %1122 = vmatprep.subr.mxu0 0.0
            %1123 = vmatpush1.xpose.msra.mxu0 0.0
            %1124 = vmatprep.subr.mxu0 0.0
            %1125 = vmatpush1.xpose.msra.mxu0 0.0
            %1126 = vmatprep.subr.mxu0 0.0
            %1127 = vmatpush1.xpose.msra.mxu0 0.0
            %1128 = vmatprep.subr.mxu0 0.0
            %1129 = vmatpush1.xpose.msra.mxu0 0.0
            %1130 = vmatprep.subr.mxu0 0.0
            %1131 = vmatpush1.xpose.msra.mxu0 0.0
            %1132 = vmatprep.subr.mxu0 0.0
            %1133 = vmatpush1.xpose.msra.mxu0 0.0
            %1134 = vmatprep.subr.mxu0 0.0
            %1135 = vmatpush1.xpose.msra.mxu0 0.0
            %1136 = vmatprep.subr.mxu0 0.0
            %1137 = vmatpush1.xpose.msra.mxu0 0.0
            %1138 = vmatprep.subr.mxu0 0.0
            %1139 = vmatpush1.xpose.msra.mxu0 0.0
            %1140 = vmatprep.subr.mxu0 0.0
            %1141 = vmatpush1.xpose.msra.mxu0 0.0
            %1142 = vmatprep.subr.mxu0 0.0
            %1143 = vmatpush1.xpose.msra.mxu0 0.0
            %1144 = vmatprep.subr.mxu0 0.0
            %1145 = vmatpush1.xpose.msra.mxu0 0.0
            %1146 = vmatprep.subr.mxu0 0.0
            %1147 = vmatpush1.xpose.msra.mxu0 0.0
            %1148 = vmatprep.subr.mxu0 0.0
            %1149 = vmatpush1.xpose.msra.mxu0 0.0
            %1150 = vmatprep.subr.mxu0 0.0
            %1151 = vmatpush1.xpose.msra.mxu0 0.0
            %1152 = vmatprep.subr.mxu0 0.0
            %1153 = vmatpush1.xpose.msra.mxu0 0.0
            %1154 = vmatprep.subr.mxu0 0.0
            %1155 = vmatpush1.xpose.msra.mxu0 0.0
            %1156 = vmatprep.subr.mxu0 0.0
            %1157 = vmatpush1.xpose.msra.mxu0 0.0
            %1158 = vmatprep.mubr.f32.mxu0 0.0
            %1159 = vmatmul.mubr.f32.gmra.mrb[0].mxu0 %v886
            %v1160 = vpop.f32.mrb[0].mxu0
            %v1161 = vadd.f32 0.0, %v1160
            %v1162 = vpop.f32.mrb[0].mxu0
            %1163 = vmatprep.mubr.f32.mxu0 0.0
            %1164 = vmatmul.mubr.f32.gmra.mrb[0].mxu0 %v891
            %v1165 = vpop.f32.mrb[0].mxu0
            %v1166 = vadd.f32 0.0, %v1165
            %v1167 = vpop.f32.mrb[0].mxu0
            %1168 = vdwg.mxu0
            %vm1169 = vcmask 130048
            %v1170 = vsel %vm1169, %v1161, -inf
            %1171 = vmax.xlane.f32.xlu0 %v1170
            %v1172 = vpop.xlane.xlu0 %1171
            %v1173 = vsel %vm1169, %v1166, -inf
            %1174 = vmax.xlane.f32.xlu0 %v1173
            %v1175 = vpop.xlane.xlu0 %1174
            %v1176 = vsub.f32 %v1161, %v1172
            %v1177 = vsub.f32 %v1166, %v1175
            %v1178 = vmul.f32 %v1176, 1.442695
            %v1179 = vpow.pop %v1178
            %v1180 = vmul.f32 %v1177, 1.442695
            %v1181 = vpow.pop %v1180
            %v1182 = vsel %vm1169, %v1179, 0.0
            %1183 = vadd.xlane.f32.xlu0 %v1182
            %v1184 = vpop.xlane.xlu0 %1183
            %v1185 = vsel %vm1169, %v1181, 0.0
            %1186 = vadd.xlane.f32.xlu0 %v1185
            %v1187 = vpop.xlane.xlu0 %1186
            %v1188 = vrcp.pop %v1184
            %v1189 = vmul.f32 %v1179, %v1188
            %v1190 = vrcp.pop %v1187
            %v1191 = vmul.f32 %v1181, %v1190
            %v1193 = vsel %vm1169, %v1189, 0
            %v1196 = vsel %vm1169, %v1191, 0
            %1198 = vmatprep.subr.mxu0 0.0
            %1199 = vmatpush1.msra.mxu0 %v1086
            %1200 = vmatprep.subr.mxu0 0.0
            %1201 = vmatpush1.msra.mxu0 %v1091
            %1202 = vmatprep.subr.mxu0 0.0
            %1203 = vmatpush1.msra.mxu0 0.0
            %1204 = vmatprep.subr.mxu0 0.0
            %1205 = vmatpush1.msra.mxu0 0.0
            %1206 = vmatprep.subr.mxu0 0.0
            %1207 = vmatpush1.msra.mxu0 0.0
            %1208 = vmatprep.subr.mxu0 0.0
            %1209 = vmatpush1.msra.mxu0 0.0
            %1210 = vmatprep.subr.mxu0 0.0
            %1211 = vmatpush1.msra.mxu0 0.0
            %1212 = vmatprep.subr.mxu0 0.0
            %1213 = vmatpush1.msra.mxu0 0.0
            %1214 = vmatprep.subr.mxu0 0.0
            %1215 = vmatpush1.msra.mxu0 0.0
            %1216 = vmatprep.subr.mxu0 0.0
            %1217 = vmatpush1.msra.mxu0 0.0
            %1218 = vmatprep.subr.mxu0 0.0
            %1219 = vmatpush1.msra.mxu0 0.0
            %1220 = vmatprep.subr.mxu0 0.0
            %1221 = vmatpush1.msra.mxu0 0.0
            %1222 = vmatprep.subr.mxu0 0.0
            %1223 = vmatpush1.msra.mxu0 0.0
            %1224 = vmatprep.subr.mxu0 0.0
            %1225 = vmatpush1.msra.mxu0 0.0
            %1226 = vmatprep.subr.mxu0 0.0
            %1227 = vmatpush1.msra.mxu0 0.0
            %1228 = vmatprep.subr.mxu0 0.0
            %1229 = vmatpush1.msra.mxu0 0.0
            %1230 = vmatprep.subr.mxu0 0.0
            %1231 = vmatpush1.msra.mxu0 0.0
            %1232 = vmatprep.subr.mxu0 0.0
            %1233 = vmatpush1.msra.mxu0 0.0
            %1234 = vmatprep.subr.mxu0 0.0
            %1235 = vmatpush1.msra.mxu0 0.0
            %1236 = vmatprep.subr.mxu0 0.0
            %1237 = vmatpush1.msra.mxu0 0.0
            %1238 = vmatprep.subr.mxu0 0.0
            %1239 = vmatpush1.msra.mxu0 0.0
            %1240 = vmatprep.subr.mxu0 0.0
            %1241 = vmatpush1.msra.mxu0 0.0
            %1242 = vmatprep.subr.mxu0 0.0
            %1243 = vmatpush1.msra.mxu0 0.0
            %1244 = vmatprep.subr.mxu0 0.0
            %1245 = vmatpush1.msra.mxu0 0.0
            %1246 = vmatprep.subr.mxu0 0.0
            %1247 = vmatpush1.msra.mxu0 0.0
            %1248 = vmatprep.subr.mxu0 0.0
            %1249 = vmatpush1.msra.mxu0 0.0
            %1250 = vmatprep.subr.mxu0 0.0
            %1251 = vmatpush1.msra.mxu0 0.0
            %1252 = vmatprep.subr.mxu0 0.0
            %1253 = vmatpush1.msra.mxu0 0.0
            %1254 = vmatprep.subr.mxu0 0.0
            %1255 = vmatpush1.msra.mxu0 0.0
            %1256 = vmatprep.subr.mxu0 0.0
            %1257 = vmatpush1.msra.mxu0 0.0
            %1258 = vmatprep.subr.mxu0 0.0
            %1259 = vmatpush1.msra.mxu0 0.0
            %1260 = vmatprep.subr.mxu0 0.0
            %1261 = vmatpush1.msra.mxu0 0.0
            %1262 = vmatprep.mubr.f32.mxu0 0.0
            %1263 = vmatmul.mubr.f32.gmra.mrb[0].mxu0 %v1193
            %v1264 = vpop.f32.mrb[0].mxu0
            %v1265 = vadd.f32 0.0, %v1264
            %v1266 = vpop.f32.mrb[0].mxu0
            %1267 = vmatprep.mubr.f32.mxu0 0.0
            %1268 = vmatmul.mubr.f32.gmra.mrb[0].mxu0 %v1196
            %v1269 = vpop.f32.mrb[0].mxu0
            %v1270 = vadd.f32 0.0, %v1269
            %v1271 = vpop.f32.mrb[0].mxu0
            %1272 = vdwg.mxu0
            %s1273 = scalar_lea.vmem [#allocation14], %s793
            %v1274 = vld [vmem:[%s1273] sm:$0xff]
            %v1275 = vld [vmem:[%s1273 + $0x8] sm:$0xff]
            %v1276 = vld [vmem:[%s1273 + $0x10] sm:$0xff]
            %v1277 = vld [vmem:[%s1273 + $0x18] sm:$0xff]
            %v1278 = vld [vmem:[%s1273 + $0x20] sm:$0xff]
            %v1279 = vld [vmem:[%s1273 + $0x28] sm:$0xff]
            %v1280 = vld [vmem:[%s1273 + $0x30] sm:$0xff]
            %v1281 = vld [vmem:[%s1273 + $0x38] sm:$0xff]
            %v1282 = vld [vmem:[%s1273 + $0x40] sm:$0xff]
            %v1283 = vld [vmem:[%s1273 + $0x48] sm:$0xff]
            %v1284 = vld [vmem:[%s1273 + $0x50] sm:$0xff]
            %v1285 = vld [vmem:[%s1273 + $0x58] sm:$0xff]
            %v1286 = vld [vmem:[%s1273 + $0x60] sm:$0xff]
            %v1287 = vld [vmem:[%s1273 + $0x68] sm:$0xff]
            %v1288 = vld [vmem:[%s1273 + $0x70] sm:$0xff]
            %v1289 = vld [vmem:[%s1273 + $0x78] sm:$0xff]
            %1290 = vmatprep.subr.mxu0 0.0
            %1291 = vmatpush1.msra.mxu0 %v1274
            %1292 = vmatprep.subr.mxu0 0.0
            %1293 = vmatpush1.msra.mxu0 %v1275
            %1294 = vmatprep.subr.mxu0 0.0
            %1295 = vmatpush1.msra.mxu0 %v1276
            %1296 = vmatprep.subr.mxu0 0.0
            %1297 = vmatpush1.msra.mxu0 %v1277
            %1298 = vmatprep.subr.mxu0 0.0
            %1299 = vmatpush1.msra.mxu0 %v1278
            %1300 = vmatprep.subr.mxu0 0.0
            %1301 = vmatpush1.msra.mxu0 %v1279
            %1302 = vmatprep.subr.mxu0 0.0
            %1303 = vmatpush1.msra.mxu0 %v1280
            %1304 = vmatprep.subr.mxu0 0.0
            %1305 = vmatpush1.msra.mxu0 %v1281
            %1306 = vmatprep.subr.mxu0 0.0
            %1307 = vmatpush1.msra.mxu0 %v1282
            %1308 = vmatprep.subr.mxu0 0.0
            %1309 = vmatpush1.msra.mxu0 %v1283
            %1310 = vmatprep.subr.mxu0 0.0
            %1311 = vmatpush1.msra.mxu0 %v1284
            %1312 = vmatprep.subr.mxu0 0.0
            %1313 = vmatpush1.msra.mxu0 %v1285
            %1314 = vmatprep.subr.mxu0 0.0
            %1315 = vmatpush1.msra.mxu0 %v1286
            %1316 = vmatprep.subr.mxu0 0.0
            %1317 = vmatpush1.msra.mxu0 %v1287
            %1318 = vmatprep.subr.mxu0 0.0
            %1319 = vmatpush1.msra.mxu0 %v1288
            %1320 = vmatprep.subr.mxu0 0.0
            %1321 = vmatpush1.msra.mxu0 %v1289
            %1322 = vmatprep.subr.mxu0 0.0
            %1323 = vmatpush1.msra.mxu0 0.0
            %1324 = vmatprep.subr.mxu0 0.0
            %1325 = vmatpush1.msra.mxu0 0.0
            %1326 = vmatprep.subr.mxu0 0.0
            %1327 = vmatpush1.msra.mxu0 0.0
            %1328 = vmatprep.subr.mxu0 0.0
            %1329 = vmatpush1.msra.mxu0 0.0
            %1330 = vmatprep.subr.mxu0 0.0
            %1331 = vmatpush1.msra.mxu0 0.0
            %1332 = vmatprep.subr.mxu0 0.0
            %1333 = vmatpush1.msra.mxu0 0.0
            %1334 = vmatprep.subr.mxu0 0.0
            %1335 = vmatpush1.msra.mxu0 0.0
            %1336 = vmatprep.subr.mxu0 0.0
            %1337 = vmatpush1.msra.mxu0 0.0
            %1338 = vmatprep.subr.mxu0 0.0
            %1339 = vmatpush1.msra.mxu0 0.0
            %1340 = vmatprep.subr.mxu0 0.0
            %1341 = vmatpush1.msra.mxu0 0.0
            %1342 = vmatprep.subr.mxu0 0.0
            %1343 = vmatpush1.msra.mxu0 0.0
            %1344 = vmatprep.subr.mxu0 0.0
            %1345 = vmatpush1.msra.mxu0 0.0
            %1346 = vmatprep.subr.mxu0 0.0
            %1347 = vmatpush1.msra.mxu0 0.0
            %1348 = vmatprep.subr.mxu0 0.0
            %1349 = vmatpush1.msra.mxu0 0.0
            %1350 = vmatprep.subr.mxu0 0.0
            %1351 = vmatpush1.msra.mxu0 0.0
            %1352 = vmatprep.subr.mxu0 0.0
            %1353 = vmatpush1.msra.mxu0 0.0
            %1354 = vmatprep.mubr.f32.mxu0 0.0
            %1355 = vmatmul.mubr.f32.gmra.mrb[0].mxu0 %v1265
            %v1356 = vpop.f32.mrb[0].mxu0
            %v1357 = vadd.f32 0.0, %v1356
            %v1358 = vpop.f32.mrb[0].mxu0
            %1359 = vmatprep.mubr.f32.mxu0 0.0
            %1360 = vmatmul.mubr.f32.gmra.mrb[0].mxu0 %v1270
            %v1361 = vpop.f32.mrb[0].mxu0
            %v1362 = vadd.f32 0.0, %v1361
            %v1363 = vpop.f32.mrb[0].mxu0
            %1364 = vdwg.mxu0
            %v1365 = vadd.f32 %v791, %v1357
            %v1366 = vadd.f32 %v792, %v1362
          $region129: #{tpu_custom_call.1} parent=123 // loop_footer
            %s790 = sadd.s32 1, %s786
          $region130: #{tpu_custom_call.1} parent=123 // loop_footer_branch
            %785 = sbr.rel target = $region126
          $region131: #{tpu_custom_call.1} parent=123 // loop_exit
            _
          %v1367 = vadd.f32 %v742, %v791
          %v1368 = vadd.f32 %v743, %v792
          %v1369 = vld [vmem:[%s10] sm:$0x1]
          %v1371 = vlaneseq
          %v1372 = vshrl.u32 %v1371, 7
          %v1373 = vsub.s32 0, %v1372
          %v1374 = vrot.slane %v1369, %v1373
          %v1376 = vadd.f32 %v1367, %v1374
          %v1377 = vadd.f32 %v1368, %v1374
          %1378 = vst [vmem:[#allocation2] sm:$0xff] %v1376
          %1379 = vst [vmem:[#allocation2 + $0x8] sm:$0xff] %v1377
          %v1380 = vld [vmem:[%s11] sm:$0x1]
          %v1381 = vld [vmem:[%s12] sm:$0x1]
          %1382 = vadd.xlane.f32.xlu0 %v1376
          %v1383 = vpop.xlane.xlu0 %1382
          %1384 = vadd.xlane.f32.xlu0 %v1377
          %v1385 = vpop.xlane.xlu0 %1384
          %v1386 = vmul.f32 %v1383, %v750
          %v1387 = vmul.f32 %v1385, %v750
          %v1388 = vsub.f32 %v1376, %v1386
          %v1389 = vsub.f32 %v1377, %v1387
          %v1390 = vmul.f32 %v1388, %v1388
          %v1391 = vmul.f32 %v1389, %v1389
          %1392 = vadd.xlane.f32.xlu0 %v1390
          %v1393 = vpop.xlane.xlu0 %1392
          %1394 = vadd.xlane.f32.xlu0 %v1391
          %v1395 = vpop.xlane.xlu0 %1394
          %v1396 = vmul.f32 %v1393, %v750
          %v1397 = vmul.f32 %v1395, %v750
          %v1398 = vadd.f32 %v1396, 1e-06
          %v1399 = vadd.f32 %v1397, 1e-06
          %v1400 = vrsqrt.pop %v1398
          %v1401 = vrsqrt.pop %v1399
          %v1402 = vmul.f32 %v1388, %v1400
          %v1403 = vmul.f32 %v1389, %v1401
          %v1405 = vlaneseq
          %v1406 = vshrl.u32 %v1405, 7
          %v1407 = vsub.s32 0, %v1406
          %v1408 = vrot.slane %v1380, %v1407
          %v1410 = vmul.f32 %v1402, %v1408
          %v1411 = vmul.f32 %v1403, %v1408
          %v1413 = vlaneseq
          %v1414 = vshrl.u32 %v1413, 7
          %v1415 = vsub.s32 0, %v1414
          %v1416 = vrot.slane %v1381, %v1415
          %v1418 = vadd.f32 %v1410, %v1416
          %v1419 = vadd.f32 %v1411, %v1416
          %1420 = vst [vmem:[#allocation3] sm:$0xff] %v1418
          %1421 = vst [vmem:[#allocation3 + $0x8] sm:$0xff] %v1419
        $region124: #{tpu_custom_call.1} parent=87 // pred_fallthru
          _
        %v1422 = vld [vmem:[#allocation3] sm:$0xff]
        %v1423 = vld [vmem:[#allocation3 + $0x8] sm:$0xff]
        %v1424 = vld [vmem:[%s661] sm:$0xff]
        %v1425 = vld [vmem:[%s661 + $0x8] sm:$0xff]
        %v1426 = vld [vmem:[%s661 + $0x10] sm:$0xff]
        %v1427 = vld [vmem:[%s661 + $0x18] sm:$0xff]
        %v1428 = vld [vmem:[%s661 + $0x20] sm:$0xff]
        %v1429 = vld [vmem:[%s661 + $0x28] sm:$0xff]
        %v1430 = vld [vmem:[%s661 + $0x30] sm:$0xff]
        %v1431 = vld [vmem:[%s661 + $0x38] sm:$0xff]
        %v1432 = vld [vmem:[%s661 + $0x40] sm:$0xff]
        %v1433 = vld [vmem:[%s661 + $0x48] sm:$0xff]
        %v1434 = vld [vmem:[%s661 + $0x50] sm:$0xff]
        %v1435 = vld [vmem:[%s661 + $0x58] sm:$0xff]
        %v1436 = vld [vmem:[%s661 + $0x60] sm:$0xff]
        %v1437 = vld [vmem:[%s661 + $0x68] sm:$0xff]
        %v1438 = vld [vmem:[%s661 + $0x70] sm:$0xff]
        %v1439 = vld [vmem:[%s661 + $0x78] sm:$0xff]
        %v1440 = vld [vmem:[%s736] sm:$0x1]
        %v1442 = vlaneseq
        %v1443 = vshrl.u32 %v1442, 7
        %v1444 = vsub.s32 0, %v1443
        %v1445 = vrot.slane %v1440, %v1444
        %1447 = vmatprep.subr.mxu0 0.0
        %1448 = vmatpush1.msra.mxu0 %v1424
        %1449 = vmatprep.subr.mxu0 0.0
        %1450 = vmatpush1.msra.mxu0 %v1425
        %1451 = vmatprep.subr.mxu0 0.0
        %1452 = vmatpush1.msra.mxu0 %v1426
        %1453 = vmatprep.subr.mxu0 0.0
        %1454 = vmatpush1.msra.mxu0 %v1427
        %1455 = vmatprep.subr.mxu0 0.0
        %1456 = vmatpush1.msra.mxu0 %v1428
        %1457 = vmatprep.subr.mxu0 0.0
        %1458 = vmatpush1.msra.mxu0 %v1429
        %1459 = vmatprep.subr.mxu0 0.0
        %1460 = vmatpush1.msra.mxu0 %v1430
        %1461 = vmatprep.subr.mxu0 0.0
        %1462 = vmatpush1.msra.mxu0 %v1431
        %1463 = vmatprep.subr.mxu0 0.0
        %1464 = vmatpush1.msra.mxu0 %v1432
        %1465 = vmatprep.subr.mxu0 0.0
        %1466 = vmatpush1.msra.mxu0 %v1433
        %1467 = vmatprep.subr.mxu0 0.0
        %1468 = vmatpush1.msra.mxu0 %v1434
        %1469 = vmatprep.subr.mxu0 0.0
        %1470 = vmatpush1.msra.mxu0 %v1435
        %1471 = vmatprep.subr.mxu0 0.0
        %1472 = vmatpush1.msra.mxu0 %v1436
        %1473 = vmatprep.subr.mxu0 0.0
        %1474 = vmatpush1.msra.mxu0 %v1437
        %1475 = vmatprep.subr.mxu0 0.0
        %1476 = vmatpush1.msra.mxu0 %v1438
        %1477 = vmatprep.subr.mxu0 0.0
        %1478 = vmatpush1.msra.mxu0 %v1439
        %1479 = vmatprep.subr.mxu0 0.0
        %1480 = vmatpush1.msra.mxu0 0.0
        %1481 = vmatprep.subr.mxu0 0.0
        %1482 = vmatpush1.msra.mxu0 0.0
        %1483 = vmatprep.subr.mxu0 0.0
        %1484 = vmatpush1.msra.mxu0 0.0
        %1485 = vmatprep.subr.mxu0 0.0
        %1486 = vmatpush1.msra.mxu0 0.0
        %1487 = vmatprep.subr.mxu0 0.0
        %1488 = vmatpush1.msra.mxu0 0.0
        %1489 = vmatprep.subr.mxu0 0.0
        %1490 = vmatpush1.msra.mxu0 0.0
        %1491 = vmatprep.subr.mxu0 0.0
        %1492 = vmatpush1.msra.mxu0 0.0
        %1493 = vmatprep.subr.mxu0 0.0
        %1494 = vmatpush1.msra.mxu0 0.0
        %1495 = vmatprep.subr.mxu0 0.0
        %1496 = vmatpush1.msra.mxu0 0.0
        %1497 = vmatprep.subr.mxu0 0.0
        %1498 = vmatpush1.msra.mxu0 0.0
        %1499 = vmatprep.subr.mxu0 0.0
        %1500 = vmatpush1.msra.mxu0 0.0
        %1501 = vmatprep.subr.mxu0 0.0
        %1502 = vmatpush1.msra.mxu0 0.0
        %1503 = vmatprep.subr.mxu0 0.0
        %1504 = vmatpush1.msra.mxu0 0.0
        %1505 = vmatprep.subr.mxu0 0.0
        %1506 = vmatpush1.msra.mxu0 0.0
        %1507 = vmatprep.subr.mxu0 0.0
        %1508 = vmatpush1.msra.mxu0 0.0
        %1509 = vmatprep.subr.mxu0 0.0
        %1510 = vmatpush1.msra.mxu0 0.0
        %1511 = vmatprep.mubr.f32.mxu0 0.0
        %1512 = vmatmul.mubr.f32.gmra.mrb[0].mxu0 %v1422
        %v1513 = vpop.f32.mrb[0].mxu0
        %v1514 = vadd.f32 %v1445, %v1513
        %v1515 = vpop.f32.mrb[0].mxu0
        %1516 = vmatprep.mubr.f32.mxu0 0.0
        %1517 = vmatmul.mubr.f32.gmra.mrb[0].mxu0 %v1423
        %v1518 = vpop.f32.mrb[0].mxu0
        %v1519 = vadd.f32 %v1445, %v1518
        %v1520 = vpop.f32.mrb[0].mxu0
        %1521 = vdwg.mxu0
        %v1522 = vmul.f32 %v1514, 0.5
        %v1523 = vmul.f32 %v1519, 0.5
        %v1524 = vmul.f32 %v1514, 0.044715
        %v1525 = vmul.f32 %v1519, 0.044715
        %v1526 = vmul.f32 %v1524, %v1514
        %v1527 = vmul.f32 %v1525, %v1519
        %v1528 = vmul.f32 %v1526, %v1514
        %v1529 = vmul.f32 %v1527, %v1519
        %v1530 = vadd.f32 %v1514, %v1528
        %v1531 = vadd.f32 %v1519, %v1529
        %v1532 = vmul.f32 %v1530, 0.7978846
        %v1533 = vmul.f32 %v1531, 0.7978846
        %v1534 = vtanh.pop %v1532
        %v1535 = vtanh.pop %v1533
        %v1536 = vadd.f32 %v1534, 1.0
        %v1537 = vadd.f32 %v1535, 1.0
        %v1538 = vmul.f32 %v1522, %v1536
        %v1539 = vmul.f32 %v1523, %v1537
        %v1540 = vld [vmem:[%s670] sm:$0xff]
        %v1541 = vld [vmem:[%s670 + $0x8] sm:$0xff]
        %v1542 = vld [vmem:[%s670 + $0x10] sm:$0xff]
        %v1543 = vld [vmem:[%s670 + $0x18] sm:$0xff]
        %v1544 = vld [vmem:[%s670 + $0x20] sm:$0xff]
        %v1545 = vld [vmem:[%s670 + $0x28] sm:$0xff]
        %v1546 = vld [vmem:[%s670 + $0x30] sm:$0xff]
        %v1547 = vld [vmem:[%s670 + $0x38] sm:$0xff]
        %v1548 = vld [vmem:[%s670 + $0x40] sm:$0xff]
        %v1549 = vld [vmem:[%s670 + $0x48] sm:$0xff]
        %v1550 = vld [vmem:[%s670 + $0x50] sm:$0xff]
        %v1551 = vld [vmem:[%s670 + $0x58] sm:$0xff]
        %v1552 = vld [vmem:[%s670 + $0x60] sm:$0xff]
        %v1553 = vld [vmem:[%s670 + $0x68] sm:$0xff]
        %v1554 = vld [vmem:[%s670 + $0x70] sm:$0xff]
        %v1555 = vld [vmem:[%s670 + $0x78] sm:$0xff]
        %1556 = vmatprep.subr.mxu0 0.0
        %1557 = vmatpush1.msra.mxu0 %v1540
        %1558 = vmatprep.subr.mxu0 0.0
        %1559 = vmatpush1.msra.mxu0 %v1541
        %1560 = vmatprep.subr.mxu0 0.0
        %1561 = vmatpush1.msra.mxu0 %v1542
        %1562 = vmatprep.subr.mxu0 0.0
        %1563 = vmatpush1.msra.mxu0 %v1543
        %1564 = vmatprep.subr.mxu0 0.0
        %1565 = vmatpush1.msra.mxu0 %v1544
        %1566 = vmatprep.subr.mxu0 0.0
        %1567 = vmatpush1.msra.mxu0 %v1545
        %1568 = vmatprep.subr.mxu0 0.0
        %1569 = vmatpush1.msra.mxu0 %v1546
        %1570 = vmatprep.subr.mxu0 0.0
        %1571 = vmatpush1.msra.mxu0 %v1547
        %1572 = vmatprep.subr.mxu0 0.0
        %1573 = vmatpush1.msra.mxu0 %v1548
        %1574 = vmatprep.subr.mxu0 0.0
        %1575 = vmatpush1.msra.mxu0 %v1549
        %1576 = vmatprep.subr.mxu0 0.0
        %1577 = vmatpush1.msra.mxu0 %v1550
        %1578 = vmatprep.subr.mxu0 0.0
        %1579 = vmatpush1.msra.mxu0 %v1551
        %1580 = vmatprep.subr.mxu0 0.0
        %1581 = vmatpush1.msra.mxu0 %v1552
        %1582 = vmatprep.subr.mxu0 0.0
        %1583 = vmatpush1.msra.mxu0 %v1553
        %1584 = vmatprep.subr.mxu0 0.0
        %1585 = vmatpush1.msra.mxu0 %v1554
        %1586 = vmatprep.subr.mxu0 0.0
        %1587 = vmatpush1.msra.mxu0 %v1555
        %1588 = vmatprep.subr.mxu0 0.0
        %1589 = vmatpush1.msra.mxu0 0.0
        %1590 = vmatprep.subr.mxu0 0.0
        %1591 = vmatpush1.msra.mxu0 0.0
        %1592 = vmatprep.subr.mxu0 0.0
        %1593 = vmatpush1.msra.mxu0 0.0
        %1594 = vmatprep.subr.mxu0 0.0
        %1595 = vmatpush1.msra.mxu0 0.0
        %1596 = vmatprep.subr.mxu0 0.0
        %1597 = vmatpush1.msra.mxu0 0.0
        %1598 = vmatprep.subr.mxu0 0.0
        %1599 = vmatpush1.msra.mxu0 0.0
        %1600 = vmatprep.subr.mxu0 0.0
        %1601 = vmatpush1.msra.mxu0 0.0
        %1602 = vmatprep.subr.mxu0 0.0
        %1603 = vmatpush1.msra.mxu0 0.0
        %1604 = vmatprep.subr.mxu0 0.0
        %1605 = vmatpush1.msra.mxu0 0.0
        %1606 = vmatprep.subr.mxu0 0.0
        %1607 = vmatpush1.msra.mxu0 0.0
        %1608 = vmatprep.subr.mxu0 0.0
        %1609 = vmatpush1.msra.mxu0 0.0
        %1610 = vmatprep.subr.mxu0 0.0
        %1611 = vmatpush1.msra.mxu0 0.0
        %1612 = vmatprep.subr.mxu0 0.0
        %1613 = vmatpush1.msra.mxu0 0.0
        %1614 = vmatprep.subr.mxu0 0.0
        %1615 = vmatpush1.msra.mxu0 0.0
        %1616 = vmatprep.subr.mxu0 0.0
        %1617 = vmatpush1.msra.mxu0 0.0
        %1618 = vmatprep.subr.mxu0 0.0
        %1619 = vmatpush1.msra.mxu0 0.0
        %1620 = vmatprep.mubr.f32.mxu0 0.0
        %1621 = vmatmul.mubr.f32.gmra.mrb[0].mxu0 %v1538
        %v1622 = vpop.f32.mrb[0].mxu0
        %v1623 = vadd.f32 0.0, %v1622
        %v1624 = vpop.f32.mrb[0].mxu0
        %1625 = vmatprep.mubr.f32.mxu0 0.0
        %1626 = vmatmul.mubr.f32.gmra.mrb[0].mxu0 %v1539
        %v1627 = vpop.f32.mrb[0].mxu0
        %v1628 = vadd.f32 0.0, %v1627
        %v1629 = vpop.f32.mrb[0].mxu0
        %1630 = vdwg.mxu0
        // Predicated region
        $region132: #{tpu_custom_call.1} parent=87 // pred_check
          %p1631 = pneg %p738
        $region133: #{tpu_custom_call.1} parent=87 // pred_check_branch
          %1633 = sbr.rel (%p1631) target = $region135
        $region134: #{tpu_custom_call.1} parent=87 // pred_region
          %1634 = vst [vmem:[#allocation4] sm:$0xff] %v1623
          %1635 = vst [vmem:[#allocation4 + $0x8] sm:$0xff] %v1628
        $region135: #{tpu_custom_call.1} parent=87 // pred_fallthru
          _
        %p1636 = scmp.gt.s32.totalorder %s42, 0
        // Predicated region
        $region136: #{tpu_custom_call.1} parent=87 // pred_check
          %p1637 = pneg %p1636
        $region137: #{tpu_custom_call.1} parent=87 // pred_check_branch
          %1639 = sbr.rel (%p1637) target = $region139
        $region138: #{tpu_custom_call.1} parent=87 // pred_region
          %v1640 = vld [vmem:[#allocation4] sm:$0xff]
          %v1641 = vld [vmem:[#allocation4 + $0x8] sm:$0xff]
          %v1642 = vadd.f32 %v1640, %v1623
          %v1643 = vadd.f32 %v1641, %v1628
          %1644 = vst [vmem:[#allocation4] sm:$0xff] %v1642
          %1645 = vst [vmem:[#allocation4 + $0x8] sm:$0xff] %v1643
        $region139: #{tpu_custom_call.1} parent=87 // pred_fallthru
          _
        %p1646 = scmp.eq.s32.totalorder %s42, 1
        // Predicated region
        $region140: #{tpu_custom_call.1} parent=87 // pred_check
          %p1647 = pneg %p1646
        $region141: #{tpu_custom_call.1} parent=87 // pred_check_branch
          %1649 = sbr.rel (%p1647) target = $region143
        $region142: #{tpu_custom_call.1} parent=87 // pred_region
          %v1650 = vld [vmem:[#allocation2] sm:$0xff]
          %v1651 = vld [vmem:[#allocation2 + $0x8] sm:$0xff]
          %v1652 = vld [vmem:[#allocation4] sm:$0xff]
          %v1653 = vld [vmem:[#allocation4 + $0x8] sm:$0xff]
          %v1654 = vadd.f32 %v1650, %v1652
          %v1655 = vadd.f32 %v1651, %v1653
          %v1656 = vld [vmem:[%s16] sm:$0x1]
          %v1658 = vlaneseq
          %v1659 = vshrl.u32 %v1658, 7
          %v1660 = vsub.s32 0, %v1659
          %v1661 = vrot.slane %v1656, %v1660
          %v1663 = vadd.f32 %v1654, %v1661
          %v1664 = vadd.f32 %v1655, %v1661
          %1665 = vst [vmem:[%s733] sm:$0xff] %v1663
          %1666 = vst [vmem:[%s733 + $0x8] sm:$0xff] %v1664
        $region143: #{tpu_custom_call.1} parent=87 // pred_fallthru
          _
        %s1667 = sand.u32 %s434, 1
        %s1668 = scalar_lea.sflag [#allocation7], %s1667
        %s1669 = sand.u32 %s434, 1
        %s1670 = smul.addr %s1669, 16
        %s1671 = scalar_lea.vmem [#allocation18], %s1670
        // Predicated region
        $region144: #{tpu_custom_call.1} parent=87 // pred_check
          %p1672 = pneg %p444
        $region145: #{tpu_custom_call.1} parent=87 // pred_check_branch
          %1674 = sbr.rel (%p1672) target = $region147
        $region146: #{tpu_custom_call.1} parent=87 // pred_region
          %s1676 = ssub.s32 256, 256
          %1677 = vsyncadd %s1668, %s1676
          %s1678 = smul.addr %s41, 2
          %s1679 = smul.addr %s1678, 128
          %s1680 = scalar_lea.hbm %s17, %s1679
          %s1681 = sshll.u32 %s1671, 4
          %s1682 = int_to_ptr.vmem [resolvable:$true] %s1681
          %1687 = dma.vmem_to_hbm [thread:$0]  %s1682, 256, %s1680, %s1668, 128, 128, 8
        $region147: #{tpu_custom_call.1} parent=87 // pred_fallthru
          _
      $region88: #{tpu_custom_call.1} parent=5 // pred_fallthru
        _
      %p1688 = scmp.le.s32.totalorder 2, %s32
      // Predicated region
      $region148: #{tpu_custom_call.1} parent=5 // pred_check
        %p1689 = pneg %p1688
      $region149: #{tpu_custom_call.1} parent=5 // pred_check_branch
        %1691 = sbr.rel (%p1689) target = $region151
      $region150: #{tpu_custom_call.1} parent=5 // pred_region
        %s1692 = ssub.s32 %s32, 2
        // Predicated region
        $region152: #{tpu_custom_call.1} parent=150 // pred_check
          %p1693 = pneg %p450
        $region153: #{tpu_custom_call.1} parent=150 // pred_check_branch
          %1695 = sbr.rel (%p1693) target = $region155
        $region154: #{tpu_custom_call.1} parent=150 // pred_region
          %s1696 = sand.u32 %s435, 1
          %s1697 = scalar_lea.sflag [#allocation7], %s1696
          %s1698 = sand.u32 %s435, 1
          %s1699 = smul.addr %s1698, 16
          %s1700 = scalar_lea.vmem [#allocation18], %s1699
          %1701 = dma.done %s1697, 256
        $region155: #{tpu_custom_call.1} parent=150 // pred_fallthru
          _
      $region151: #{tpu_custom_call.1} parent=5 // pred_fallthru
        _
    $region6: #{tpu_custom_call.1} parent=1 // loop_footer
      %s36 = sadd.s32 1, %s32
    $region7: #{tpu_custom_call.1} parent=1 // loop_footer_branch
      %31 = sbr.rel target = $region3
    $region8: #{tpu_custom_call.1} parent=1 // loop_exit
      _
    %1702 = vsyncpa [#allocation6], 1
    %s1703 = scalar_lea.sflag [#allocation6], 1
    %1704 = vsyncpa %s1703, 1
    %1705 = vsyncpa [#allocation9], 1
    %1706 = vsyncpa [#allocation12], 1
    %1707 = vsyncpa [#allocation15], 1
    %1708 = vsyncpa [#allocation7], 1
    %s1709 = scalar_lea.sflag [#allocation7], 1
    %1710 = vsyncpa %s1709, 1

// kernel: tpu_custom_call.1
$region0: #{tpu_custom_call.1}
  #allocation0 [shape = 'u32[]', space=smem, size = 0x4, offset = 0x4, fixed_abs, tag = 'smem constant byte address 0x4 - core index']
  #allocation1 [shape = 'u32[144,128]{1,0:T(1,128)}', space=vmem, size = 0x12000, scoped, tag = 'internal scratch']
  #allocation2 [shape = 'f32[1,16,128]{2,1,0:T(8,128)}', space=vmem, size = 0x2000, scoped, tag = 'scratch operand']
  #allocation3 [shape = 'f32[1,16,128]{2,1,0:T(8,128)}', space=vmem, size = 0x2000, scoped, tag = 'scratch operand']
  #allocation4 [shape = 'f32[1,16,128]{2,1,0:T(8,128)}', space=vmem, size = 0x2000, scoped, tag = 'scratch operand']
  %s0 = inlined_call_operand.hbm [shape: f32[2,16,128], index: 0, kind: input, shape index: {}]
  %s1 = inlined_call_operand.vmem [shape: f32[1,128], index: 1, kind: input, shape index: {}]
  %s2 = inlined_call_operand.hbm [shape: f32[1,128], index: 2, kind: input, shape index: {}]
  %s3 = inlined_call_operand.hbm [shape: f32[4,128,128], index: 3, kind: input, shape index: {}]
  %s4 = inlined_call_operand.vmem [shape: f32[4,1,128], index: 4, kind: input, shape index: {}]
  %s5 = inlined_call_operand.hbm [shape: f32[4,128,128], index: 5, kind: input, shape index: {}]
  %s6 = inlined_call_operand.vmem [shape: f32[4,1,128], index: 6, kind: input, shape index: {}]
  %s7 = inlined_call_operand.hbm [shape: f32[4,128,128], index: 7, kind: input, shape index: {}]
  %s8 = inlined_call_operand.vmem [shape: f32[4,1,128], index: 8, kind: input, shape index: {}]
  %s9 = inlined_call_operand.hbm [shape: f32[4,128,128], index: 9, kind: input, shape index: {}]
  %s10 = inlined_call_operand.vmem [shape: f32[1,128], index: 10, kind: input, shape index: {}]
  %s11 = inlined_call_operand.vmem [shape: f32[1,128], index: 11, kind: input, shape index: {}]
  %s12 = inlined_call_operand.vmem [shape: f32[1,128], index: 12, kind: input, shape index: {}]
  %s13 = inlined_call_operand.hbm [shape: f32[128,256], index: 13, kind: input, shape index: {}]
  %s14 = inlined_call_operand.vmem [shape: f32[1,256], index: 14, kind: input, shape index: {}]
  %s15 = inlined_call_operand.hbm [shape: f32[256,128], index: 15, kind: input, shape index: {}]
  %s16 = inlined_call_operand.vmem [shape: f32[1,128], index: 16, kind: input, shape index: {}]
  %s17 = inlined_call_operand.hbm [shape: f32[2,16,128], index: 17, kind: output, shape index: {}]
  %s18 = sld [smem:[#allocation0]]
  $region156: #{tpu_custom_call.1} parent=0
    _
  %s20 = ssub.s32 1, %s18
  %s21 = scalar_select 0, %s20, %s18
  $region1: #{tpu_custom_call.1} parent=0
    #allocation5 [shape = 'u8[16384]{0}', space=vmem, size = 0x4000, scoped, tag = 'input window, operand 0']
    #allocation6 [shape = 's32[2]{0}', space=sflag, size = 0x8, scoped, tag = 'scoped memory for tpu_custom_call.1']
    #allocation7 [shape = 's32[2]{0}', space=sflag, size = 0x8, scoped, tag = 'scoped memory for tpu_custom_call.1']
    #allocation8 [shape = 'u8[512]{0}', space=vmem, size = 0x400, scoped, tag = 'input window, operand 2, single buffered']
    #allocation9 [shape = 's32[1]{0}', space=sflag, size = 0x4, scoped, tag = 'scoped memory for tpu_custom_call.1']
    #allocation10 [shape = 'u8[262144]{0}', space=vmem, size = 0x40000, scoped, tag = 'input window, operand 3, single buffered']
    #allocation11 [shape = 'u8[262144]{0}', space=vmem, size = 0x40000, scoped, tag = 'input window, operand 5, single buffered']
    #allocation12 [shape = 's32[1]{0}', space=sflag, size = 0x4, scoped, tag = 'scoped memory for tpu_custom_call.1']
    #allocation13 [shape = 'u8[262144]{0}', space=vmem, size = 0x40000, scoped, tag = 'input window, operand 7, single buffered']
    #allocation14 [shape = 'u8[262144]{0}', space=vmem, size = 0x40000, scoped, tag = 'input window, operand 9, single buffered']
    #allocation15 [shape = 's32[1]{0}', space=sflag, size = 0x4, scoped, tag = 'scoped memory for tpu_custom_call.1']
    #allocation16 [shape = 'u8[131072]{0}', space=vmem, size = 0x20000, scoped, tag = 'input window, operand 13']
    #allocation17 [shape = 'u8[131072]{0}', space=vmem, size = 0x20000, scoped, tag = 'input window, operand 15']
    #allocation18 [shape = 'u8[16384]{0}', space=vmem, size = 0x4000, scoped, tag = 'output window, operand 0']
    %22 = vsyncpa [#allocation6], 0
    %s23 = scalar_lea.sflag [#allocation6], 1
    %24 = vsyncpa %s23, 0
    %25 = vsyncpa [#allocation9], 0
    %26 = vsyncpa [#allocation12], 0
    %27 = vsyncpa [#allocation15], 0
    %28 = vsyncpa [#allocation7], 0
    %s29 = scalar_lea.sflag [#allocation7], 1
    %30 = vsyncpa %s29, 0
    loop: start=0, step=1, limit=6
    $region2: #{tpu_custom_call.1} parent=1 // loop_pre_header
      _
    $region3: #{tpu_custom_call.1} parent=1 // loop_header
      %s32 = sphi 0, %s36
      %p33 = scmp.ge.s32.totalorder %s32, 6
      %s39 = sphi 0, %s51
      %s40 = sphi 0, %s47
      %s41 = sphi 0, %s39
      %s42 = sphi 0, %s40
      %s43 = sphi 0, %s41
      %s44 = sphi 0, %s42
      %s54 = sphi 0, %s56
      %s57 = sphi 0, %s54
      %s58 = sphi 0, %s57
      %s74 = sphi 0, %s58
      %s78 = sphi 0, %s78
      %s80 = sphi 0, %s78
      %s81 = sphi 0, %s80
      %s95 = sphi 0, %s81
      %s99 = sphi 0, %s99
      %s101 = sphi 0, %s99
      %s102 = sphi 0, %s101
      %s116 = sphi 0, %s102
      %s120 = sphi 0, %s120
      %s122 = sphi 0, %s120
      %s123 = sphi 0, %s122
      %s137 = sphi 0, %s123
      %s141 = sphi 0, %s141
      %s143 = sphi 0, %s141
      %s144 = sphi 0, %s143
      %s158 = sphi 0, %s144
      %s162 = sphi 0, %s162
      %s164 = sphi 0, %s162
      %s165 = sphi 0, %s164
      %s179 = sphi 0, %s165
      %s183 = sphi 0, %s183
      %s185 = sphi 0, %s183
      %s186 = sphi 0, %s185
      %s200 = sphi 0, %s186
      %s204 = sphi 0, %s204
      %s206 = sphi 0, %s204
      %s207 = sphi 0, %s206
      %s221 = sphi 0, %s207
      %s225 = sphi 0, %s225
      %s227 = sphi 0, %s225
      %s228 = sphi 0, %s227
      %s242 = sphi 0, %s228
      %s246 = sphi 0, %s246
      %s248 = sphi 0, %s246
      %s249 = sphi 0, %s248
      %s263 = sphi 0, %s249
      %s267 = sphi 0, %s267
      %s269 = sphi 0, %s267
      %s270 = sphi 0, %s269
      %s284 = sphi 0, %s270
      %s288 = sphi 0, %s288
      %s290 = sphi 0, %s288
      %s291 = sphi 0, %s290
      %s305 = sphi 0, %s291
      %s309 = sphi 0, %s309
      %s311 = sphi 0, %s309
      %s312 = sphi 0, %s311
      %s326 = sphi 0, %s312
      %s332 = sphi 0, %s334
      %s335 = sphi 0, %s332
      %s336 = sphi 0, %s335
      %s352 = sphi 0, %s336
      %s358 = sphi 0, %s360
      %s361 = sphi 0, %s358
      %s362 = sphi 0, %s361
      %s378 = sphi 0, %s362
      %s384 = sphi 0, %s386
      %s387 = sphi 0, %s384
      %s388 = sphi 0, %s387
      %s404 = sphi 0, %s388
      %s408 = sphi 0, %s408
      %s410 = sphi 0, %s408
      %s411 = sphi 0, %s410
      %s425 = sphi 0, %s411
      %s431 = sphi 0, %s433
      %s434 = sphi 0, %s431
      %s435 = sphi 0, %s434
      %s451 = sphi 0, %s435
    $region4: #{tpu_custom_call.1} parent=1 // loop_header_branch
      %35 = sbr.rel (%p33) target = $region8
    $region5: #{tpu_custom_call.1} parent=1 // loop_body
      %s37 = ssub.s32 %s32, 1
      %s38 = ssub.s32 %s32, 2
      %s45 = sadd.s32 1, %s40
      %p46 = scmp.ge.s32.totalorder %s45, 2
      %s47 = scalar_select %p46, 0, %s45
      %s48 = sadd.s32 1, %s39
      %s49 = scalar_select %p46, %s48, %s39
      %p50 = scmp.ge.s32.totalorder %s49, 2
      %s51 = scalar_select %p50, 0, %s49
      %s52 = ssub.s32 %s39, %s51
      %p53 = scmp.eq.s32.totalorder %s52, 0
      %s55 = sadd.s32 %s54, 1
      %s56 = scalar_select %p53, %s54, %s55
      %p59 = pneg %p53
      %p60 = scmp.eq.s32.totalorder %s32, 3
      %p61 = por %p59, %p60
      %p62 = scmp.ne.s32.totalorder %s54, %s57
      %p63 = scmp.eq.s32.totalorder %s32, 0
      %p64 = por %p62, %p63
      %p65 = scmp.ne.s32.totalorder %s54, %s57
      %p66 = scmp.eq.s32.totalorder %s37, 3
      %p67 = por %p65, %p66
      %p68 = scmp.ne.s32.totalorder %s57, %s58
      %p69 = scmp.eq.s32.totalorder %s37, 0
      %p70 = por %p68, %p69
      %p71 = scmp.ne.s32.totalorder %s57, %s58
      %p72 = scmp.eq.s32.totalorder %s38, 3
      %p73 = por %p71, %p72
      %p75 = scmp.ne.s32.totalorder %s58, %s74
      %p76 = scmp.eq.s32.totalorder %s38, 0
      %p77 = por %p75, %p76
      %s79 = sadd.s32 %s78, 1
      %p82 = scmp.eq.s32.totalorder %s32, 3
      %p83 = scmp.ne.s32.totalorder %s78, %s80
      %p84 = scmp.eq.s32.totalorder %s32, 0
      %p85 = por %p83, %p84
      %p86 = scmp.ne.s32.totalorder %s78, %s80
      %p87 = scmp.eq.s32.totalorder %s37, 3
      %p88 = por %p86, %p87
      %p89 = scmp.ne.s32.totalorder %s80, %s81
      %p90 = scmp.eq.s32.totalorder %s37, 0
      %p91 = por %p89, %p90
      %p92 = scmp.ne.s32.totalorder %s80, %s81
      %p93 = scmp.eq.s32.totalorder %s38, 3
      %p94 = por %p92, %p93
      %p96 = scmp.ne.s32.totalorder %s81, %s95
      %p97 = scmp.eq.s32.totalorder %s38, 0
      %p98 = por %p96, %p97
      %s100 = sadd.s32 %s99, 1
      %p103 = scmp.eq.s32.totalorder %s32, 3
      %p104 = scmp.ne.s32.totalorder %s99, %s101
      %p105 = scmp.eq.s32.totalorder %s32, 0
      %p106 = por %p104, %p105
      %p107 = scmp.ne.s32.totalorder %s99, %s101
      %p108 = scmp.eq.s32.totalorder %s37, 3
      %p109 = por %p107, %p108
      %p110 = scmp.ne.s32.totalorder %s101, %s102
      %p111 = scmp.eq.s32.totalorder %s37, 0
      %p112 = por %p110, %p111
      %p113 = scmp.ne.s32.totalorder %s101, %s102
      %p114 = scmp.eq.s32.totalorder %s38, 3
      %p115 = por %p113, %p114
      %p117 = scmp.ne.s32.totalorder %s102, %s116
      %p118 = scmp.eq.s32.totalorder %s38, 0
      %p119 = por %p117, %p118
      %s121 = sadd.s32 %s120, 1
      %p124 = scmp.eq.s32.totalorder %s32, 3
      %p125 = scmp.ne.s32.totalorder %s120, %s122
      %p126 = scmp.eq.s32.totalorder %s32, 0
      %p127 = por %p125, %p126
      %p128 = scmp.ne.s32.totalorder %s120, %s122
      %p129 = scmp.eq.s32.totalorder %s37, 3
      %p130 = por %p128, %p129
      %p131 = scmp.ne.s32.totalorder %s122, %s123
      %p132 = scmp.eq.s32.totalorder %s37, 0
      %p133 = por %p131, %p132
      %p134 = scmp.ne.s32.totalorder %s122, %s123
      %p135 = scmp.eq.s32.totalorder %s38, 3
      %p136 = por %p134, %p135
      %p138 = scmp.ne.s32.totalorder %s123, %s137
      %p139 = scmp.eq.s32.totalorder %s38, 0
      %p140 = por %p138, %p139
      %s142 = sadd.s32 %s141, 1
      %p145 = scmp.eq.s32.totalorder %s32, 3
      %p146 = scmp.ne.s32.totalorder %s141, %s143
      %p147 = scmp.eq.s32.totalorder %s32, 0
      %p148 = por %p146, %p147
      %p149 = scmp.ne.s32.totalorder %s141, %s143
      %p150 = scmp.eq.s32.totalorder %s37, 3
      %p151 = por %p149, %p150
      %p152 = scmp.ne.s32.totalorder %s143, %s144
      %p153 = scmp.eq.s32.totalorder %s37, 0
      %p154 = por %p152, %p153
      %p155 = scmp.ne.s32.totalorder %s143, %s144
      %p156 = scmp.eq.s32.totalorder %s38, 3
      %p157 = por %p155, %p156
      %p159 = scmp.ne.s32.totalorder %s144, %s158
      %p160 = scmp.eq.s32.totalorder %s38, 0
      %p161 = por %p159, %p160
      %s163 = sadd.s32 %s162, 1
      %p166 = scmp.eq.s32.totalorder %s32, 3
      %p167 = scmp.ne.s32.totalorder %s162, %s164
      %p168 = scmp.eq.s32.totalorder %s32, 0
      %p169 = por %p167, %p168
      %p170 = scmp.ne.s32.totalorder %s162, %s164
      %p171 = scmp.eq.s32.totalorder %s37, 3
      %p172 = por %p170, %p171
      %p173 = scmp.ne.s32.totalorder %s164, %s165
      %p174 = scmp.eq.s32.totalorder %s37, 0
      %p175 = por %p173, %p174
      %p176 = scmp.ne.s32.totalorder %s164, %s165
      %p177 = scmp.eq.s32.totalorder %s38, 3
      %p178 = por %p176, %p177
      %p180 = scmp.ne.s32.totalorder %s165, %s179
      %p181 = scmp.eq.s32.totalorder %s38, 0
      %p182 = por %p180, %p181
      %s184 = sadd.s32 %s183, 1
      %p187 = scmp.eq.s32.totalorder %s32, 3
      %p188 = scmp.ne.s32.totalorder %s183, %s185
      %p189 = scmp.eq.s32.totalorder %s32, 0
      %p190 = por %p188, %p189
      %p191 = scmp.ne.s32.totalorder %s183, %s185
      %p192 = scmp.eq.s32.totalorder %s37, 3
      %p193 = por %p191, %p192
      %p194 = scmp.ne.s32.totalorder %s185, %s186
      %p195 = scmp.eq.s32.totalorder %s37, 0
      %p196 = por %p194, %p195
      %p197 = scmp.ne.s32.totalorder %s185, %s186
      %p198 = scmp.eq.s32.totalorder %s38, 3
      %p199 = por %p197, %p198
      %p201 = scmp.ne.s32.totalorder %s186, %s200
      %p202 = scmp.eq.s32.totalorder %s38, 0
      %p203 = por %p201, %p202
      %s205 = sadd.s32 %s204, 1
      %p208 = scmp.eq.s32.totalorder %s32, 3
      %p209 = scmp.ne.s32.totalorder %s204, %s206
      %p210 = scmp.eq.s32.totalorder %s32, 0
      %p211 = por %p209, %p210
      %p212 = scmp.ne.s32.totalorder %s204, %s206
      %p213 = scmp.eq.s32.totalorder %s37, 3
      %p214 = por %p212, %p213
      %p215 = scmp.ne.s32.totalorder %s206, %s207
      %p216 = scmp.eq.s32.totalorder %s37, 0
      %p217 = por %p215, %p216
      %p218 = scmp.ne.s32.totalorder %s206, %s207
      %p219 = scmp.eq.s32.totalorder %s38, 3
      %p220 = por %p218, %p219
      %p222 = scmp.ne.s32.totalorder %s207, %s221
      %p223 = scmp.eq.s32.totalorder %s38, 0
      %p224 = por %p222, %p223
      %s226 = sadd.s32 %s225, 1
      %p229 = scmp.eq.s32.totalorder %s32, 3
      %p230 = scmp.ne.s32.totalorder %s225, %s227
      %p231 = scmp.eq.s32.totalorder %s32, 0
      %p232 = por %p230, %p231
      %p233 = scmp.ne.s32.totalorder %s225, %s227
      %p234 = scmp.eq.s32.totalorder %s37, 3
      %p235 = por %p233, %p234
      %p236 = scmp.ne.s32.totalorder %s227, %s228
      %p237 = scmp.eq.s32.totalorder %s37, 0
      %p238 = por %p236, %p237
      %p239 = scmp.ne.s32.totalorder %s227, %s228
      %p240 = scmp.eq.s32.totalorder %s38, 3
      %p241 = por %p239, %p240
      %p243 = scmp.ne.s32.totalorder %s228, %s242
      %p244 = scmp.eq.s32.totalorder %s38, 0
      %p245 = por %p243, %p244
      %s247 = sadd.s32 %s246, 1
      %p250 = scmp.eq.s32.totalorder %s32, 3
      %p251 = scmp.ne.s32.totalorder %s246, %s248
      %p252 = scmp.eq.s32.totalorder %s32, 0
      %p253 = por %p251, %p252
      %p254 = scmp.ne.s32.totalorder %s246, %s248
      %p255 = scmp.eq.s32.totalorder %s37, 3
      %p256 = por %p254, %p255
      %p257 = scmp.ne.s32.totalorder %s248, %s249
      %p258 = scmp.eq.s32.totalorder %s37, 0
      %p259 = por %p257, %p258
      %p260 = scmp.ne.s32.totalorder %s248, %s249
      %p261 = scmp.eq.s32.totalorder %s38, 3
      %p262 = por %p260, %p261
      %p264 = scmp.ne.s32.totalorder %s249, %s263
      %p265 = scmp.eq.s32.totalorder %s38, 0
      %p266 = por %p264, %p265
      %s268 = sadd.s32 %s267, 1
      %p271 = scmp.eq.s32.totalorder %s32, 3
      %p272 = scmp.ne.s32.totalorder %s267, %s269
      %p273 = scmp.eq.s32.totalorder %s32, 0
      %p274 = por %p272, %p273
      %p275 = scmp.ne.s32.totalorder %s267, %s269
      %p276 = scmp.eq.s32.totalorder %s37, 3
      %p277 = por %p275, %p276
      %p278 = scmp.ne.s32.totalorder %s269, %s270
      %p279 = scmp.eq.s32.totalorder %s37, 0
      %p280 = por %p278, %p279
      %p281 = scmp.ne.s32.totalorder %s269, %s270
      %p282 = scmp.eq.s32.totalorder %s38, 3
      %p283 = por %p281, %p282
      %p285 = scmp.ne.s32.totalorder %s270, %s284
      %p286 = scmp.eq.s32.totalorder %s38, 0
      %p287 = por %p285, %p286
      %s289 = sadd.s32 %s288, 1
      %p292 = scmp.eq.s32.totalorder %s32, 3
      %p293 = scmp.ne.s32.totalorder %s288, %s290
      %p294 = scmp.eq.s32.totalorder %s32, 0
      %p295 = por %p293, %p294
      %p296 = scmp.ne.s32.totalorder %s288, %s290
      %p297 = scmp.eq.s32.totalorder %s37, 3
      %p298 = por %p296, %p297
      %p299 = scmp.ne.s32.totalorder %s290, %s291
      %p300 = scmp.eq.s32.totalorder %s37, 0
      %p301 = por %p299, %p300
      %p302 = scmp.ne.s32.totalorder %s290, %s291
      %p303 = scmp.eq.s32.totalorder %s38, 3
      %p304 = por %p302, %p303
      %p306 = scmp.ne.s32.totalorder %s291, %s305
      %p307 = scmp.eq.s32.totalorder %s38, 0
      %p308 = por %p306, %p307
      %s310 = sadd.s32 %s309, 1
      %p313 = scmp.eq.s32.totalorder %s32, 3
      %p314 = scmp.ne.s32.totalorder %s309, %s311
      %p315 = scmp.eq.s32.totalorder %s32, 0
      %p316 = por %p314, %p315
      %p317 = scmp.ne.s32.totalorder %s309, %s311
      %p318 = scmp.eq.s32.totalorder %s37, 3
      %p319 = por %p317, %p318
      %p320 = scmp.ne.s32.totalorder %s311, %s312
      %p321 = scmp.eq.s32.totalorder %s37, 0
      %p322 = por %p320, %p321
      %p323 = scmp.ne.s32.totalorder %s311, %s312
      %p324 = scmp.eq.s32.totalorder %s38, 3
      %p325 = por %p323, %p324
      %p327 = scmp.ne.s32.totalorder %s312, %s326
      %p328 = scmp.eq.s32.totalorder %s38, 0
      %p329 = por %p327, %p328
      %s330 = ssub.s32 %s40, %s47
      %p331 = scmp.eq.s32.totalorder %s330, 0
      %s333 = sadd.s32 %s332, 1
      %s334 = scalar_select %p331, %s332, %s333
      %p337 = pneg %p331
      %p338 = scmp.eq.s32.totalorder %s32, 3
      %p339 = por %p337, %p338
      %p340 = scmp.ne.s32.totalorder %s332, %s335
      %p341 = scmp.eq.s32.totalorder %s32, 0
      %p342 = por %p340, %p341
      %p343 = scmp.ne.s32.totalorder %s332, %s335
      %p344 = scmp.eq.s32.totalorder %s37, 3
      %p345 = por %p343, %p344
      %p346 = scmp.ne.s32.totalorder %s335, %s336
      %p347 = scmp.eq.s32.totalorder %s37, 0
      %p348 = por %p346, %p347
      %p349 = scmp.ne.s32.totalorder %s335, %s336
      %p350 = scmp.eq.s32.totalorder %s38, 3
      %p351 = por %p349, %p350
      %p353 = scmp.ne.s32.totalorder %s336, %s352
      %p354 = scmp.eq.s32.totalorder %s38, 0
      %p355 = por %p353, %p354
      %s356 = ssub.s32 %s40, %s47
      %p357 = scmp.eq.s32.totalorder %s356, 0
      %s359 = sadd.s32 %s358, 1
      %s360 = scalar_select %p357, %s358, %s359
      %p363 = pneg %p357
      %p364 = scmp.eq.s32.totalorder %s32, 3
      %p365 = por %p363, %p364
      %p366 = scmp.ne.s32.totalorder %s358, %s361
      %p367 = scmp.eq.s32.totalorder %s32, 0
      %p368 = por %p366, %p367
      %p369 = scmp.ne.s32.totalorder %s358, %s361
      %p370 = scmp.eq.s32.totalorder %s37, 3
      %p371 = por %p369, %p370
      %p372 = scmp.ne.s32.totalorder %s361, %s362
      %p373 = scmp.eq.s32.totalorder %s37, 0
      %p374 = por %p372, %p373
      %p375 = scmp.ne.s32.totalorder %s361, %s362
      %p376 = scmp.eq.s32.totalorder %s38, 3
      %p377 = por %p375, %p376
      %p379 = scmp.ne.s32.totalorder %s362, %s378
      %p380 = scmp.eq.s32.totalorder %s38, 0
      %p381 = por %p379, %p380
      %s382 = ssub.s32 %s40, %s47
      %p383 = scmp.eq.s32.totalorder %s382, 0
      %s385 = sadd.s32 %s384, 1
      %s386 = scalar_select %p383, %s384, %s385
      %p389 = pneg %p383
      %p390 = scmp.eq.s32.totalorder %s32, 3
      %p391 = por %p389, %p390
      %p392 = scmp.ne.s32.totalorder %s384, %s387
      %p393 = scmp.eq.s32.totalorder %s32, 0
      %p394 = por %p392, %p393
      %p395 = scmp.ne.s32.totalorder %s384, %s387
      %p396 = scmp.eq.s32.totalorder %s37, 3
      %p397 = por %p395, %p396
      %p398 = scmp.ne.s32.totalorder %s387, %s388
      %p399 = scmp.eq.s32.totalorder %s37, 0
      %p400 = por %p398, %p399
      %p401 = scmp.ne.s32.totalorder %s387, %s388
      %p402 = scmp.eq.s32.totalorder %s38, 3
      %p403 = por %p401, %p402
      %p405 = scmp.ne.s32.totalorder %s388, %s404
      %p406 = scmp.eq.s32.totalorder %s38, 0
      %p407 = por %p405, %p406
      %s409 = sadd.s32 %s408, 1
      %p412 = scmp.eq.s32.totalorder %s32, 3
      %p413 = scmp.ne.s32.totalorder %s408, %s410
      %p414 = scmp.eq.s32.totalorder %s32, 0
      %p415 = por %p413, %p414
      %p416 = scmp.ne.s32.totalorder %s408, %s410
      %p417 = scmp.eq.s32.totalorder %s37, 3
      %p418 = por %p416, %p417
      %p419 = scmp.ne.s32.totalorder %s410, %s411
      %p420 = scmp.eq.s32.totalorder %s37, 0
      %p421 = por %p419, %p420
      %p422 = scmp.ne.s32.totalorder %s410, %s411
      %p423 = scmp.eq.s32.totalorder %s38, 3
      %p424 = por %p422, %p423
      %p426 = scmp.ne.s32.totalorder %s411, %s425
      %p427 = scmp.eq.s32.totalorder %s38, 0
      %p428 = por %p426, %p427
      %s429 = ssub.s32 %s39, %s51
      %p430 = scmp.eq.s32.totalorder %s429, 0
      %s432 = sadd.s32 %s431, 1
      %s433 = scalar_select %p430, %s431, %s432
      %p436 = pneg %p430
      %p437 = scmp.eq.s32.totalorder %s32, 3
      %p438 = por %p436, %p437
      %p439 = scmp.ne.s32.totalorder %s431, %s434
      %p440 = scmp.eq.s32.totalorder %s32, 0
      %p441 = por %p439, %p440
      %p442 = scmp.ne.s32.totalorder %s431, %s434
      %p443 = scmp.eq.s32.totalorder %s37, 3
      %p444 = por %p442, %p443
      %p445 = scmp.ne.s32.totalorder %s434, %s435
      %p446 = scmp.eq.s32.totalorder %s37, 0
      %p447 = por %p445, %p446
      %p448 = scmp.ne.s32.totalorder %s434, %s435
      %p449 = scmp.eq.s32.totalorder %s38, 3
      %p450 = por %p448, %p449
      %p452 = scmp.ne.s32.totalorder %s435, %s451
      %p453 = scmp.eq.s32.totalorder %s38, 0
      %p454 = por %p452, %p453
      %p455 = scmp.le.s32.totalorder 1, %s32
      %p456 = scmp.lt.s32.totalorder %s32, 5
      %p457 = pnand %p455, %p456
      %p458 = pneg %p457
      // Predicated region
      $region9: #{tpu_custom_call.1} parent=5 // pred_check
        _
      $region10: #{tpu_custom_call.1} parent=5 // pred_check_branch
        %460 = sbr.rel (%p457) target = $region12
      $region11: #{tpu_custom_call.1} parent=5 // pred_region
        %s461 = ssub.s32 %s32, 1
        // Predicated region
        $region13: #{tpu_custom_call.1} parent=11 // pred_check
          %p462 = pneg %p91
        $region14: #{tpu_custom_call.1} parent=11 // pred_check_branch
          %464 = sbr.rel (%p462) target = $region16
        $region15: #{tpu_custom_call.1} parent=11 // pred_region
          _
        $region16: #{tpu_custom_call.1} parent=11 // pred_fallthru
          _
        // Predicated region
        $region17: #{tpu_custom_call.1} parent=11 // pred_check
          %p465 = pneg %p112
        $region18: #{tpu_custom_call.1} parent=11 // pred_check_branch
          %467 = sbr.rel (%p465) target = $region20
        $region19: #{tpu_custom_call.1} parent=11 // pred_region
          %s469 = ssub.s32 16, 16
          %470 = vsyncadd [#allocation9], %s469
          %s472 = sshll.u32 [#allocation8], 4
          %s473 = int_to_ptr.vmem [resolvable:$true] %s472
          %475 = dma.hbm_to_vmem [thread:$0]  %s2, 16, %s473, [#allocation9]
        $region20: #{tpu_custom_call.1} parent=11 // pred_fallthru
          _
        // Predicated region
        $region21: #{tpu_custom_call.1} parent=11 // pred_check
          %p476 = pneg %p133
        $region22: #{tpu_custom_call.1} parent=11 // pred_check_branch
          %478 = sbr.rel (%p476) target = $region24
        $region23: #{tpu_custom_call.1} parent=11 // pred_region
          %s480 = ssub.s32 8192, 8192
          %481 = vsyncadd [#allocation9], %s480
          %s482 = sshll.u32 [#allocation10], 4
          %s483 = int_to_ptr.vmem [resolvable:$true] %s482
          %488 = dma.hbm_to_vmem [thread:$0]  %s3, 8192, %s483, [#allocation9], 128, 128, 8
        $region24: #{tpu_custom_call.1} parent=11 // pred_fallthru
          _
        // Predicated region
        $region25: #{tpu_custom_call.1} parent=11 // pred_check
          %p489 = pneg %p154
        $region26: #{tpu_custom_call.1} parent=11 // pred_check_branch
          %491 = sbr.rel (%p489) target = $region28
        $region27: #{tpu_custom_call.1} parent=11 // pred_region
          _
        $region28: #{tpu_custom_call.1} parent=11 // pred_fallthru
          _
        // Predicated region
        $region29: #{tpu_custom_call.1} parent=11 // pred_check
          %p492 = pneg %p175
        $region30: #{tpu_custom_call.1} parent=11 // pred_check_branch
          %494 = sbr.rel (%p492) target = $region32
        $region31: #{tpu_custom_call.1} parent=11 // pred_region
          %s496 = ssub.s32 8192, 8192
          %497 = vsyncadd [#allocation12], %s496
          %s498 = sshll.u32 [#allocation11], 4
          %s499 = int_to_ptr.vmem [resolvable:$true] %s498
          %504 = dma.hbm_to_vmem [thread:$0]  %s5, 8192, %s499, [#allocation12], 128, 128, 8
        $region32: #{tpu_custom_call.1} parent=11 // pred_fallthru
          _
        // Predicated region
        $region33: #{tpu_custom_call.1} parent=11 // pred_check
          %p505 = pneg %p196
        $region34: #{tpu_custom_call.1} parent=11 // pred_check_branch
          %507 = sbr.rel (%p505) target = $region36
        $region35: #{tpu_custom_call.1} parent=11 // pred_region
          _
        $region36: #{tpu_custom_call.1} parent=11 // pred_fallthru
          _
        // Predicated region
        $region37: #{tpu_custom_call.1} parent=11 // pred_check
          %p508 = pneg %p217
        $region38: #{tpu_custom_call.1} parent=11 // pred_check_branch
          %510 = sbr.rel (%p508) target = $region40
        $region39: #{tpu_custom_call.1} parent=11 // pred_region
          %s512 = ssub.s32 8192, 8192
          %513 = vsyncadd [#allocation12], %s512
          %s514 = sshll.u32 [#allocation13], 4
          %s515 = int_to_ptr.vmem [resolvable:$true] %s514
          %520 = dma.hbm_to_vmem [thread:$0]  %s7, 8192, %s515, [#allocation12], 128, 128, 8
        $region40: #{tpu_custom_call.1} parent=11 // pred_fallthru
          _
        // Predicated region
        $region41: #{tpu_custom_call.1} parent=11 // pred_check
          %p521 = pneg %p238
        $region42: #{tpu_custom_call.1} parent=11 // pred_check_branch
          %523 = sbr.rel (%p521) target = $region44
        $region43: #{tpu_custom_call.1} parent=11 // pred_region
          _
        $region44: #{tpu_custom_call.1} parent=11 // pred_fallthru
          _
        // Predicated region
        $region45: #{tpu_custom_call.1} parent=11 // pred_check
          %p524 = pneg %p259
        $region46: #{tpu_custom_call.1} parent=11 // pred_check_branch
          %526 = sbr.rel (%p524) target = $region48
        $region47: #{tpu_custom_call.1} parent=11 // pred_region
          %s528 = ssub.s32 8192, 8192
          %529 = vsyncadd [#allocation15], %s528
          %s530 = sshll.u32 [#allocation14], 4
          %s531 = int_to_ptr.vmem [resolvable:$true] %s530
          %536 = dma.hbm_to_vmem [thread:$0]  %s9, 8192, %s531, [#allocation15], 128, 128, 8
        $region48: #{tpu_custom_call.1} parent=11 // pred_fallthru
          _
        // Predicated region
        $region49: #{tpu_custom_call.1} parent=11 // pred_check
          %p537 = pneg %p280
        $region50: #{tpu_custom_call.1} parent=11 // pred_check_branch
          %539 = sbr.rel (%p537) target = $region52
        $region51: #{tpu_custom_call.1} parent=11 // pred_region
          _
        $region52: #{tpu_custom_call.1} parent=11 // pred_fallthru
          _
        // Predicated region
        $region53: #{tpu_custom_call.1} parent=11 // pred_check
          %p540 = pneg %p301
        $region54: #{tpu_custom_call.1} parent=11 // pred_check_branch
          %542 = sbr.rel (%p540) target = $region56
        $region55: #{tpu_custom_call.1} parent=11 // pred_region
          _
        $region56: #{tpu_custom_call.1} parent=11 // pred_fallthru
          _
        // Predicated region
        $region57: #{tpu_custom_call.1} parent=11 // pred_check
          %p543 = pneg %p322
        $region58: #{tpu_custom_call.1} parent=11 // pred_check_branch
          %545 = sbr.rel (%p543) target = $region60
        $region59: #{tpu_custom_call.1} parent=11 // pred_region
          _
        $region60: #{tpu_custom_call.1} parent=11 // pred_fallthru
          _
        // Predicated region
        $region61: #{tpu_custom_call.1} parent=11 // pred_check
          %p546 = pneg %p421
        $region62: #{tpu_custom_call.1} parent=11 // pred_check_branch
          %548 = sbr.rel (%p546) target = $region64
        $region63: #{tpu_custom_call.1} parent=11 // pred_region
          _
        $region64: #{tpu_custom_call.1} parent=11 // pred_fallthru
          _
      $region12: #{tpu_custom_call.1} parent=5 // pred_fallthru
        _
      %p549 = scmp.lt.s32.totalorder %s32, 4
      // Predicated region
      $region65: #{tpu_custom_call.1} parent=5 // pred_check
        %p550 = pneg %p549
      $region66: #{tpu_custom_call.1} parent=5 // pred_check_branch
        %552 = sbr.rel (%p550) target = $region68
      $region67: #{tpu_custom_call.1} parent=5 // pred_region
        // Predicated region
        $region69: #{tpu_custom_call.1} parent=67 // pred_check
          %p553 = pneg %p64
        $region70: #{tpu_custom_call.1} parent=67 // pred_check_branch
          %555 = sbr.rel (%p553) target = $region72
        $region71: #{tpu_custom_call.1} parent=67 // pred_region
          %s556 = sand.u32 %s32, 1
          %s557 = scalar_lea.sflag [#allocation6], %s556
          %s558 = sand.u32 %s54, 1
          %s559 = smul.addr %s558, 16
          %s560 = scalar_lea.vmem [#allocation5], %s559
          %s562 = ssub.s32 256, 256
          %563 = vsyncadd %s557, %s562
          %s564 = smul.addr %s39, 2
          %s565 = smul.addr %s564, 128
          %s566 = scalar_lea.hbm %s0, %s565
          %s567 = sshll.u32 %s560, 4
          %s568 = int_to_ptr.vmem [resolvable:$true] %s567
          %573 = dma.hbm_to_vmem [thread:$0]  %s566, 256, %s568, %s557, 128, 128, 8
        $region72: #{tpu_custom_call.1} parent=67 // pred_fallthru
          _
        // Predicated region
        $region73: #{tpu_custom_call.1} parent=67 // pred_check
          %p574 = pneg %p342
        $region74: #{tpu_custom_call.1} parent=67 // pred_check_branch
          %576 = sbr.rel (%p574) target = $region76
        $region75: #{tpu_custom_call.1} parent=67 // pred_region
          %s577 = sand.u32 %s32, 1
          %s578 = scalar_lea.sflag [#allocation6], %s577
          %s579 = sand.u32 %s332, 1
          %s580 = smul.addr %s579, 128
          %s581 = scalar_lea.vmem [#allocation16], %s580
          %s583 = ssub.s32 2048, 2048
          %584 = vsyncadd %s578, %s583
          %s585 = smul.addr %s40, 128
          %s586 = scalar_lea.hbm %s13, %s585
          %s587 = sshll.u32 %s581, 4
          %s588 = int_to_ptr.vmem [resolvable:$true] %s587
          %593 = dma.hbm_to_vmem [thread:$0]  %s586, 2048, %s588, %s578, 256, 128, 8
        $region76: #{tpu_custom_call.1} parent=67 // pred_fallthru
          _
        // Predicated region
        $region77: #{tpu_custom_call.1} parent=67 // pred_check
          %p594 = pneg %p368
        $region78: #{tpu_custom_call.1} parent=67 // pred_check_branch
          %596 = sbr.rel (%p594) target = $region80
        $region79: #{tpu_custom_call.1} parent=67 // pred_region
          %p597 = scmp.lt.s32.totalorder %s40, 1
          %s598 = scalar_select %p597, %s40, 1
          %s599 = scalar_lea.vmem %s14, %s598
        $region80: #{tpu_custom_call.1} parent=67 // pred_fallthru
          _
        // Predicated region
        $region81: #{tpu_custom_call.1} parent=67 // pred_check
          %p600 = pneg %p394
        $region82: #{tpu_custom_call.1} parent=67 // pred_check_branch
          %602 = sbr.rel (%p600) target = $region84
        $region83: #{tpu_custom_call.1} parent=67 // pred_region
          %s603 = sand.u32 %s32, 1
          %s604 = scalar_lea.sflag [#allocation6], %s603
          %s605 = sand.u32 %s384, 1
          %s606 = smul.addr %s605, 128
          %s607 = scalar_lea.vmem [#allocation17], %s606
          %s608 = smul.u32 16, %s40
          %s610 = ssub.s32 2048, 2048
          %611 = vsyncadd %s604, %s610
          %s612 = smul.addr %s608, 128
          %s613 = scalar_lea.hbm %s15, %s612
          %s614 = sshll.u32 %s607, 4
          %s615 = int_to_ptr.vmem [resolvable:$true] %s614
          %620 = dma.hbm_to_vmem [thread:$0]  %s613, 2048, %s615, %s604, 128, 128, 8
        $region84: #{tpu_custom_call.1} parent=67 // pred_fallthru
          _
      $region68: #{tpu_custom_call.1} parent=5 // pred_fallthru
        _
      %p621 = scmp.le.s32.totalorder 1, %s32
      %p622 = scmp.lt.s32.totalorder %s32, 5
      %p623 = pnand %p621, %p622
      %p624 = pneg %p623
      // Predicated region
      $region85: #{tpu_custom_call.1} parent=5 // pred_check
        _
      $region86: #{tpu_custom_call.1} parent=5 // pred_check_branch
        %626 = sbr.rel (%p623) target = $region88
      $region87: #{tpu_custom_call.1} parent=5 // pred_region
        %s627 = ssub.s32 %s32, 1
        %s628 = sand.u32 %s37, 1
        %s629 = scalar_lea.sflag [#allocation6], %s628
        %s630 = sand.u32 %s57, 1
        %s631 = smul.addr %s630, 16
        %s632 = scalar_lea.vmem [#allocation5], %s631
        // Predicated region
        $region89: #{tpu_custom_call.1} parent=87 // pred_check
          %p633 = pneg %p70
        $region90: #{tpu_custom_call.1} parent=87 // pred_check_branch
          %635 = sbr.rel (%p633) target = $region92
        $region91: #{tpu_custom_call.1} parent=87 // pred_region
          %636 = dma.done %s629, 256
        $region92: #{tpu_custom_call.1} parent=87 // pred_fallthru
          _
        // Predicated region
        $region93: #{tpu_custom_call.1} parent=87 // pred_check
          %p637 = pneg %p112
        $region94: #{tpu_custom_call.1} parent=87 // pred_check_branch
          %639 = sbr.rel (%p637) target = $region96
        $region95: #{tpu_custom_call.1} parent=87 // pred_region
          %640 = dma.done [#allocation9], 16
        $region96: #{tpu_custom_call.1} parent=87 // pred_fallthru
          _
        // Predicated region
        $region97: #{tpu_custom_call.1} parent=87 // pred_check
          %p641 = pneg %p133
        $region98: #{tpu_custom_call.1} parent=87 // pred_check_branch
          %643 = sbr.rel (%p641) target = $region100
        $region99: #{tpu_custom_call.1} parent=87 // pred_region
          %644 = dma.done [#allocation9], 8192
        $region100: #{tpu_custom_call.1} parent=87 // pred_fallthru
          _
        // Predicated region
        $region101: #{tpu_custom_call.1} parent=87 // pred_check
          %p645 = pneg %p175
        $region102: #{tpu_custom_call.1} parent=87 // pred_check_branch
          %647 = sbr.rel (%p645) target = $region104
        $region103: #{tpu_custom_call.1} parent=87 // pred_region
          %648 = dma.done [#allocation12], 8192
        $region104: #{tpu_custom_call.1} parent=87 // pred_fallthru
          _
        // Predicated region
        $region105: #{tpu_custom_call.1} parent=87 // pred_check
          %p649 = pneg %p217
        $region106: #{tpu_custom_call.1} parent=87 // pred_check_branch
          %651 = sbr.rel (%p649) target = $region108
        $region107: #{tpu_custom_call.1} parent=87 // pred_region
          %652 = dma.done [#allocation12], 8192
        $region108: #{tpu_custom_call.1} parent=87 // pred_fallthru
          _
        // Predicated region
        $region109: #{tpu_custom_call.1} parent=87 // pred_check
          %p653 = pneg %p259
        $region110: #{tpu_custom_call.1} parent=87 // pred_check_branch
          %655 = sbr.rel (%p653) target = $region112
        $region111: #{tpu_custom_call.1} parent=87 // pred_region
          %656 = dma.done [#allocation15], 8192
        $region112: #{tpu_custom_call.1} parent=87 // pred_fallthru
          _
        %s657 = sand.u32 %s37, 1
        %s658 = scalar_lea.sflag [#allocation6], %s657
        %s659 = sand.u32 %s335, 1
        %s660 = smul.addr %s659, 128
        %s661 = scalar_lea.vmem [#allocation16], %s660
        // Predicated region
        $region113: #{tpu_custom_call.1} parent=87 // pred_check
          %p662 = pneg %p348
        $region114: #{tpu_custom_call.1} parent=87 // pred_check_branch
          %664 = sbr.rel (%p662) target = $region116
        $region115: #{tpu_custom_call.1} parent=87 // pred_region
          %665 = dma.done %s658, 2048
        $region116: #{tpu_custom_call.1} parent=87 // pred_fallthru
          _
        %s666 = sand.u32 %s37, 1
        %s667 = scalar_lea.sflag [#allocation6], %s666
        %s668 = sand.u32 %s387, 1
        %s669 = smul.addr %s668, 128
        %s670 = scalar_lea.vmem [#allocation17], %s669
        // Predicated region
        $region117: #{tpu_custom_call.1} parent=87 // pred_check
          %p671 = pneg %p400
        $region118: #{tpu_custom_call.1} parent=87 // pred_check_branch
          %673 = sbr.rel (%p671) target = $region120
        $region119: #{tpu_custom_call.1} parent=87 // pred_region
          %674 = dma.done %s667, 2048
        $region120: #{tpu_custom_call.1} parent=87 // pred_fallthru
          _
        %s675 = sand.u32 %s37, 1
        %s676 = scalar_lea.sflag [#allocation6], %s675
        %s677 = sand.u32 %s57, 1
        %s678 = smul.addr %s677, 16
        %s679 = scalar_lea.vmem [#allocation5], %s678
        %p680 = pneg %p70
        %p681 = pneg %p67
        %p682 = pneg %p91
        %p683 = pneg %p88
        %p684 = pneg %p112
        %p685 = pneg %p109
        %p686 = pneg %p133
        %p687 = pneg %p130
        %p688 = pneg %p154
        %p689 = pneg %p151
        %p690 = pneg %p175
        %p691 = pneg %p172
        %p692 = pneg %p196
        %p693 = pneg %p193
        %p694 = pneg %p217
        %p695 = pneg %p214
        %p696 = pneg %p238
        %p697 = pneg %p235
        %p698 = pneg %p259
        %p699 = pneg %p256
        %p700 = pneg %p280
        %p701 = pneg %p277
        %p702 = pneg %p301
        %p703 = pneg %p298
        %p704 = pneg %p322
        %p705 = pneg %p319
        %s706 = sand.u32 %s37, 1
        %s707 = scalar_lea.sflag [#allocation6], %s706
        %s708 = sand.u32 %s335, 1
        %s709 = smul.addr %s708, 128
        %s710 = scalar_lea.vmem [#allocation16], %s709
        %p711 = pneg %p348
        %p712 = pneg %p345
        %p713 = scmp.lt.s32.totalorder %s42, 1
        %s714 = scalar_select %p713, %s42, 1
        %s715 = scalar_lea.vmem %s14, %s714
        %p716 = pneg %p374
        %p717 = pneg %p371
        %s718 = sand.u32 %s37, 1
        %s719 = scalar_lea.sflag [#allocation6], %s718
        %s720 = sand.u32 %s387, 1
        %s721 = smul.addr %s720, 128
        %s722 = scalar_lea.vmem [#allocation17], %s721
        %p723 = pneg %p400
        %p724 = pneg %p397
        %p725 = pneg %p421
        %p726 = pneg %p418
        %p727 = pneg %p447
        %p728 = pneg %p444
        %s729 = sand.u32 %s434, 1
        %s730 = scalar_lea.sflag [#allocation7], %s729
        %s731 = sand.u32 %s434, 1
        %s732 = smul.addr %s731, 16
        %s733 = scalar_lea.vmem [#allocation18], %s732
        %p734 = scmp.lt.s32.totalorder %s42, 1
        %s735 = scalar_select %p734, %s42, 1
        %s736 = scalar_lea.vmem %s14, %s735
        %s737 = smul.u32 16, %s42
        %p738 = scmp.eq.s32.totalorder %s42, 0
        // Predicated region
        $region121: #{tpu_custom_call.1} parent=87 // pred_check
          %p739 = pneg %p738
        $region122: #{tpu_custom_call.1} parent=87 // pred_check_branch
          %741 = sbr.rel (%p739) target = $region124
        $region123: #{tpu_custom_call.1} parent=87 // pred_region
          %v742 = vld [vmem:[%s632] sm:$0xff]
          %v743 = vld [vmem:[%s632 + $0x8] sm:$0xff]
          %v744 = vld [vmem:[%s1] sm:$0x1]
          %v745 = vld [vmem:[#allocation8] sm:$0x1]
          %746 = vadd.xlane.f32.xlu0 %v742
          %v747 = vpop.xlane.xlu0 %746
          %748 = vadd.xlane.f32.xlu0 %v743
          %v749 = vpop.xlane.xlu0 %748
          %v750 = vrcp.pop 128.0
          %v751 = vmul.f32 %v747, %v750
          %v752 = vmul.f32 %v749, %v750
          %v753 = vsub.f32 %v742, %v751
          %v754 = vsub.f32 %v743, %v752
          %v755 = vmul.f32 %v753, %v753
          %v756 = vmul.f32 %v754, %v754
          %757 = vadd.xlane.f32.xlu0 %v755
          %v758 = vpop.xlane.xlu0 %757
          %759 = vadd.xlane.f32.xlu0 %v756
          %v760 = vpop.xlane.xlu0 %759
          %v761 = vmul.f32 %v758, %v750
          %v762 = vmul.f32 %v760, %v750
          %v763 = vadd.f32 %v761, 1e-06
          %v764 = vadd.f32 %v762, 1e-06
          %v765 = vrsqrt.pop %v763
          %v766 = vrsqrt.pop %v764
          %v767 = vmul.f32 %v753, %v765
          %v768 = vmul.f32 %v754, %v766
          %v770 = vlaneseq
          %v771 = vshrl.u32 %v770, 7
          %v772 = vsub.s32 0, %v771
          %v773 = vrot.slane %v744, %v772
          %v775 = vmul.f32 %v767, %v773
          %v776 = vmul.f32 %v768, %v773
          %v778 = vlaneseq
          %v779 = vshrl.u32 %v778, 7
          %v780 = vsub.s32 0, %v779
          %v781 = vrot.slane %v745, %v780
          %v783 = vadd.f32 %v775, %v781
          %v784 = vadd.f32 %v776, %v781
          loop: start=0, step=1, limit=4
          $region125: #{tpu_custom_call.1} parent=123 // loop_pre_header
            _
          $region126: #{tpu_custom_call.1} parent=123 // loop_header
            %s786 = sphi 0, %s790
            %p787 = scmp.ge.s32.totalorder %s786, 4
            %v791 = vphi 0.0, %v1365
            %v792 = vphi 0.0, %v1366
          $region127: #{tpu_custom_call.1} parent=123 // loop_header_branch
            %789 = sbr.rel (%p787) target = $region131
          $region128: #{tpu_custom_call.1} parent=123 // loop_body
            %s793 = smul.u32 %s786, 128
            %s794 = scalar_lea.vmem [#allocation10], %s793
            %v795 = vld [vmem:[%s794] sm:$0xff]
            %v796 = vld [vmem:[%s794 + $0x8] sm:$0xff]
            %v797 = vld [vmem:[%s794 + $0x10] sm:$0xff]
            %v798 = vld [vmem:[%s794 + $0x18] sm:$0xff]
            %v799 = vld [vmem:[%s794 + $0x20] sm:$0xff]
            %v800 = vld [vmem:[%s794 + $0x28] sm:$0xff]
            %v801 = vld [vmem:[%s794 + $0x30] sm:$0xff]
            %v802 = vld [vmem:[%s794 + $0x38] sm:$0xff]
            %v803 = vld [vmem:[%s794 + $0x40] sm:$0xff]
            %v804 = vld [vmem:[%s794 + $0x48] sm:$0xff]
            %v805 = vld [vmem:[%s794 + $0x50] sm:$0xff]
            %v806 = vld [vmem:[%s794 + $0x58] sm:$0xff]
            %v807 = vld [vmem:[%s794 + $0x60] sm:$0xff]
            %v808 = vld [vmem:[%s794 + $0x68] sm:$0xff]
            %v809 = vld [vmem:[%s794 + $0x70] sm:$0xff]
            %v810 = vld [vmem:[%s794 + $0x78] sm:$0xff]
            %s811 = scalar_lea.vmem %s4, %s786
            %v812 = vld [vmem:[%s811] sm:$0x1]
            %v814 = vlaneseq
            %v815 = vshrl.u32 %v814, 7
            %v816 = vsub.s32 0, %v815
            %v817 = vrot.slane %v812, %v816
            %819 = vmatprep.subr.mxu0 0.0
            %820 = vmatpush1.msra.mxu0 %v795
            %821 = vmatprep.subr.mxu0 0.0
            %822 = vmatpush1.msra.mxu0 %v796
            %823 = vmatprep.subr.mxu0 0.0
            %824 = vmatpush1.msra.mxu0 %v797
            %825 = vmatprep.subr.mxu0 0.0
            %826 = vmatpush1.msra.mxu0 %v798
            %827 = vmatprep.subr.mxu0 0.0
            %828 = vmatpush1.msra.mxu0 %v799
            %829 = vmatprep.subr.mxu0 0.0
            %830 = vmatpush1.msra.mxu0 %v800
            %831 = vmatprep.subr.mxu0 0.0
            %832 = vmatpush1.msra.mxu0 %v801
            %833 = vmatprep.subr.mxu0 0.0
            %834 = vmatpush1.msra.mxu0 %v802
            %835 = vmatprep.subr.mxu0 0.0
            %836 = vmatpush1.msra.mxu0 %v803
            %837 = vmatprep.subr.mxu0 0.0
            %838 = vmatpush1.msra.mxu0 %v804
            %839 = vmatprep.subr.mxu0 0.0
            %840 = vmatpush1.msra.mxu0 %v805
            %841 = vmatprep.subr.mxu0 0.0
            %842 = vmatpush1.msra.mxu0 %v806
            %843 = vmatprep.subr.mxu0 0.0
            %844 = vmatpush1.msra.mxu0 %v807
            %845 = vmatprep.subr.mxu0 0.0
            %846 = vmatpush1.msra.mxu0 %v808
            %847 = vmatprep.subr.mxu0 0.0
            %848 = vmatpush1.msra.mxu0 %v809
            %849 = vmatprep.subr.mxu0 0.0
            %850 = vmatpush1.msra.mxu0 %v810
            %851 = vmatprep.subr.mxu0 0.0
            %852 = vmatpush1.msra.mxu0 0.0
            %853 = vmatprep.subr.mxu0 0.0
            %854 = vmatpush1.msra.mxu0 0.0
            %855 = vmatprep.subr.mxu0 0.0
            %856 = vmatpush1.msra.mxu0 0.0
            %857 = vmatprep.subr.mxu0 0.0
            %858 = vmatpush1.msra.mxu0 0.0
            %859 = vmatprep.subr.mxu0 0.0
            %860 = vmatpush1.msra.mxu0 0.0
            %861 = vmatprep.subr.mxu0 0.0
            %862 = vmatpush1.msra.mxu0 0.0
            %863 = vmatprep.subr.mxu0 0.0
            %864 = vmatpush1.msra.mxu0 0.0
            %865 = vmatprep.subr.mxu0 0.0
            %866 = vmatpush1.msra.mxu0 0.0
            %867 = vmatprep.subr.mxu0 0.0
            %868 = vmatpush1.msra.mxu0 0.0
            %869 = vmatprep.subr.mxu0 0.0
            %870 = vmatpush1.msra.mxu0 0.0
            %871 = vmatprep.subr.mxu0 0.0
            %872 = vmatpush1.msra.mxu0 0.0
            %873 = vmatprep.subr.mxu0 0.0
            %874 = vmatpush1.msra.mxu0 0.0
            %875 = vmatprep.subr.mxu0 0.0
            %876 = vmatpush1.msra.mxu0 0.0
            %877 = vmatprep.subr.mxu0 0.0
            %878 = vmatpush1.msra.mxu0 0.0
            %879 = vmatprep.subr.mxu0 0.0
            %880 = vmatpush1.msra.mxu0 0.0
            %881 = vmatprep.subr.mxu0 0.0
            %882 = vmatpush1.msra.mxu0 0.0
            %883 = vmatprep.mubr.f32.mxu0 0.0
            %884 = vmatmul.mubr.f32.gmra.mrb[0].mxu0 %v783
            %v885 = vpop.f32.mrb[0].mxu0
            %v886 = vadd.f32 %v817, %v885
            %v887 = vpop.f32.mrb[0].mxu0
            %888 = vmatprep.mubr.f32.mxu0 0.0
            %889 = vmatmul.mubr.f32.gmra.mrb[0].mxu0 %v784
            %v890 = vpop.f32.mrb[0].mxu0
            %v891 = vadd.f32 %v817, %v890
            %v892 = vpop.f32.mrb[0].mxu0
            %893 = vdwg.mxu0
            %s894 = scalar_lea.vmem [#allocation11], %s793
            %v895 = vld [vmem:[%s894] sm:$0xff]
            %v896 = vld [vmem:[%s894 + $0x8] sm:$0xff]
            %v897 = vld [vmem:[%s894 + $0x10] sm:$0xff]
            %v898 = vld [vmem:[%s894 + $0x18] sm:$0xff]
            %v899 = vld [vmem:[%s894 + $0x20] sm:$0xff]
            %v900 = vld [vmem:[%s894 + $0x28] sm:$0xff]
            %v901 = vld [vmem:[%s894 + $0x30] sm:$0xff]
            %v902 = vld [vmem:[%s894 + $0x38] sm:$0xff]
            %v903 = vld [vmem:[%s894 + $0x40] sm:$0xff]
            %v904 = vld [vmem:[%s894 + $0x48] sm:$0xff]
            %v905 = vld [vmem:[%s894 + $0x50] sm:$0xff]
            %v906 = vld [vmem:[%s894 + $0x58] sm:$0xff]
            %v907 = vld [vmem:[%s894 + $0x60] sm:$0xff]
            %v908 = vld [vmem:[%s894 + $0x68] sm:$0xff]
            %v909 = vld [vmem:[%s894 + $0x70] sm:$0xff]
            %v910 = vld [vmem:[%s894 + $0x78] sm:$0xff]
            %s911 = scalar_lea.vmem %s6, %s786
            %v912 = vld [vmem:[%s911] sm:$0x1]
            %v914 = vlaneseq
            %v915 = vshrl.u32 %v914, 7
            %v916 = vsub.s32 0, %v915
            %v917 = vrot.slane %v912, %v916
            %919 = vmatprep.subr.mxu0 0.0
            %920 = vmatpush1.msra.mxu0 %v895
            %921 = vmatprep.subr.mxu0 0.0
            %922 = vmatpush1.msra.mxu0 %v896
            %923 = vmatprep.subr.mxu0 0.0
            %924 = vmatpush1.msra.mxu0 %v897
            %925 = vmatprep.subr.mxu0 0.0
            %926 = vmatpush1.msra.mxu0 %v898
            %927 = vmatprep.subr.mxu0 0.0
            %928 = vmatpush1.msra.mxu0 %v899
            %929 = vmatprep.subr.mxu0 0.0
            %930 = vmatpush1.msra.mxu0 %v900
            %931 = vmatprep.subr.mxu0 0.0
            %932 = vmatpush1.msra.mxu0 %v901
            %933 = vmatprep.subr.mxu0 0.0
            %934 = vmatpush1.msra.mxu0 %v902
            %935 = vmatprep.subr.mxu0 0.0
            %936 = vmatpush1.msra.mxu0 %v903
            %937 = vmatprep.subr.mxu0 0.0
            %938 = vmatpush1.msra.mxu0 %v904
            %939 = vmatprep.subr.mxu0 0.0
            %940 = vmatpush1.msra.mxu0 %v905
            %941 = vmatprep.subr.mxu0 0.0
            %942 = vmatpush1.msra.mxu0 %v906
            %943 = vmatprep.subr.mxu0 0.0
            %944 = vmatpush1.msra.mxu0 %v907
            %945 = vmatprep.subr.mxu0 0.0
            %946 = vmatpush1.msra.mxu0 %v908
            %947 = vmatprep.subr.mxu0 0.0
            %948 = vmatpush1.msra.mxu0 %v909
            %949 = vmatprep.subr.mxu0 0.0
            %950 = vmatpush1.msra.mxu0 %v910
            %951 = vmatprep.subr.mxu0 0.0
            %952 = vmatpush1.msra.mxu0 0.0
            %953 = vmatprep.subr.mxu0 0.0
            %954 = vmatpush1.msra.mxu0 0.0
            %955 = vmatprep.subr.mxu0 0.0
            %956 = vmatpush1.msra.mxu0 0.0
            %957 = vmatprep.subr.mxu0 0.0
            %958 = vmatpush1.msra.mxu0 0.0
            %959 = vmatprep.subr.mxu0 0.0
            %960 = vmatpush1.msra.mxu0 0.0
            %961 = vmatprep.subr.mxu0 0.0
            %962 = vmatpush1.msra.mxu0 0.0
            %963 = vmatprep.subr.mxu0 0.0
            %964 = vmatpush1.msra.mxu0 0.0
            %965 = vmatprep.subr.mxu0 0.0
            %966 = vmatpush1.msra.mxu0 0.0
            %967 = vmatprep.subr.mxu0 0.0
            %968 = vmatpush1.msra.mxu0 0.0
            %969 = vmatprep.subr.mxu0 0.0
            %970 = vmatpush1.msra.mxu0 0.0
            %971 = vmatprep.subr.mxu0 0.0
            %972 = vmatpush1.msra.mxu0 0.0
            %973 = vmatprep.subr.mxu0 0.0
            %974 = vmatpush1.msra.mxu0 0.0
            %975 = vmatprep.subr.mxu0 0.0
            %976 = vmatpush1.msra.mxu0 0.0
            %977 = vmatprep.subr.mxu0 0.0
            %978 = vmatpush1.msra.mxu0 0.0
            %979 = vmatprep.subr.mxu0 0.0
            %980 = vmatpush1.msra.mxu0 0.0
            %981 = vmatprep.subr.mxu0 0.0
            %982 = vmatpush1.msra.mxu0 0.0
            %983 = vmatprep.mubr.f32.mxu0 0.0
            %984 = vmatmul.mubr.f32.gmra.mrb[0].mxu0 %v783
            %v985 = vpop.f32.mrb[0].mxu0
            %v986 = vadd.f32 %v917, %v985
            %v987 = vpop.f32.mrb[0].mxu0
            %988 = vmatprep.mubr.f32.mxu0 0.0
            %989 = vmatmul.mubr.f32.gmra.mrb[0].mxu0 %v784
            %v990 = vpop.f32.mrb[0].mxu0
            %v991 = vadd.f32 %v917, %v990
            %v992 = vpop.f32.mrb[0].mxu0
            %993 = vdwg.mxu0
            %s994 = scalar_lea.vmem [#allocation13], %s793
            %v995 = vld [vmem:[%s994] sm:$0xff]
            %v996 = vld [vmem:[%s994 + $0x8] sm:$0xff]
            %v997 = vld [vmem:[%s994 + $0x10] sm:$0xff]
            %v998 = vld [vmem:[%s994 + $0x18] sm:$0xff]
            %v999 = vld [vmem:[%s994 + $0x20] sm:$0xff]
            %v1000 = vld [vmem:[%s994 + $0x28] sm:$0xff]
            %v1001 = vld [vmem:[%s994 + $0x30] sm:$0xff]
            %v1002 = vld [vmem:[%s994 + $0x38] sm:$0xff]
            %v1003 = vld [vmem:[%s994 + $0x40] sm:$0xff]
            %v1004 = vld [vmem:[%s994 + $0x48] sm:$0xff]
            %v1005 = vld [vmem:[%s994 + $0x50] sm:$0xff]
            %v1006 = vld [vmem:[%s994 + $0x58] sm:$0xff]
            %v1007 = vld [vmem:[%s994 + $0x60] sm:$0xff]
            %v1008 = vld [vmem:[%s994 + $0x68] sm:$0xff]
            %v1009 = vld [vmem:[%s994 + $0x70] sm:$0xff]
            %v1010 = vld [vmem:[%s994 + $0x78] sm:$0xff]
            %s1011 = scalar_lea.vmem %s8, %s786
            %v1012 = vld [vmem:[%s1011] sm:$0x1]
            %v1014 = vlaneseq
            %v1015 = vshrl.u32 %v1014, 7
            %v1016 = vsub.s32 0, %v1015
            %v1017 = vrot.slane %v1012, %v1016
            %1019 = vmatprep.subr.mxu0 0.0
            %1020 = vmatpush1.msra.mxu0 %v995
            %1021 = vmatprep.subr.mxu0 0.0
            %1022 = vmatpush1.msra.mxu0 %v996
            %1023 = vmatprep.subr.mxu0 0.0
            %1024 = vmatpush1.msra.mxu0 %v997
            %1025 = vmatprep.subr.mxu0 0.0
            %1026 = vmatpush1.msra.mxu0 %v998
            %1027 = vmatprep.subr.mxu0 0.0
            %1028 = vmatpush1.msra.mxu0 %v999
            %1029 = vmatprep.subr.mxu0 0.0
            %1030 = vmatpush1.msra.mxu0 %v1000
            %1031 = vmatprep.subr.mxu0 0.0
            %1032 = vmatpush1.msra.mxu0 %v1001
            %1033 = vmatprep.subr.mxu0 0.0
            %1034 = vmatpush1.msra.mxu0 %v1002
            %1035 = vmatprep.subr.mxu0 0.0
            %1036 = vmatpush1.msra.mxu0 %v1003
            %1037 = vmatprep.subr.mxu0 0.0
            %1038 = vmatpush1.msra.mxu0 %v1004
            %1039 = vmatprep.subr.mxu0 0.0
            %1040 = vmatpush1.msra.mxu0 %v1005
            %1041 = vmatprep.subr.mxu0 0.0
            %1042 = vmatpush1.msra.mxu0 %v1006
            %1043 = vmatprep.subr.mxu0 0.0
            %1044 = vmatpush1.msra.mxu0 %v1007
            %1045 = vmatprep.subr.mxu0 0.0
            %1046 = vmatpush1.msra.mxu0 %v1008
            %1047 = vmatprep.subr.mxu0 0.0
            %1048 = vmatpush1.msra.mxu0 %v1009
            %1049 = vmatprep.subr.mxu0 0.0
            %1050 = vmatpush1.msra.mxu0 %v1010
            %1051 = vmatprep.subr.mxu0 0.0
            %1052 = vmatpush1.msra.mxu0 0.0
            %1053 = vmatprep.subr.mxu0 0.0
            %1054 = vmatpush1.msra.mxu0 0.0
            %1055 = vmatprep.subr.mxu0 0.0
            %1056 = vmatpush1.msra.mxu0 0.0
            %1057 = vmatprep.subr.mxu0 0.0
            %1058 = vmatpush1.msra.mxu0 0.0
            %1059 = vmatprep.subr.mxu0 0.0
            %1060 = vmatpush1.msra.mxu0 0.0
            %1061 = vmatprep.subr.mxu0 0.0
            %1062 = vmatpush1.msra.mxu0 0.0
            %1063 = vmatprep.subr.mxu0 0.0
            %1064 = vmatpush1.msra.mxu0 0.0
            %1065 = vmatprep.subr.mxu0 0.0
            %1066 = vmatpush1.msra.mxu0 0.0
            %1067 = vmatprep.subr.mxu0 0.0
            %1068 = vmatpush1.msra.mxu0 0.0
            %1069 = vmatprep.subr.mxu0 0.0
            %1070 = vmatpush1.msra.mxu0 0.0
            %1071 = vmatprep.subr.mxu0 0.0
            %1072 = vmatpush1.msra.mxu0 0.0
            %1073 = vmatprep.subr.mxu0 0.0
            %1074 = vmatpush1.msra.mxu0 0.0
            %1075 = vmatprep.subr.mxu0 0.0
            %1076 = vmatpush1.msra.mxu0 0.0
            %1077 = vmatprep.subr.mxu0 0.0
            %1078 = vmatpush1.msra.mxu0 0.0
            %1079 = vmatprep.subr.mxu0 0.0
            %1080 = vmatpush1.msra.mxu0 0.0
            %1081 = vmatprep.subr.mxu0 0.0
            %1082 = vmatpush1.msra.mxu0 0.0
            %1083 = vmatprep.mubr.f32.mxu0 0.0
            %1084 = vmatmul.mubr.f32.gmra.mrb[0].mxu0 %v783
            %v1085 = vpop.f32.mrb[0].mxu0
            %v1086 = vadd.f32 %v1017, %v1085
            %v1087 = vpop.f32.mrb[0].mxu0
            %1088 = vmatprep.mubr.f32.mxu0 0.0
            %1089 = vmatmul.mubr.f32.gmra.mrb[0].mxu0 %v784
            %v1090 = vpop.f32.mrb[0].mxu0
            %v1091 = vadd.f32 %v1017, %v1090
            %v1092 = vpop.f32.mrb[0].mxu0
            %1093 = vdwg.mxu0
            %1094 = vmatprep.subr.mxu0 0.0
            %1095 = vmatpush1.xpose.msra.mxu0 %v986
            %1096 = vmatprep.subr.mxu0 0.0
            %1097 = vmatpush1.xpose.msra.mxu0 %v991
            %1098 = vmatprep.subr.mxu0 0.0
            %1099 = vmatpush1.xpose.msra.mxu0 0.0
            %1100 = vmatprep.subr.mxu0 0.0
            %1101 = vmatpush1.xpose.msra.mxu0 0.0
            %1102 = vmatprep.subr.mxu0 0.0
            %1103 = vmatpush1.xpose.msra.mxu0 0.0
            %1104 = vmatprep.subr.mxu0 0.0
            %1105 = vmatpush1.xpose.msra.mxu0 0.0
            %1106 = vmatprep.subr.mxu0 0.0
            %1107 = vmatpush1.xpose.msra.mxu0 0.0
            %1108 = vmatprep.subr.mxu0 0.0
            %1109 = vmatpush1.xpose.msra.mxu0 0.0
            %1110 = vmatprep.subr.mxu0 0.0
            %1111 = vmatpush1.xpose.msra.mxu0 0.0
            %1112 = vmatprep.subr.mxu0 0.0
            %1113 = vmatpush1.xpose.msra.mxu0 0.0
            %1114 = vmatprep.subr.mxu0 0.0
            %1115 = vmatpush1.xpose.msra.mxu0 0.0
            %1116 = vmatprep.subr.mxu0 0.0
            %1117 = vmatpush1.xpose.msra.mxu0 0.0
            %1118 = vmatprep.subr.mxu0 0.0
            %1119 = vmatpush1.xpose.msra.mxu0 0.0
            %1120 = vmatprep.subr.mxu0 0.0
            %1121 = vmatpush1.xpose.msra.mxu0 0.0
            %1122 = vmatprep.subr.mxu0 0.0
            %1123 = vmatpush1.xpose.msra.mxu0 0.0
            %1124 = vmatprep.subr.mxu0 0.0
            %1125 = vmatpush1.xpose.msra.mxu0 0.0
            %1126 = vmatprep.subr.mxu0 0.0
            %1127 = vmatpush1.xpose.msra.mxu0 0.0
            %1128 = vmatprep.subr.mxu0 0.0
            %1129 = vmatpush1.xpose.msra.mxu0 0.0
            %1130 = vmatprep.subr.mxu0 0.0
            %1131 = vmatpush1.xpose.msra.mxu0 0.0
            %1132 = vmatprep.subr.mxu0 0.0
            %1133 = vmatpush1.xpose.msra.mxu0 0.0
            %1134 = vmatprep.subr.mxu0 0.0
            %1135 = vmatpush1.xpose.msra.mxu0 0.0
            %1136 = vmatprep.subr.mxu0 0.0
            %1137 = vmatpush1.xpose.msra.mxu0 0.0
            %1138 = vmatprep.subr.mxu0 0.0
            %1139 = vmatpush1.xpose.msra.mxu0 0.0
            %1140 = vmatprep.subr.mxu0 0.0
            %1141 = vmatpush1.xpose.msra.mxu0 0.0
            %1142 = vmatprep.subr.mxu0 0.0
            %1143 = vmatpush1.xpose.msra.mxu0 0.0
            %1144 = vmatprep.subr.mxu0 0.0
            %1145 = vmatpush1.xpose.msra.mxu0 0.0
            %1146 = vmatprep.subr.mxu0 0.0
            %1147 = vmatpush1.xpose.msra.mxu0 0.0
            %1148 = vmatprep.subr.mxu0 0.0
            %1149 = vmatpush1.xpose.msra.mxu0 0.0
            %1150 = vmatprep.subr.mxu0 0.0
            %1151 = vmatpush1.xpose.msra.mxu0 0.0
            %1152 = vmatprep.subr.mxu0 0.0
            %1153 = vmatpush1.xpose.msra.mxu0 0.0
            %1154 = vmatprep.subr.mxu0 0.0
            %1155 = vmatpush1.xpose.msra.mxu0 0.0
            %1156 = vmatprep.subr.mxu0 0.0
            %1157 = vmatpush1.xpose.msra.mxu0 0.0
            %1158 = vmatprep.mubr.f32.mxu0 0.0
            %1159 = vmatmul.mubr.f32.gmra.mrb[0].mxu0 %v886
            %v1160 = vpop.f32.mrb[0].mxu0
            %v1161 = vadd.f32 0.0, %v1160
            %v1162 = vpop.f32.mrb[0].mxu0
            %1163 = vmatprep.mubr.f32.mxu0 0.0
            %1164 = vmatmul.mubr.f32.gmra.mrb[0].mxu0 %v891
            %v1165 = vpop.f32.mrb[0].mxu0
            %v1166 = vadd.f32 0.0, %v1165
            %v1167 = vpop.f32.mrb[0].mxu0
            %1168 = vdwg.mxu0
            %vm1169 = vcmask 130048
            %v1170 = vsel %vm1169, %v1161, -inf
            %1171 = vmax.xlane.f32.xlu0 %v1170
            %v1172 = vpop.xlane.xlu0 %1171
            %v1173 = vsel %vm1169, %v1166, -inf
            %1174 = vmax.xlane.f32.xlu0 %v1173
            %v1175 = vpop.xlane.xlu0 %1174
            %v1176 = vsub.f32 %v1161, %v1172
            %v1177 = vsub.f32 %v1166, %v1175
            %v1178 = vmul.f32 %v1176, 1.442695
            %v1179 = vpow.pop %v1178
            %v1180 = vmul.f32 %v1177, 1.442695
            %v1181 = vpow.pop %v1180
            %v1182 = vsel %vm1169, %v1179, 0.0
            %1183 = vadd.xlane.f32.xlu0 %v1182
            %v1184 = vpop.xlane.xlu0 %1183
            %v1185 = vsel %vm1169, %v1181, 0.0
            %1186 = vadd.xlane.f32.xlu0 %v1185
            %v1187 = vpop.xlane.xlu0 %1186
            %v1188 = vrcp.pop %v1184
            %v1189 = vmul.f32 %v1179, %v1188
            %v1190 = vrcp.pop %v1187
            %v1191 = vmul.f32 %v1181, %v1190
            %v1193 = vsel %vm1169, %v1189, 0
            %v1196 = vsel %vm1169, %v1191, 0
            %1198 = vmatprep.subr.mxu0 0.0
            %1199 = vmatpush1.msra.mxu0 %v1086
            %1200 = vmatprep.subr.mxu0 0.0
            %1201 = vmatpush1.msra.mxu0 %v1091
            %1202 = vmatprep.subr.mxu0 0.0
            %1203 = vmatpush1.msra.mxu0 0.0
            %1204 = vmatprep.subr.mxu0 0.0
            %1205 = vmatpush1.msra.mxu0 0.0
            %1206 = vmatprep.subr.mxu0 0.0
            %1207 = vmatpush1.msra.mxu0 0.0
            %1208 = vmatprep.subr.mxu0 0.0
            %1209 = vmatpush1.msra.mxu0 0.0
            %1210 = vmatprep.subr.mxu0 0.0
            %1211 = vmatpush1.msra.mxu0 0.0
            %1212 = vmatprep.subr.mxu0 0.0
            %1213 = vmatpush1.msra.mxu0 0.0
            %1214 = vmatprep.subr.mxu0 0.0
            %1215 = vmatpush1.msra.mxu0 0.0
            %1216 = vmatprep.subr.mxu0 0.0
            %1217 = vmatpush1.msra.mxu0 0.0
            %1218 = vmatprep.subr.mxu0 0.0
            %1219 = vmatpush1.msra.mxu0 0.0
            %1220 = vmatprep.subr.mxu0 0.0
            %1221 = vmatpush1.msra.mxu0 0.0
            %1222 = vmatprep.subr.mxu0 0.0
            %1223 = vmatpush1.msra.mxu0 0.0
            %1224 = vmatprep.subr.mxu0 0.0
            %1225 = vmatpush1.msra.mxu0 0.0
            %1226 = vmatprep.subr.mxu0 0.0
            %1227 = vmatpush1.msra.mxu0 0.0
            %1228 = vmatprep.subr.mxu0 0.0
            %1229 = vmatpush1.msra.mxu0 0.0
            %1230 = vmatprep.subr.mxu0 0.0
            %1231 = vmatpush1.msra.mxu0 0.0
            %1232 = vmatprep.subr.mxu0 0.0
            %1233 = vmatpush1.msra.mxu0 0.0
            %1234 = vmatprep.subr.mxu0 0.0
            %1235 = vmatpush1.msra.mxu0 0.0
            %1236 = vmatprep.subr.mxu0 0.0
            %1237 = vmatpush1.msra.mxu0 0.0
            %1238 = vmatprep.subr.mxu0 0.0
            %1239 = vmatpush1.msra.mxu0 0.0
            %1240 = vmatprep.subr.mxu0 0.0
            %1241 = vmatpush1.msra.mxu0 0.0
            %1242 = vmatprep.subr.mxu0 0.0
            %1243 = vmatpush1.msra.mxu0 0.0
            %1244 = vmatprep.subr.mxu0 0.0
            %1245 = vmatpush1.msra.mxu0 0.0
            %1246 = vmatprep.subr.mxu0 0.0
            %1247 = vmatpush1.msra.mxu0 0.0
            %1248 = vmatprep.subr.mxu0 0.0
            %1249 = vmatpush1.msra.mxu0 0.0
            %1250 = vmatprep.subr.mxu0 0.0
            %1251 = vmatpush1.msra.mxu0 0.0
            %1252 = vmatprep.subr.mxu0 0.0
            %1253 = vmatpush1.msra.mxu0 0.0
            %1254 = vmatprep.subr.mxu0 0.0
            %1255 = vmatpush1.msra.mxu0 0.0
            %1256 = vmatprep.subr.mxu0 0.0
            %1257 = vmatpush1.msra.mxu0 0.0
            %1258 = vmatprep.subr.mxu0 0.0
            %1259 = vmatpush1.msra.mxu0 0.0
            %1260 = vmatprep.subr.mxu0 0.0
            %1261 = vmatpush1.msra.mxu0 0.0
            %1262 = vmatprep.mubr.f32.mxu0 0.0
            %1263 = vmatmul.mubr.f32.gmra.mrb[0].mxu0 %v1193
            %v1264 = vpop.f32.mrb[0].mxu0
            %v1265 = vadd.f32 0.0, %v1264
            %v1266 = vpop.f32.mrb[0].mxu0
            %1267 = vmatprep.mubr.f32.mxu0 0.0
            %1268 = vmatmul.mubr.f32.gmra.mrb[0].mxu0 %v1196
            %v1269 = vpop.f32.mrb[0].mxu0
            %v1270 = vadd.f32 0.0, %v1269
            %v1271 = vpop.f32.mrb[0].mxu0
            %1272 = vdwg.mxu0
            %s1273 = scalar_lea.vmem [#allocation14], %s793
            %v1274 = vld [vmem:[%s1273] sm:$0xff]
            %v1275 = vld [vmem:[%s1273 + $0x8] sm:$0xff]
            %v1276 = vld [vmem:[%s1273 + $0x10] sm:$0xff]
            %v1277 = vld [vmem:[%s1273 + $0x18] sm:$0xff]
            %v1278 = vld [vmem:[%s1273 + $0x20] sm:$0xff]
            %v1279 = vld [vmem:[%s1273 + $0x28] sm:$0xff]
            %v1280 = vld [vmem:[%s1273 + $0x30] sm:$0xff]
            %v1281 = vld [vmem:[%s1273 + $0x38] sm:$0xff]
            %v1282 = vld [vmem:[%s1273 + $0x40] sm:$0xff]
            %v1283 = vld [vmem:[%s1273 + $0x48] sm:$0xff]
            %v1284 = vld [vmem:[%s1273 + $0x50] sm:$0xff]
            %v1285 = vld [vmem:[%s1273 + $0x58] sm:$0xff]
            %v1286 = vld [vmem:[%s1273 + $0x60] sm:$0xff]
            %v1287 = vld [vmem:[%s1273 + $0x68] sm:$0xff]
            %v1288 = vld [vmem:[%s1273 + $0x70] sm:$0xff]
            %v1289 = vld [vmem:[%s1273 + $0x78] sm:$0xff]
            %1290 = vmatprep.subr.mxu0 0.0
            %1291 = vmatpush1.msra.mxu0 %v1274
            %1292 = vmatprep.subr.mxu0 0.0
            %1293 = vmatpush1.msra.mxu0 %v1275
            %1294 = vmatprep.subr.mxu0 0.0
            %1295 = vmatpush1.msra.mxu0 %v1276
            %1296 = vmatprep.subr.mxu0 0.0
            %1297 = vmatpush1.msra.mxu0 %v1277
            %1298 = vmatprep.subr.mxu0 0.0
            %1299 = vmatpush1.msra.mxu0 %v1278
            %1300 = vmatprep.subr.mxu0 0.0
            %1301 = vmatpush1.msra.mxu0 %v1279
            %1302 = vmatprep.subr.mxu0 0.0
            %1303 = vmatpush1.msra.mxu0 %v1280
            %1304 = vmatprep.subr.mxu0 0.0
            %1305 = vmatpush1.msra.mxu0 %v1281
            %1306 = vmatprep.subr.mxu0 0.0
            %1307 = vmatpush1.msra.mxu0 %v1282
            %1308 = vmatprep.subr.mxu0 0.0
            %1309 = vmatpush1.msra.mxu0 %v1283
            %1310 = vmatprep.subr.mxu0 0.0
            %1311 = vmatpush1.msra.mxu0 %v1284
            %1312 = vmatprep.subr.mxu0 0.0
            %1313 = vmatpush1.msra.mxu0 %v1285
            %1314 = vmatprep.subr.mxu0 0.0
            %1315 = vmatpush1.msra.mxu0 %v1286
            %1316 = vmatprep.subr.mxu0 0.0
            %1317 = vmatpush1.msra.mxu0 %v1287
            %1318 = vmatprep.subr.mxu0 0.0
            %1319 = vmatpush1.msra.mxu0 %v1288
            %1320 = vmatprep.subr.mxu0 0.0
            %1321 = vmatpush1.msra.mxu0 %v1289
            %1322 = vmatprep.subr.mxu0 0.0
            %1323 = vmatpush1.msra.mxu0 0.0
            %1324 = vmatprep.subr.mxu0 0.0
            %1325 = vmatpush1.msra.mxu0 0.0
            %1326 = vmatprep.subr.mxu0 0.0
            %1327 = vmatpush1.msra.mxu0 0.0
            %1328 = vmatprep.subr.mxu0 0.0
            %1329 = vmatpush1.msra.mxu0 0.0
            %1330 = vmatprep.subr.mxu0 0.0
            %1331 = vmatpush1.msra.mxu0 0.0
            %1332 = vmatprep.subr.mxu0 0.0
            %1333 = vmatpush1.msra.mxu0 0.0
            %1334 = vmatprep.subr.mxu0 0.0
            %1335 = vmatpush1.msra.mxu0 0.0
            %1336 = vmatprep.subr.mxu0 0.0
            %1337 = vmatpush1.msra.mxu0 0.0
            %1338 = vmatprep.subr.mxu0 0.0
            %1339 = vmatpush1.msra.mxu0 0.0
            %1340 = vmatprep.subr.mxu0 0.0
            %1341 = vmatpush1.msra.mxu0 0.0
            %1342 = vmatprep.subr.mxu0 0.0
            %1343 = vmatpush1.msra.mxu0 0.0
            %1344 = vmatprep.subr.mxu0 0.0
            %1345 = vmatpush1.msra.mxu0 0.0
            %1346 = vmatprep.subr.mxu0 0.0
            %1347 = vmatpush1.msra.mxu0 0.0
            %1348 = vmatprep.subr.mxu0 0.0
            %1349 = vmatpush1.msra.mxu0 0.0
            %1350 = vmatprep.subr.mxu0 0.0
            %1351 = vmatpush1.msra.mxu0 0.0
            %1352 = vmatprep.subr.mxu0 0.0
            %1353 = vmatpush1.msra.mxu0 0.0
            %1354 = vmatprep.mubr.f32.mxu0 0.0
            %1355 = vmatmul.mubr.f32.gmra.mrb[0].mxu0 %v1265
            %v1356 = vpop.f32.mrb[0].mxu0
            %v1357 = vadd.f32 0.0, %v1356
            %v1358 = vpop.f32.mrb[0].mxu0
            %1359 = vmatprep.mubr.f32.mxu0 0.0
            %1360 = vmatmul.mubr.f32.gmra.mrb[0].mxu0 %v1270
            %v1361 = vpop.f32.mrb[0].mxu0
            %v1362 = vadd.f32 0.0, %v1361
            %v1363 = vpop.f32.mrb[0].mxu0
            %1364 = vdwg.mxu0
            %v1365 = vadd.f32 %v791, %v1357
            %v1366 = vadd.f32 %v792, %v1362
          $region129: #{tpu_custom_call.1} parent=123 // loop_footer
            %s790 = sadd.s32 1, %s786
          $region130: #{tpu_custom_call.1} parent=123 // loop_footer_branch
            %785 = sbr.rel target = $region126
          $region131: #{tpu_custom_call.1} parent=123 // loop_exit
            _
          %v1367 = vadd.f32 %v742, %v791
          %v1368 = vadd.f32 %v743, %v792
          %v1369 = vld [vmem:[%s10] sm:$0x1]
          %v1371 = vlaneseq
          %v1372 = vshrl.u32 %v1371, 7
          %v1373 = vsub.s32 0, %v1372
          %v1374 = vrot.slane %v1369, %v1373
          %v1376 = vadd.f32 %v1367, %v1374
          %v1377 = vadd.f32 %v1368, %v1374
          %1378 = vst [vmem:[#allocation2] sm:$0xff] %v1376
          %1379 = vst [vmem:[#allocation2 + $0x8] sm:$0xff] %v1377
          %v1380 = vld [vmem:[%s11] sm:$0x1]
          %v1381 = vld [vmem:[%s12] sm:$0x1]
          %1382 = vadd.xlane.f32.xlu0 %v1376
          %v1383 = vpop.xlane.xlu0 %1382
          %1384 = vadd.xlane.f32.xlu0 %v1377
          %v1385 = vpop.xlane.xlu0 %1384
          %v1386 = vmul.f32 %v1383, %v750
          %v1387 = vmul.f32 %v1385, %v750
          %v1388 = vsub.f32 %v1376, %v1386
          %v1389 = vsub.f32 %v1377, %v1387
          %v1390 = vmul.f32 %v1388, %v1388
          %v1391 = vmul.f32 %v1389, %v1389
          %1392 = vadd.xlane.f32.xlu0 %v1390
          %v1393 = vpop.xlane.xlu0 %1392
          %1394 = vadd.xlane.f32.xlu0 %v1391
          %v1395 = vpop.xlane.xlu0 %1394
          %v1396 = vmul.f32 %v1393, %v750
          %v1397 = vmul.f32 %v1395, %v750
          %v1398 = vadd.f32 %v1396, 1e-06
          %v1399 = vadd.f32 %v1397, 1e-06
          %v1400 = vrsqrt.pop %v1398
          %v1401 = vrsqrt.pop %v1399
          %v1402 = vmul.f32 %v1388, %v1400
          %v1403 = vmul.f32 %v1389, %v1401
          %v1405 = vlaneseq
          %v1406 = vshrl.u32 %v1405, 7
          %v1407 = vsub.s32 0, %v1406
          %v1408 = vrot.slane %v1380, %v1407
          %v1410 = vmul.f32 %v1402, %v1408
          %v1411 = vmul.f32 %v1403, %v1408
          %v1413 = vlaneseq
          %v1414 = vshrl.u32 %v1413, 7
          %v1415 = vsub.s32 0, %v1414
          %v1416 = vrot.slane %v1381, %v1415
          %v1418 = vadd.f32 %v1410, %v1416
          %v1419 = vadd.f32 %v1411, %v1416
          %1420 = vst [vmem:[#allocation3] sm:$0xff] %v1418
          %1421 = vst [vmem:[#allocation3 + $0x8] sm:$0xff] %v1419
        $region124: #{tpu_custom_call.1} parent=87 // pred_fallthru
          _
        %v1422 = vld [vmem:[#allocation3] sm:$0xff]
        %v1423 = vld [vmem:[#allocation3 + $0x8] sm:$0xff]
        %v1424 = vld [vmem:[%s661] sm:$0xff]
        %v1425 = vld [vmem:[%s661 + $0x8] sm:$0xff]
        %v1426 = vld [vmem:[%s661 + $0x10] sm:$0xff]
        %v1427 = vld [vmem:[%s661 + $0x18] sm:$0xff]
        %v1428 = vld [vmem:[%s661 + $0x20] sm:$0xff]
        %v1429 = vld [vmem:[%s661 + $0x28] sm:$0xff]
        %v1430 = vld [vmem:[%s661 + $0x30] sm:$0xff]
        %v1431 = vld [vmem:[%s661 + $0x38] sm:$0xff]
        %v1432 = vld [vmem:[%s661 + $0x40] sm:$0xff]
        %v1433 = vld [vmem:[%s661 + $0x48] sm:$0xff]
        %v1434 = vld [vmem:[%s661 + $0x50] sm:$0xff]
        %v1435 = vld [vmem:[%s661 + $0x58] sm:$0xff]
        %v1436 = vld [vmem:[%s661 + $0x60] sm:$0xff]
        %v1437 = vld [vmem:[%s661 + $0x68] sm:$0xff]
        %v1438 = vld [vmem:[%s661 + $0x70] sm:$0xff]
        %v1439 = vld [vmem:[%s661 + $0x78] sm:$0xff]
        %v1440 = vld [vmem:[%s736] sm:$0x1]
        %v1442 = vlaneseq
        %v1443 = vshrl.u32 %v1442, 7
        %v1444 = vsub.s32 0, %v1443
        %v1445 = vrot.slane %v1440, %v1444
        %1447 = vmatprep.subr.mxu0 0.0
        %1448 = vmatpush1.msra.mxu0 %v1424
        %1449 = vmatprep.subr.mxu0 0.0
        %1450 = vmatpush1.msra.mxu0 %v1425
        %1451 = vmatprep.subr.mxu0 0.0
        %1452 = vmatpush1.msra.mxu0 %v1426
        %1453 = vmatprep.subr.mxu0 0.0
        %1454 = vmatpush1.msra.mxu0 %v1427
        %1455 = vmatprep.subr.mxu0 0.0
        %1456 = vmatpush1.msra.mxu0 %v1428
        %1457 = vmatprep.subr.mxu0 0.0
        %1458 = vmatpush1.msra.mxu0 %v1429
        %1459 = vmatprep.subr.mxu0 0.0
        %1460 = vmatpush1.msra.mxu0 %v1430
        %1461 = vmatprep.subr.mxu0 0.0
        %1462 = vmatpush1.msra.mxu0 %v1431
        %1463 = vmatprep.subr.mxu0 0.0
        %1464 = vmatpush1.msra.mxu0 %v1432
        %1465 = vmatprep.subr.mxu0 0.0
        %1466 = vmatpush1.msra.mxu0 %v1433
        %1467 = vmatprep.subr.mxu0 0.0
        %1468 = vmatpush1.msra.mxu0 %v1434
        %1469 = vmatprep.subr.mxu0 0.0
        %1470 = vmatpush1.msra.mxu0 %v1435
        %1471 = vmatprep.subr.mxu0 0.0
        %1472 = vmatpush1.msra.mxu0 %v1436
        %1473 = vmatprep.subr.mxu0 0.0
        %1474 = vmatpush1.msra.mxu0 %v1437
        %1475 = vmatprep.subr.mxu0 0.0
        %1476 = vmatpush1.msra.mxu0 %v1438
        %1477 = vmatprep.subr.mxu0 0.0
        %1478 = vmatpush1.msra.mxu0 %v1439
        %1479 = vmatprep.subr.mxu0 0.0
        %1480 = vmatpush1.msra.mxu0 0.0
        %1481 = vmatprep.subr.mxu0 0.0
        %1482 = vmatpush1.msra.mxu0 0.0
        %1483 = vmatprep.subr.mxu0 0.0
        %1484 = vmatpush1.msra.mxu0 0.0
        %1485 = vmatprep.subr.mxu0 0.0
        %1486 = vmatpush1.msra.mxu0 0.0
        %1487 = vmatprep.subr.mxu0 0.0
        %1488 = vmatpush1.msra.mxu0 0.0
        %1489 = vmatprep.subr.mxu0 0.0
        %1490 = vmatpush1.msra.mxu0 0.0
        %1491 = vmatprep.subr.mxu0 0.0
        %1492 = vmatpush1.msra.mxu0 0.0
        %1493 = vmatprep.subr.mxu0 0.0
        %1494 = vmatpush1.msra.mxu0 0.0
        %1495 = vmatprep.subr.mxu0 0.0
        %1496 = vmatpush1.msra.mxu0 0.0
        %1497 = vmatprep.subr.mxu0 0.0
        %1498 = vmatpush1.msra.mxu0 0.0
        %1499 = vmatprep.subr.mxu0 0.0
        %1500 = vmatpush1.msra.mxu0 0.0
        %1501 = vmatprep.subr.mxu0 0.0
        %1502 = vmatpush1.msra.mxu0 0.0
        %1503 = vmatprep.subr.mxu0 0.0
        %1504 = vmatpush1.msra.mxu0 0.0
        %1505 = vmatprep.subr.mxu0 0.0
        %1506 = vmatpush1.msra.mxu0 0.0
        %1507 = vmatprep.subr.mxu0 0.0
        %1508 = vmatpush1.msra.mxu0 0.0
        %1509 = vmatprep.subr.mxu0 0.0
        %1510 = vmatpush1.msra.mxu0 0.0
        %1511 = vmatprep.mubr.f32.mxu0 0.0
        %1512 = vmatmul.mubr.f32.gmra.mrb[0].mxu0 %v1422
        %v1513 = vpop.f32.mrb[0].mxu0
        %v1514 = vadd.f32 %v1445, %v1513
        %v1515 = vpop.f32.mrb[0].mxu0
        %1516 = vmatprep.mubr.f32.mxu0 0.0
        %1517 = vmatmul.mubr.f32.gmra.mrb[0].mxu0 %v1423
        %v1518 = vpop.f32.mrb[0].mxu0
        %v1519 = vadd.f32 %v1445, %v1518
        %v1520 = vpop.f32.mrb[0].mxu0
        %1521 = vdwg.mxu0
        %v1522 = vmul.f32 %v1514, 0.5
        %v1523 = vmul.f32 %v1519, 0.5
        %v1524 = vmul.f32 %v1514, 0.044715
        %v1525 = vmul.f32 %v1519, 0.044715
        %v1526 = vmul.f32 %v1524, %v1514
        %v1527 = vmul.f32 %v1525, %v1519
        %v1528 = vmul.f32 %v1526, %v1514
        %v1529 = vmul.f32 %v1527, %v1519
        %v1530 = vadd.f32 %v1514, %v1528
        %v1531 = vadd.f32 %v1519, %v1529
        %v1532 = vmul.f32 %v1530, 0.7978846
        %v1533 = vmul.f32 %v1531, 0.7978846
        %v1534 = vtanh.pop %v1532
        %v1535 = vtanh.pop %v1533
        %v1536 = vadd.f32 %v1534, 1.0
        %v1537 = vadd.f32 %v1535, 1.0
        %v1538 = vmul.f32 %v1522, %v1536
        %v1539 = vmul.f32 %v1523, %v1537
        %v1540 = vld [vmem:[%s670] sm:$0xff]
        %v1541 = vld [vmem:[%s670 + $0x8] sm:$0xff]
        %v1542 = vld [vmem:[%s670 + $0x10] sm:$0xff]
        %v1543 = vld [vmem:[%s670 + $0x18] sm:$0xff]
        %v1544 = vld [vmem:[%s670 + $0x20] sm:$0xff]
        %v1545 = vld [vmem:[%s670 + $0x28] sm:$0xff]
        %v1546 = vld [vmem:[%s670 + $0x30] sm:$0xff]
        %v1547 = vld [vmem:[%s670 + $0x38] sm:$0xff]
        %v1548 = vld [vmem:[%s670 + $0x40] sm:$0xff]
        %v1549 = vld [vmem:[%s670 + $0x48] sm:$0xff]
        %v1550 = vld [vmem:[%s670 + $0x50] sm:$0xff]
        %v1551 = vld [vmem:[%s670 + $0x58] sm:$0xff]
        %v1552 = vld [vmem:[%s670 + $0x60] sm:$0xff]
        %v1553 = vld [vmem:[%s670 + $0x68] sm:$0xff]
        %v1554 = vld [vmem:[%s670 + $0x70] sm:$0xff]
        %v1555 = vld [vmem:[%s670 + $0x78] sm:$0xff]
        %1556 = vmatprep.subr.mxu0 0.0
        %1557 = vmatpush1.msra.mxu0 %v1540
        %1558 = vmatprep.subr.mxu0 0.0
        %1559 = vmatpush1.msra.mxu0 %v1541
        %1560 = vmatprep.subr.mxu0 0.0
        %1561 = vmatpush1.msra.mxu0 %v1542
        %1562 = vmatprep.subr.mxu0 0.0
        %1563 = vmatpush1.msra.mxu0 %v1543
        %1564 = vmatprep.subr.mxu0 0.0
        %1565 = vmatpush1.msra.mxu0 %v1544
        %1566 = vmatprep.subr.mxu0 0.0
        %1567 = vmatpush1.msra.mxu0 %v1545
        %1568 = vmatprep.subr.mxu0 0.0
        %1569 = vmatpush1.msra.mxu0 %v1546
        %1570 = vmatprep.subr.mxu0 0.0
        %1571 = vmatpush1.msra.mxu0 %v1547
        %1572 = vmatprep.subr.mxu0 0.0
        %1573 = vmatpush1.msra.mxu0 %v1548
        %1574 = vmatprep.subr.mxu0 0.0
        %1575 = vmatpush1.msra.mxu0 %v1549
        %1576 = vmatprep.subr.mxu0 0.0
        %1577 = vmatpush1.msra.mxu0 %v1550
        %1578 = vmatprep.subr.mxu0 0.0
        %1579 = vmatpush1.msra.mxu0 %v1551
        %1580 = vmatprep.subr.mxu0 0.0
        %1581 = vmatpush1.msra.mxu0 %v1552
        %1582 = vmatprep.subr.mxu0 0.0
        %1583 = vmatpush1.msra.mxu0 %v1553
        %1584 = vmatprep.subr.mxu0 0.0
        %1585 = vmatpush1.msra.mxu0 %v1554
        %1586 = vmatprep.subr.mxu0 0.0
        %1587 = vmatpush1.msra.mxu0 %v1555
        %1588 = vmatprep.subr.mxu0 0.0
        %1589 = vmatpush1.msra.mxu0 0.0
        %1590 = vmatprep.subr.mxu0 0.0
        %1591 = vmatpush1.msra.mxu0 0.0
        %1592 = vmatprep.subr.mxu0 0.0
        %1593 = vmatpush1.msra.mxu0 0.0
        %1594 = vmatprep.subr.mxu0 0.0
        %1595 = vmatpush1.msra.mxu0 0.0
        %1596 = vmatprep.subr.mxu0 0.0
        %1597 = vmatpush1.msra.mxu0 0.0
        %1598 = vmatprep.subr.mxu0 0.0
        %1599 = vmatpush1.msra.mxu0 0.0
        %1600 = vmatprep.subr.mxu0 0.0
        %1601 = vmatpush1.msra.mxu0 0.0
        %1602 = vmatprep.subr.mxu0 0.0
        %1603 = vmatpush1.msra.mxu0 0.0
        %1604 = vmatprep.subr.mxu0 0.0
        %1605 = vmatpush1.msra.mxu0 0.0
        %1606 = vmatprep.subr.mxu0 0.0
        %1607 = vmatpush1.msra.mxu0 0.0
        %1608 = vmatprep.subr.mxu0 0.0
        %1609 = vmatpush1.msra.mxu0 0.0
        %1610 = vmatprep.subr.mxu0 0.0
        %1611 = vmatpush1.msra.mxu0 0.0
        %1612 = vmatprep.subr.mxu0 0.0
        %1613 = vmatpush1.msra.mxu0 0.0
        %1614 = vmatprep.subr.mxu0 0.0
        %1615 = vmatpush1.msra.mxu0 0.0
        %1616 = vmatprep.subr.mxu0 0.0
        %1617 = vmatpush1.msra.mxu0 0.0
        %1618 = vmatprep.subr.mxu0 0.0
        %1619 = vmatpush1.msra.mxu0 0.0
        %1620 = vmatprep.mubr.f32.mxu0 0.0
        %1621 = vmatmul.mubr.f32.gmra.mrb[0].mxu0 %v1538
        %v1622 = vpop.f32.mrb[0].mxu0
        %v1623 = vadd.f32 0.0, %v1622
        %v1624 = vpop.f32.mrb[0].mxu0
        %1625 = vmatprep.mubr.f32.mxu0 0.0
        %1626 = vmatmul.mubr.f32.gmra.mrb[0].mxu0 %v1539
        %v1627 = vpop.f32.mrb[0].mxu0
        %v1628 = vadd.f32 0.0, %v1627
        %v1629 = vpop.f32.mrb[0].mxu0
        %1630 = vdwg.mxu0
        // Predicated region
        $region132: #{tpu_custom_call.1} parent=87 // pred_check
          %p1631 = pneg %p738
        $region133: #{tpu_custom_call.1} parent=87 // pred_check_branch
          %1633 = sbr.rel (%p1631) target = $region135
        $region134: #{tpu_custom_call.1} parent=87 // pred_region
          %1634 = vst [vmem:[#allocation4] sm:$0xff] %v1623
          %1635 = vst [vmem:[#allocation4 + $0x8] sm:$0xff] %v1628
        $region135: #{tpu_custom_call.1} parent=87 // pred_fallthru
          _
        %p1636 = scmp.gt.s32.totalorder %s42, 0
        // Predicated region
        $region136: #{tpu_custom_call.1} parent=87 // pred_check
          %p1637 = pneg %p1636
        $region137: #{tpu_custom_call.1} parent=87 // pred_check_branch
          %1639 = sbr.rel (%p1637) target = $region139
        $region138: #{tpu_custom_call.1} parent=87 // pred_region
          %v1640 = vld [vmem:[#allocation4] sm:$0xff]
          %v1641 = vld [vmem:[#allocation4 + $0x8] sm:$0xff]
          %v1642 = vadd.f32 %v1640, %v1623
          %v1643 = vadd.f32 %v1641, %v1628
          %1644 = vst [vmem:[#allocation4] sm:$0xff] %v1642
          %1645 = vst [vmem:[#allocation4 + $0x8] sm:$0xff] %v1643
        $region139: #{tpu_custom_call.1} parent=87 // pred_fallthru
          _
        %p1646 = scmp.eq.s32.totalorder %s42, 1
        // Predicated region
        $region140: #{tpu_custom_call.1} parent=87 // pred_check
          %p1647 = pneg %p1646
        $region141: #{tpu_custom_call.1} parent=87 // pred_check_branch
          %1649 = sbr.rel (%p1647) target = $region143
        $region142: #{tpu_custom_call.1} parent=87 // pred_region
          %v1650 = vld [vmem:[#allocation2] sm:$0xff]
          %v1651 = vld [vmem:[#allocation2 + $0x8] sm:$0xff]
          %v1652 = vld [vmem:[#allocation4] sm:$0xff]
          %v1653 = vld [vmem:[#allocation4 + $0x8] sm:$0xff]
          %v1654 = vadd.f32 %v1650, %v1652
          %v1655 = vadd.f32 %v1651, %v1653
          %v1656 = vld [vmem:[%s16] sm:$0x1]
          %v1658 = vlaneseq
          %v1659 = vshrl.u32 %v1658, 7
          %v1660 = vsub.s32 0, %v1659
          %v1661 = vrot.slane %v1656, %v1660
          %v1663 = vadd.f32 %v1654, %v1661
          %v1664 = vadd.f32 %v1655, %v1661
          %1665 = vst [vmem:[%s733] sm:$0xff] %v1663
          %1666 = vst [vmem:[%s733 + $0x8] sm:$0xff] %v1664
        $region143: #{tpu_custom_call.1} parent=87 // pred_fallthru
          _
        %s1667 = sand.u32 %s434, 1
        %s1668 = scalar_lea.sflag [#allocation7], %s1667
        %s1669 = sand.u32 %s434, 1
        %s1670 = smul.addr %s1669, 16
        %s1671 = scalar_lea.vmem [#allocation18], %s1670
        // Predicated region
        $region144: #{tpu_custom_call.1} parent=87 // pred_check
          %p1672 = pneg %p444
        $region145: #{tpu_custom_call.1} parent=87 // pred_check_branch
          %1674 = sbr.rel (%p1672) target = $region147
        $region146: #{tpu_custom_call.1} parent=87 // pred_region
          %s1676 = ssub.s32 256, 256
          %1677 = vsyncadd %s1668, %s1676
          %s1678 = smul.addr %s41, 2
          %s1679 = smul.addr %s1678, 128
          %s1680 = scalar_lea.hbm %s17, %s1679
          %s1681 = sshll.u32 %s1671, 4
          %s1682 = int_to_ptr.vmem [resolvable:$true] %s1681
          %1687 = dma.vmem_to_hbm [thread:$0]  %s1682, 256, %s1680, %s1668, 128, 128, 8
        $region147: #{tpu_custom_call.1} parent=87 // pred_fallthru
          _
      $region88: #{tpu_custom_call.1} parent=5 // pred_fallthru
        _
      %p1688 = scmp.le.s32.totalorder 2, %s32
      // Predicated region
      $region148: #{tpu_custom_call.1} parent=5 // pred_check
        %p1689 = pneg %p1688
      $region149: #{tpu_custom_call.1} parent=5 // pred_check_branch
        %1691 = sbr.rel (%p1689) target = $region151
      $region150: #{tpu_custom_call.1} parent=5 // pred_region
        %s1692 = ssub.s32 %s32, 2
        // Predicated region
        $region152: #{tpu_custom_call.1} parent=150 // pred_check
          %p1693 = pneg %p450
        $region153: #{tpu_custom_call.1} parent=150 // pred_check_branch
          %1695 = sbr.rel (%p1693) target = $region155
        $region154: #{tpu_custom_call.1} parent=150 // pred_region
          %s1696 = sand.u32 %s435, 1
          %s1697 = scalar_lea.sflag [#allocation7], %s1696
          %s1698 = sand.u32 %s435, 1
          %s1699 = smul.addr %s1698, 16
          %s1700 = scalar_lea.vmem [#allocation18], %s1699
          %1701 = dma.done %s1697, 256
        $region155: #{tpu_custom_call.1} parent=150 // pred_fallthru
          _
      $region151: #{tpu_custom_call.1} parent=5 // pred_fallthru
        _
    $region6: #{tpu_custom_call.1} parent=1 // loop_footer
      %s36 = sadd.s32 1, %s32
    $region7: #{tpu_custom_call.1} parent=1 // loop_footer_branch
      %31 = sbr.rel target = $region3
    $region8: #{tpu_custom_call.1} parent=1 // loop_exit
      _
    %1702 = vsyncpa [#allocation6], 1
    %s1703 = scalar_lea.sflag [#allocation6], 1
    %1704 = vsyncpa %s1703, 1
    %1705 = vsyncpa [#allocation9], 1
    %1706 = vsyncpa [#allocation12], 1
    %1707 = vsyncpa [#allocation15], 1
    %1708 = vsyncpa [#allocation7], 1
    %s1709 = scalar_lea.sflag [#allocation7], 1
    %1710 = vsyncpa %s1709, 1

</llo_original>
